<compile_context>
chip_gen: v5e
topology: v5e:2x2
jax: 0.10.0
libtpu: 0.0.40
codegen_flags: <defaults>
</compile_context>

<pallas_src>
import functools

import numpy as np

import jax
import jax.numpy as jnp
from jax.experimental import pallas as pl
from jax.experimental.pallas import tpu as pltpu


# ----------------------------------------------------------------------------
# Trace-time constant builders (numpy -> baked into the compiled executable)
# ----------------------------------------------------------------------------
def _upsample_pad_matrix(h, w, out_cols):
    """0/1 matrix M (h*w, out_cols): M[s, p] = 1 where s = i*w + j is a source
    pixel of an (h, w) map and p is a flat index into the zero-padded
    (2h+2, 2w+2) grid of its 2x-nearest-upsampled image.  Columns beyond the
    padded grid (slack) stay all-zero."""
    wp = 2 * w + 2
    m = np.zeros((h * w, out_cols), np.float32)
    for i in range(h):
        for j in range(w):
            s = i * w + j
            for di in (0, 1):
                for dj in (0, 1):
                    m[s, (1 + 2 * i + di) * wp + (1 + 2 * j + dj)] = 1.0
    return m


def _stack_taps(w):
    """(Cout, Cin, 3, 3) -> (9*Cout, Cin): tap t = kh*3+kw occupies rows
    [t*Cout, (t+1)*Cout) and holds w[:, :, kh, kw]."""
    cout, cin = w.shape[:2]
    return np.transpose(w, (2, 3, 0, 1)).reshape(9 * cout, cin)


def _stack_upsample_conv(w):
    """Fold a 2x-nearest upsample into the following 3x3 conv (sub-pixel form).

    Returns ws (9*4*Cout, Cin).  For slice t = r*3 + c (r, c in 0..2) and
    output phase p = 2*pi + pj (pi/pj = output row/col parity), rows
    [t*4*Cout + p*Cout, +Cout) hold the weights applied to the zero-padded
    pre-upsample map at spatial offset (r, c):
        out[co, 2i+pi, 2j+pj] = sum_{ci,r,c} ws[t, p*Cout+co, ci] * Apad[ci, i+r, j+c]
    """
    cout, cin = w.shape[:2]
    ws = np.zeros((9, 4 * cout, cin), np.float32)
    for pi in range(2):
        for pj in range(2):
            p = 2 * pi + pj
            for kh in range(3):
                for kw in range(3):
                    r = 1 + (pi + kh - 1) // 2          # python floor division
                    c = 1 + (pj + kw - 1) // 2
                    ws[r * 3 + c, p * cout:(p + 1) * cout, :] += w[:, :, kh, kw]
    return ws.reshape(9 * 4 * cout, cin)


def _stack_phase_conv(w, cout_pad):
    """3x3 conv expressed on the 4-phase (space-to-depth by 2) layout.

    Input rows: p_in*Cin + ci with p_in = 2*pi + pj; output rows (per slice):
    q*cout_pad + co with q = 2*qi + qj.  Slice t = r*3 + c applies to the
    zero-padded phase maps at spatial offset (r, c):
        out[co, 2i+qi, 2j+qj] =
            sum ws[t, q*cout_pad+co, p_in*Cin+ci] * Ppad[p_in*Cin+ci, i+r, j+c]
    """
    cout, cin = w.shape[:2]
    ws = np.zeros((9, 4 * cout_pad, 4 * cin), np.float32)
    for qi in range(2):
        for qj in range(2):
            q = 2 * qi + qj
            for kh in range(3):
                for kw in range(3):
                    tr, tc = qi + kh - 1, qj + kw - 1
                    pi, pj = tr % 2, tc % 2
                    r, c = 1 + tr // 2, 1 + tc // 2
                    p_in = 2 * pi + pj
                    ws[r * 3 + c,
                       q * cout_pad:q * cout_pad + cout,
                       p_in * cin:(p_in + 1) * cin] += w[:, :, kh, kw]
    return ws.reshape(9 * 4 * cout_pad, 4 * cin)


# ----------------------------------------------------------------------------
# Fused Pallas kernel:
#   BN -> up2 -> conv1+ReLU -> (up2 folded into) conv2+ReLU -> conv3+Tanh
# Activations are channel-major: channels / phase-channels on sublanes,
# flattened padded spatial map on the 128-lane axis.
# ----------------------------------------------------------------------------
def _fused_cnn2_kernel(x_ref, scale_ref, shift_ref, u1_ref,
                       w1_ref, b1_ref, w2_ref, b2_ref, w3_ref, b3_ref,
                       mask_ref, o_ref, xp1_s, apad_s, o2pad_s,
                       *, wp, m1, lo, hi):
    f32, bf16 = jnp.float32, jnp.bfloat16

    # BatchNorm2d (eval mode): per-channel scale/shift, channels on sublanes.
    xbn = (x_ref[0] * scale_ref[...] + shift_ref[...]).astype(bf16)   # (256, h*w)

    # Upsample x2 (nearest) + zero-pad(1), fused as one bf16 matmul with a
    # constant 0/1 matrix -> flattened padded (2h+2, 2w+2) map.
    xp1_s[...] = jnp.dot(xbn, u1_ref[...],
                         preferred_element_type=f32).astype(bf16)

    def conv3x3(w_ref, src_ref, rows):
        # 9 tap matmuls over contiguous lane-slices of the flattened padded
        # map; accumulator seeded with the first tap (no zero-init + add).
        acc = None
        for t in range(9):
            kh, kw = divmod(t, 3)
            off = kh * wp + kw
            d = jnp.dot(w_ref[t * rows:(t + 1) * rows, :],
                        src_ref[:, off:off + m1],
                        preferred_element_type=f32)
            acc = d if acc is None else acc + d
        return acc

    def store_padded(dst_ref, act):
        # Build the zero-padded map for the next conv: zero only the border
        # slices, store the (already junk-masked) activation into the interior.
        dst_ref[:, 0:lo] = jnp.zeros((dst_ref.shape[0], lo), bf16)
        dst_ref[:, hi:] = jnp.zeros((dst_ref.shape[0], dst_ref.shape[1] - hi),
                                    bf16)
        dst_ref[:, lo:hi] = act.astype(bf16)

    # Conv2d(256 -> 32, 3x3, pad=1) + ReLU.  mask zeroes the 2 wrap-around
    # junk columns per spatial row so they become the pad border below.
    a1 = jnp.maximum(conv3x3(w1_ref, xp1_s, 32) + b1_ref[...], 0.0) * mask_ref[...]
    store_padded(apad_s, a1)

    # Conv2d(32 -> 8, 3x3, pad=1) with the 2x upsample folded in (sub-pixel):
    # output rows are the 4-phase layout (phase*8 + channel), still 9 matmuls.
    a2 = jnp.maximum(conv3x3(w2_ref, apad_s, 32) + b2_ref[...], 0.0) * mask_ref[...]
    store_padded(o2pad_s, a2)

    # Conv2d(8 -> 3, 3x3, pad=1) on the 4-phase layout (Cout padded to 4) + Tanh.
    o_ref[0] = jnp.tanh(conv3x3(w3_ref, o2pad_s, 16) + b3_ref[...])   # (16, m1)


# ----------------------------------------------------------------------------
# Forward pass (matches VGG.forward with features = identity)
# ----------------------------------------------------------------------------
@jax.jit
def vgg_forward(x_nchw, p):
    n, c, in_h, in_w = x_nchw.shape
    assert c == 256
    h1, w1 = 2 * in_h, 2 * in_w              # resolution after the first upsample
    h2, w2 = 2 * h1, 2 * w1                  # final resolution
    wp = w1 + 2                              # padded row width used throughout
    m1 = h1 * wp                             # matmul N (valid + 2 junk cols per row)
    sp = (h1 + 2) * wp                       # flattened padded map size
    sp_pad = -(-(sp + 2) // 8) * 8           # +2 slack for the bottom-right tap
    lo, hi = wp + 1, wp + 1 + m1             # interior range of the padded maps

    # Constant 0/1 upsample+pad matrix (exact in bf16) and valid-column mask.
    u1 = jnp.asarray(_upsample_pad_matrix(in_h, in_w, sp_pad), jnp.bfloat16)
    mask = jnp.asarray((np.arange(m1) % wp < w1)
                       .astype(np.float32).reshape(1, m1))

    # NCHW consumed natively: channels on sublanes, flattened spatial on lanes.
    x2d = x_nchw.reshape(n, c, in_h * in_w)

    kernel = functools.partial(_fused_cnn2_kernel, wp=wp, m1=m1, lo=lo, hi=hi)

    out = pl.pallas_call(
        kernel,
        out_shape=jax.ShapeDtypeStruct((n, 16, m1), jnp.float32),
        grid_spec=pltpu.PrefetchScalarGridSpec(
            num_scalar_prefetch=0,
            grid=(n,),
            in_specs=[
                pl.BlockSpec((1, c, in_h * in_w), lambda i: (i, 0, 0)),
                pl.BlockSpec((c, 1), lambda i: (0, 0)),        # BN scale
                pl.BlockSpec((c, 1), lambda i: (0, 0)),        # BN shift
                pl.BlockSpec(u1.shape, lambda i: (0, 0)),      # upsample+pad (bf16)
                pl.BlockSpec((288, 256), lambda i: (0, 0)),    # w1 taps (bf16)
                pl.BlockSpec((32, 1), lambda i: (0, 0)),       # b1
                pl.BlockSpec((288, 32), lambda i: (0, 0)),     # w2 sub-pixel taps (bf16)
                pl.BlockSpec((32, 1), lambda i: (0, 0)),       # b2 (4-phase tiled)
                pl.BlockSpec((144, 32), lambda i: (0, 0)),     # w3 phase taps (bf16)
                pl.BlockSpec((16, 1), lambda i: (0, 0)),       # b3 (padded, tiled)
                pl.BlockSpec((1, m1), lambda i: (0, 0)),       # valid-column mask
            ],
            out_specs=pl.BlockSpec((1, 16, m1), lambda i: (i, 0, 0)),
            scratch_shapes=[
                pltpu.VMEM((c, sp_pad), jnp.bfloat16),    # padded upsampled input map
                pltpu.VMEM((32, sp_pad), jnp.bfloat16),   # padded conv1 output
                pltpu.VMEM((32, sp_pad), jnp.bfloat16),   # padded conv2 4-phase output
            ],
        ),
        compiler_params=pltpu.CompilerParams(
            dimension_semantics=("parallel",)),
    )(x2d, p["scale"], p["shift"], u1,
      p["w1"], p["b1"], p["w2"], p["b2"], p["w3"], p["b3"], mask)

    # Rows = (2*qi + qj)*4 + co (4-phase layout, Cout padded 3->4); columns =
    # i*wp + j with j < w1 valid.  Reassemble phases to NCHW (tiny XLA op).
    o = out.reshape(n, 2, 2, 4, h1, wp)[:, :, :, :3, :, :w1]   # (n, qi, qj, co, i, j)
    return o.transpose(0, 3, 4, 1, 5, 2).reshape(n, 3, h2, w2)


# ----------------------------------------------------------------------------
# Parameter construction / preparation
# ----------------------------------------------------------------------------
def _xavier_uniform(key, cout, cin, kh, kw):
    fan_in = cin * kh * kw
    fan_out = cout * kh * kw
    limit = float(np.sqrt(6.0 / (fan_in + fan_out)))
    return jax.random.uniform(key, (cout, cin, kh, kw), jnp.float32, -limit, limit)


def init_params(key):
    keys = jax.random.split(key, 10)
    return {
        # BatchNorm2d(256), eval-mode statistics
        "bn_gamma": jax.random.uniform(keys[0], (256,), jnp.float32, 0.5, 1.5),
        "bn_beta": jax.random.uniform(keys[1], (256,), jnp.float32, -0.5, 0.5),
        "bn_mean": jax.random.uniform(keys[2], (256,), jnp.float32, -0.5, 0.5),
        "bn_var": jax.random.uniform(keys[3], (256,), jnp.float32, 0.5, 1.5),
        # Conv2d(256, 32, 3, padding=1)
        "w1": _xavier_uniform(keys[4], 32, 256, 3, 3),
        "b1": jax.random.uniform(keys[5], (32,), jnp.float32, -0.1, 0.1),
        # Conv2d(32, 8, 3, padding=1)
        "w2": _xavier_uniform(keys[6], 8, 32, 3, 3),
        "b2": jax.random.uniform(keys[7], (8,), jnp.float32, -0.1, 0.1),
        # Conv2d(8, 3, 3, padding=1)
        "w3": _xavier_uniform(keys[8], 3, 8, 3, 3),
        "b3": jax.random.uniform(keys[9], (3,), jnp.float32, -0.1, 0.1),
    }


def prepare_params(params, eps=1e-5):
    """Fold BN stats and restack conv weights into kernel-ready (bf16) layouts."""
    scale = params["bn_gamma"] / jnp.sqrt(params["bn_var"] + eps)
    shift = params["bn_beta"] - params["bn_mean"] * scale

    w1 = np.asarray(params["w1"], np.float32)
    w2 = np.asarray(params["w2"], np.float32)
    w3 = np.asarray(params["w3"], np.float32)

    b2s = np.tile(np.asarray(params["b2"], np.float32), 4)                 # (32,)
    b3s = np.tile(np.concatenate([np.asarray(params["b3"], np.float32),
                                  np.zeros((1,), np.float32)]), 4)         # (16,)

    return {
        "scale": scale.reshape(256, 1).astype(jnp.float32),
        "shift": shift.reshape(256, 1).astype(jnp.float32),
        "w1": jnp.asarray(_stack_taps(w1), jnp.bfloat16),                  # (288, 256)
        "b1": jnp.asarray(params["b1"]).reshape(32, 1).astype(jnp.float32),
        "w2": jnp.asarray(_stack_upsample_conv(w2), jnp.bfloat16),         # (288, 32)
        "b2": jnp.asarray(b2s).reshape(32, 1),
        "w3": jnp.asarray(_stack_phase_conv(w3, cout_pad=4), jnp.bfloat16),  # (144, 32)
        "b3": jnp.asarray(b3s).reshape(16, 1),
    }


# ----------------------------------------------------------------------------
# Pure JAX/XLA reference (mirrors the PyTorch module exactly, in f32)
# ----------------------------------------------------------------------------
def vgg_reference(x_nchw, params, eps=1e-5):
    scale = params["bn_gamma"] / jnp.sqrt(params["bn_var"] + eps)
    shift = params["bn_beta"] - params["bn_mean"] * scale
    x = x_nchw * scale[None, :, None, None] + shift[None, :, None, None]

    def up2(t):
        return jnp.repeat(jnp.repeat(t, 2, axis=2), 2, axis=3)

    def conv(t, w, b, act):
        y = jax.lax.conv_general_dilated(
            t, w, window_strides=(1, 1), padding=((1, 1), (1, 1)),
            dimension_numbers=("NCHW", "OIHW", "NCHW"))
        y = y + b[None, :, None, None]
        return jnp.maximum(y, 0.0) if act == "relu" else jnp.tanh(y)

    x = conv(up2(x), params["w1"], params["b1"], "relu")
    x = conv(up2(x), params["w2"], params["b2"], "relu")
    return conv(x, params["w3"], params["b3"], "tanh")


if __name__ == "__main__":
    key = jax.random.PRNGKey(0)
    k_x, k_p = jax.random.split(key)

    # Small input consistent with cnn2's expectation of 256 input channels.
    x = jax.random.normal(k_x, (2, 256, 8, 8), jnp.float32)      # NCHW
    params = init_params(k_p)
    prepped = prepare_params(params)

    out = vgg_forward(x, prepped)
    jax.block_until_ready(out)

    assert out.shape == (2, 3, 32, 32), out.shape
    assert out.dtype == jnp.float32

    ref = vgg_reference(x, params)
    # bf16 MXU operands (per perf review) -> relaxed tolerance vs f32 reference.
    np.testing.assert_allclose(np.asarray(out), np.asarray(ref),
                               rtol=4e-2, atol=4e-2)
    print("KERNEL_OK")
</pallas_src>

<mosaic_0001>
module attributes {stable_mosaic.version = 11 : i64} {
  func.func @_fused_cnn2_kernel(%arg0: i32, %arg1: memref<1x256x64xf32, #tpu.memory_space<vmem>>, %arg2: memref<256x1xf32, #tpu.memory_space<vmem>>, %arg3: memref<256x1xf32, #tpu.memory_space<vmem>>, %arg4: memref<64x328xbf16, #tpu.memory_space<vmem>>, %arg5: memref<288x256xbf16, #tpu.memory_space<vmem>>, %arg6: memref<32x1xf32, #tpu.memory_space<vmem>>, %arg7: memref<288x32xbf16, #tpu.memory_space<vmem>>, %arg8: memref<32x1xf32, #tpu.memory_space<vmem>>, %arg9: memref<144x32xbf16, #tpu.memory_space<vmem>>, %arg10: memref<16x1xf32, #tpu.memory_space<vmem>>, %arg11: memref<1x288xf32, #tpu.memory_space<vmem>>, %arg12: memref<1x16x288xf32, #tpu.memory_space<vmem>>, %arg13: memref<256x328xbf16, #tpu.memory_space<vmem>>, %arg14: memref<32x328xbf16, #tpu.memory_space<vmem>>, %arg15: memref<32x328xbf16, #tpu.memory_space<vmem>>) attributes {dimension_semantics = [#tpu.dimension_semantics<parallel>], iteration_bounds = array<i64: 2>, scalar_prefetch = 0 : i64, scratch_operands = 3 : i64, tpu.core_type = #tpu.core_type<tc>, window_params = [{transform_indices = @transform_0, window_bounds = array<i64: 1, 256, 64>}, {pipeline_mode = #tpu.pipeline_mode<synchronous>, transform_indices = @transform_1, window_bounds = array<i64: 256, 1>}, {pipeline_mode = #tpu.pipeline_mode<synchronous>, transform_indices = @transform_2, window_bounds = array<i64: 256, 1>}, {pipeline_mode = #tpu.pipeline_mode<synchronous>, transform_indices = @transform_3, window_bounds = array<i64: 64, 328>}, {pipeline_mode = #tpu.pipeline_mode<synchronous>, transform_indices = @transform_4, window_bounds = array<i64: 288, 256>}, {pipeline_mode = #tpu.pipeline_mode<synchronous>, transform_indices = @transform_5, window_bounds = array<i64: 32, 1>}, {pipeline_mode = #tpu.pipeline_mode<synchronous>, transform_indices = @transform_6, window_bounds = array<i64: 288, 32>}, {pipeline_mode = #tpu.pipeline_mode<synchronous>, transform_indices = @transform_7, window_bounds = array<i64: 32, 1>}, {pipeline_mode = #tpu.pipeline_mode<synchronous>, transform_indices = @transform_8, window_bounds = array<i64: 144, 32>}, {pipeline_mode = #tpu.pipeline_mode<synchronous>, transform_indices = @transform_9, window_bounds = array<i64: 16, 1>}, {pipeline_mode = #tpu.pipeline_mode<synchronous>, transform_indices = @transform_10, window_bounds = array<i64: 1, 288>}, {transform_indices = @transform_11, window_bounds = array<i64: 1, 16, 288>}]} {
    %c0 = arith.constant 0 : index
    %c0_0 = arith.constant 0 : index
    %c0_1 = arith.constant 0 : index
    %0 = vector.load %arg1[%c0, %c0_0, %c0_1] : memref<1x256x64xf32, #tpu.memory_space<vmem>>, vector<1x256x64xf32>
    %1 = vector.shape_cast %0 : vector<1x256x64xf32> to vector<256x64xf32>
    %c0_2 = arith.constant 0 : index
    %c0_3 = arith.constant 0 : index
    %2 = vector.load %arg2[%c0_2, %c0_3] : memref<256x1xf32, #tpu.memory_space<vmem>>, vector<256x1xf32>
    %3 = vector.broadcast %2 : vector<256x1xf32> to vector<256x64xf32>
    %4 = arith.mulf %1, %3 : vector<256x64xf32>
    %c0_4 = arith.constant 0 : index
    %c0_5 = arith.constant 0 : index
    %5 = vector.load %arg3[%c0_4, %c0_5] : memref<256x1xf32, #tpu.memory_space<vmem>>, vector<256x1xf32>
    %6 = vector.broadcast %5 : vector<256x1xf32> to vector<256x64xf32>
    %7 = arith.addf %4, %6 : vector<256x64xf32>
    %8 = arith.truncf %7 : vector<256x64xf32> to vector<256x64xbf16>
    %c0_6 = arith.constant 0 : index
    %c0_7 = arith.constant 0 : index
    %9 = vector.load %arg4[%c0_6, %c0_7] : memref<64x328xbf16, #tpu.memory_space<vmem>>, vector<64x328xbf16>
    %cst = arith.constant dense<0.000000e+00> : vector<256x328xf32>
    %10 = tpu.matmul %8, %9, %cst {dimension_numbers = #tpu.dot_dimension_numbers<[1], [0], [0], [1], [0, 0, 1, 1], [], []>} : vector<256x64xbf16>, vector<64x328xbf16>, vector<256x328xf32> -> vector<256x328xf32>
    %11 = arith.truncf %10 : vector<256x328xf32> to vector<256x328xbf16>
    %c0_8 = arith.constant 0 : index
    %c0_9 = arith.constant 0 : index
    %12 = vector.load %arg13[%c0_8, %c0_9] : memref<256x328xbf16, #tpu.memory_space<vmem>>, vector<256x328xbf16>
    tpu.vector_store %arg13[%c0_8, %c0_9], %11 {strides = array<i32>} : memref<256x328xbf16, #tpu.memory_space<vmem>>, vector<256x328xbf16>,
    %c0_10 = arith.constant 0 : index
    %c0_11 = arith.constant 0 : index
    %13 = vector.load %arg5[%c0_10, %c0_11] : memref<288x256xbf16, #tpu.memory_space<vmem>>, vector<32x256xbf16>
    %c0_12 = arith.constant 0 : index
    %c0_13 = arith.constant 0 : index
    %14 = vector.load %arg13[%c0_12, %c0_13] : memref<256x328xbf16, #tpu.memory_space<vmem>>, vector<256x288xbf16>
    %cst_14 = arith.constant dense<0.000000e+00> : vector<32x288xf32>
    %15 = tpu.matmul %13, %14, %cst_14 {dimension_numbers = #tpu.dot_dimension_numbers<[1], [0], [0], [1], [0, 0, 1, 1], [], []>} : vector<32x256xbf16>, vector<256x288xbf16>, vector<32x288xf32> -> vector<32x288xf32>
    %c32 = arith.constant 32 : index
    %c0_15 = arith.constant 0 : index
    %16 = vector.load %arg5[%c32, %c0_15] : memref<288x256xbf16, #tpu.memory_space<vmem>>, vector<32x256xbf16>
    %c0_16 = arith.constant 0 : index
    %c1 = arith.constant 1 : index
    %17 = vector.load %arg13[%c0_16, %c1] : memref<256x328xbf16, #tpu.memory_space<vmem>>, vector<256x288xbf16>
    %cst_17 = arith.constant dense<0.000000e+00> : vector<32x288xf32>
    %18 = tpu.matmul %16, %17, %cst_17 {dimension_numbers = #tpu.dot_dimension_numbers<[1], [0], [0], [1], [0, 0, 1, 1], [], []>} : vector<32x256xbf16>, vector<256x288xbf16>, vector<32x288xf32> -> vector<32x288xf32>
    %19 = arith.addf %15, %18 : vector<32x288xf32>
    %c64 = arith.constant 64 : index
    %c0_18 = arith.constant 0 : index
    %20 = vector.load %arg5[%c64, %c0_18] : memref<288x256xbf16, #tpu.memory_space<vmem>>, vector<32x256xbf16>
    %c0_19 = arith.constant 0 : index
    %c2 = arith.constant 2 : index
    %21 = vector.load %arg13[%c0_19, %c2] : memref<256x328xbf16, #tpu.memory_space<vmem>>, vector<256x288xbf16>
    %cst_20 = arith.constant dense<0.000000e+00> : vector<32x288xf32>
    %22 = tpu.matmul %20, %21, %cst_20 {dimension_numbers = #tpu.dot_dimension_numbers<[1], [0], [0], [1], [0, 0, 1, 1], [], []>} : vector<32x256xbf16>, vector<256x288xbf16>, vector<32x288xf32> -> vector<32x288xf32>
    %23 = arith.addf %19, %22 : vector<32x288xf32>
    %c96 = arith.constant 96 : index
    %c0_21 = arith.constant 0 : index
    %24 = vector.load %arg5[%c96, %c0_21] : memref<288x256xbf16, #tpu.memory_space<vmem>>, vector<32x256xbf16>
    %c0_22 = arith.constant 0 : index
    %c18 = arith.constant 18 : index
    %25 = vector.load %arg13[%c0_22, %c18] : memref<256x328xbf16, #tpu.memory_space<vmem>>, vector<256x288xbf16>
    %cst_23 = arith.constant dense<0.000000e+00> : vector<32x288xf32>
    %26 = tpu.matmul %24, %25, %cst_23 {dimension_numbers = #tpu.dot_dimension_numbers<[1], [0], [0], [1], [0, 0, 1, 1], [], []>} : vector<32x256xbf16>, vector<256x288xbf16>, vector<32x288xf32> -> vector<32x288xf32>
    %27 = arith.addf %23, %26 : vector<32x288xf32>
    %c128 = arith.constant 128 : index
    %c0_24 = arith.constant 0 : index
    %28 = vector.load %arg5[%c128, %c0_24] : memref<288x256xbf16, #tpu.memory_space<vmem>>, vector<32x256xbf16>
    %c0_25 = arith.constant 0 : index
    %c19 = arith.constant 19 : index
    %29 = vector.load %arg13[%c0_25, %c19] : memref<256x328xbf16, #tpu.memory_space<vmem>>, vector<256x288xbf16>
    %cst_26 = arith.constant dense<0.000000e+00> : vector<32x288xf32>
    %30 = tpu.matmul %28, %29, %cst_26 {dimension_numbers = #tpu.dot_dimension_numbers<[1], [0], [0], [1], [0, 0, 1, 1], [], []>} : vector<32x256xbf16>, vector<256x288xbf16>, vector<32x288xf32> -> vector<32x288xf32>
    %31 = arith.addf %27, %30 : vector<32x288xf32>
    %c160 = arith.constant 160 : index
    %c0_27 = arith.constant 0 : index
    %32 = vector.load %arg5[%c160, %c0_27] : memref<288x256xbf16, #tpu.memory_space<vmem>>, vector<32x256xbf16>
    %c0_28 = arith.constant 0 : index
    %c20 = arith.constant 20 : index
    %33 = vector.load %arg13[%c0_28, %c20] : memref<256x328xbf16, #tpu.memory_space<vmem>>, vector<256x288xbf16>
    %cst_29 = arith.constant dense<0.000000e+00> : vector<32x288xf32>
    %34 = tpu.matmul %32, %33, %cst_29 {dimension_numbers = #tpu.dot_dimension_numbers<[1], [0], [0], [1], [0, 0, 1, 1], [], []>} : vector<32x256xbf16>, vector<256x288xbf16>, vector<32x288xf32> -> vector<32x288xf32>
    %35 = arith.addf %31, %34 : vector<32x288xf32>
    %c192 = arith.constant 192 : index
    %c0_30 = arith.constant 0 : index
    %36 = vector.load %arg5[%c192, %c0_30] : memref<288x256xbf16, #tpu.memory_space<vmem>>, vector<32x256xbf16>
    %c0_31 = arith.constant 0 : index
    %c36 = arith.constant 36 : index
    %37 = vector.load %arg13[%c0_31, %c36] : memref<256x328xbf16, #tpu.memory_space<vmem>>, vector<256x288xbf16>
    %cst_32 = arith.constant dense<0.000000e+00> : vector<32x288xf32>
    %38 = tpu.matmul %36, %37, %cst_32 {dimension_numbers = #tpu.dot_dimension_numbers<[1], [0], [0], [1], [0, 0, 1, 1], [], []>} : vector<32x256xbf16>, vector<256x288xbf16>, vector<32x288xf32> -> vector<32x288xf32>
    %39 = arith.addf %35, %38 : vector<32x288xf32>
    %c224 = arith.constant 224 : index
    %c0_33 = arith.constant 0 : index
    %40 = vector.load %arg5[%c224, %c0_33] : memref<288x256xbf16, #tpu.memory_space<vmem>>, vector<32x256xbf16>
    %c0_34 = arith.constant 0 : index
    %c37 = arith.constant 37 : index
    %41 = vector.load %arg13[%c0_34, %c37] : memref<256x328xbf16, #tpu.memory_space<vmem>>, vector<256x288xbf16>
    %cst_35 = arith.constant dense<0.000000e+00> : vector<32x288xf32>
    %42 = tpu.matmul %40, %41, %cst_35 {dimension_numbers = #tpu.dot_dimension_numbers<[1], [0], [0], [1], [0, 0, 1, 1], [], []>} : vector<32x256xbf16>, vector<256x288xbf16>, vector<32x288xf32> -> vector<32x288xf32>
    %43 = arith.addf %39, %42 : vector<32x288xf32>
    %c256 = arith.constant 256 : index
    %c0_36 = arith.constant 0 : index
    %44 = vector.load %arg5[%c256, %c0_36] : memref<288x256xbf16, #tpu.memory_space<vmem>>, vector<32x256xbf16>
    %c0_37 = arith.constant 0 : index
    %c38 = arith.constant 38 : index
    %45 = vector.load %arg13[%c0_37, %c38] : memref<256x328xbf16, #tpu.memory_space<vmem>>, vector<256x288xbf16>
    %cst_38 = arith.constant dense<0.000000e+00> : vector<32x288xf32>
    %46 = tpu.matmul %44, %45, %cst_38 {dimension_numbers = #tpu.dot_dimension_numbers<[1], [0], [0], [1], [0, 0, 1, 1], [], []>} : vector<32x256xbf16>, vector<256x288xbf16>, vector<32x288xf32> -> vector<32x288xf32>
    %47 = arith.addf %43, %46 : vector<32x288xf32>
    %c0_39 = arith.constant 0 : index
    %c0_40 = arith.constant 0 : index
    %48 = vector.load %arg6[%c0_39, %c0_40] : memref<32x1xf32, #tpu.memory_space<vmem>>, vector<32x1xf32>
    %49 = vector.broadcast %48 : vector<32x1xf32> to vector<32x288xf32>
    %50 = arith.addf %47, %49 : vector<32x288xf32>
    %cst_41 = arith.constant 0.000000e+00 : f32
    %51 = vector.broadcast %cst_41 : f32 to vector<32x288xf32>
    %52 = arith.maximumf %50, %51 : vector<32x288xf32>
    %c0_42 = arith.constant 0 : index
    %c0_43 = arith.constant 0 : index
    %53 = vector.load %arg11[%c0_42, %c0_43] : memref<1x288xf32, #tpu.memory_space<vmem>>, vector<1x288xf32>
    %54 = vector.broadcast %53 : vector<1x288xf32> to vector<32x288xf32>
    %55 = arith.mulf %52, %54 : vector<32x288xf32>
    %cst_44 = arith.constant 0.000000e+00 : bf16
    %56 = vector.broadcast %cst_44 : bf16 to vector<32x19xbf16>
    %c0_45 = arith.constant 0 : index
    %c0_46 = arith.constant 0 : index
    %57 = vector.load %arg14[%c0_45, %c0_46] : memref<32x328xbf16, #tpu.memory_space<vmem>>, vector<32x19xbf16>
    tpu.vector_store %arg14[%c0_45, %c0_46], %56 {strides = array<i32>} : memref<32x328xbf16, #tpu.memory_space<vmem>>, vector<32x19xbf16>,
    %cst_47 = arith.constant 0.000000e+00 : bf16
    %58 = vector.broadcast %cst_47 : bf16 to vector<32x21xbf16>
    %c0_48 = arith.constant 0 : index
    %c307 = arith.constant 307 : index
    %59 = vector.load %arg14[%c0_48, %c307] : memref<32x328xbf16, #tpu.memory_space<vmem>>, vector<32x21xbf16>
    tpu.vector_store %arg14[%c0_48, %c307], %58 {strides = array<i32>} : memref<32x328xbf16, #tpu.memory_space<vmem>>, vector<32x21xbf16>,
    %60 = arith.truncf %55 : vector<32x288xf32> to vector<32x288xbf16>
    %c0_49 = arith.constant 0 : index
    %c19_50 = arith.constant 19 : index
    %61 = vector.load %arg14[%c0_49, %c19_50] : memref<32x328xbf16, #tpu.memory_space<vmem>>, vector<32x288xbf16>
    tpu.vector_store %arg14[%c0_49, %c19_50], %60 {strides = array<i32>} : memref<32x328xbf16, #tpu.memory_space<vmem>>, vector<32x288xbf16>,
    %c0_51 = arith.constant 0 : index
    %c0_52 = arith.constant 0 : index
    %62 = vector.load %arg7[%c0_51, %c0_52] : memref<288x32xbf16, #tpu.memory_space<vmem>>, vector<32x32xbf16>
    %c0_53 = arith.constant 0 : index
    %c0_54 = arith.constant 0 : index
    %63 = vector.load %arg14[%c0_53, %c0_54] : memref<32x328xbf16, #tpu.memory_space<vmem>>, vector<32x288xbf16>
    %cst_55 = arith.constant dense<0.000000e+00> : vector<32x288xf32>
    %64 = tpu.matmul %62, %63, %cst_55 {dimension_numbers = #tpu.dot_dimension_numbers<[1], [0], [0], [1], [0, 0, 1, 1], [], []>} : vector<32x32xbf16>, vector<32x288xbf16>, vector<32x288xf32> -> vector<32x288xf32>
    %c32_56 = arith.constant 32 : index
    %c0_57 = arith.constant 0 : index
    %65 = vector.load %arg7[%c32_56, %c0_57] : memref<288x32xbf16, #tpu.memory_space<vmem>>, vector<32x32xbf16>
    %c0_58 = arith.constant 0 : index
    %c1_59 = arith.constant 1 : index
    %66 = vector.load %arg14[%c0_58, %c1_59] : memref<32x328xbf16, #tpu.memory_space<vmem>>, vector<32x288xbf16>
    %cst_60 = arith.constant dense<0.000000e+00> : vector<32x288xf32>
    %67 = tpu.matmul %65, %66, %cst_60 {dimension_numbers = #tpu.dot_dimension_numbers<[1], [0], [0], [1], [0, 0, 1, 1], [], []>} : vector<32x32xbf16>, vector<32x288xbf16>, vector<32x288xf32> -> vector<32x288xf32>
    %68 = arith.addf %64, %67 : vector<32x288xf32>
    %c64_61 = arith.constant 64 : index
    %c0_62 = arith.constant 0 : index
    %69 = vector.load %arg7[%c64_61, %c0_62] : memref<288x32xbf16, #tpu.memory_space<vmem>>, vector<32x32xbf16>
    %c0_63 = arith.constant 0 : index
    %c2_64 = arith.constant 2 : index
    %70 = vector.load %arg14[%c0_63, %c2_64] : memref<32x328xbf16, #tpu.memory_space<vmem>>, vector<32x288xbf16>
    %cst_65 = arith.constant dense<0.000000e+00> : vector<32x288xf32>
    %71 = tpu.matmul %69, %70, %cst_65 {dimension_numbers = #tpu.dot_dimension_numbers<[1], [0], [0], [1], [0, 0, 1, 1], [], []>} : vector<32x32xbf16>, vector<32x288xbf16>, vector<32x288xf32> -> vector<32x288xf32>
    %72 = arith.addf %68, %71 : vector<32x288xf32>
    %c96_66 = arith.constant 96 : index
    %c0_67 = arith.constant 0 : index
    %73 = vector.load %arg7[%c96_66, %c0_67] : memref<288x32xbf16, #tpu.memory_space<vmem>>, vector<32x32xbf16>
    %c0_68 = arith.constant 0 : index
    %c18_69 = arith.constant 18 : index
    %74 = vector.load %arg14[%c0_68, %c18_69] : memref<32x328xbf16, #tpu.memory_space<vmem>>, vector<32x288xbf16>
    %cst_70 = arith.constant dense<0.000000e+00> : vector<32x288xf32>
    %75 = tpu.matmul %73, %74, %cst_70 {dimension_numbers = #tpu.dot_dimension_numbers<[1], [0], [0], [1], [0, 0, 1, 1], [], []>} : vector<32x32xbf16>, vector<32x288xbf16>, vector<32x288xf32> -> vector<32x288xf32>
    %76 = arith.addf %72, %75 : vector<32x288xf32>
    %c128_71 = arith.constant 128 : index
    %c0_72 = arith.constant 0 : index
    %77 = vector.load %arg7[%c128_71, %c0_72] : memref<288x32xbf16, #tpu.memory_space<vmem>>, vector<32x32xbf16>
    %c0_73 = arith.constant 0 : index
    %c19_74 = arith.constant 19 : index
    %78 = vector.load %arg14[%c0_73, %c19_74] : memref<32x328xbf16, #tpu.memory_space<vmem>>, vector<32x288xbf16>
    %cst_75 = arith.constant dense<0.000000e+00> : vector<32x288xf32>
    %79 = tpu.matmul %77, %78, %cst_75 {dimension_numbers = #tpu.dot_dimension_numbers<[1], [0], [0], [1], [0, 0, 1, 1], [], []>} : vector<32x32xbf16>, vector<32x288xbf16>, vector<32x288xf32> -> vector<32x288xf32>
    %80 = arith.addf %76, %79 : vector<32x288xf32>
    %c160_76 = arith.constant 160 : index
    %c0_77 = arith.constant 0 : index
    %81 = vector.load %arg7[%c160_76, %c0_77] : memref<288x32xbf16, #tpu.memory_space<vmem>>, vector<32x32xbf16>
    %c0_78 = arith.constant 0 : index
    %c20_79 = arith.constant 20 : index
    %82 = vector.load %arg14[%c0_78, %c20_79] : memref<32x328xbf16, #tpu.memory_space<vmem>>, vector<32x288xbf16>
    %cst_80 = arith.constant dense<0.000000e+00> : vector<32x288xf32>
    %83 = tpu.matmul %81, %82, %cst_80 {dimension_numbers = #tpu.dot_dimension_numbers<[1], [0], [0], [1], [0, 0, 1, 1], [], []>} : vector<32x32xbf16>, vector<32x288xbf16>, vector<32x288xf32> -> vector<32x288xf32>
    %84 = arith.addf %80, %83 : vector<32x288xf32>
    %c192_81 = arith.constant 192 : index
    %c0_82 = arith.constant 0 : index
    %85 = vector.load %arg7[%c192_81, %c0_82] : memref<288x32xbf16, #tpu.memory_space<vmem>>, vector<32x32xbf16>
    %c0_83 = arith.constant 0 : index
    %c36_84 = arith.constant 36 : index
    %86 = vector.load %arg14[%c0_83, %c36_84] : memref<32x328xbf16, #tpu.memory_space<vmem>>, vector<32x288xbf16>
    %cst_85 = arith.constant dense<0.000000e+00> : vector<32x288xf32>
    %87 = tpu.matmul %85, %86, %cst_85 {dimension_numbers = #tpu.dot_dimension_numbers<[1], [0], [0], [1], [0, 0, 1, 1], [], []>} : vector<32x32xbf16>, vector<32x288xbf16>, vector<32x288xf32> -> vector<32x288xf32>
    %88 = arith.addf %84, %87 : vector<32x288xf32>
    %c224_86 = arith.constant 224 : index
    %c0_87 = arith.constant 0 : index
    %89 = vector.load %arg7[%c224_86, %c0_87] : memref<288x32xbf16, #tpu.memory_space<vmem>>, vector<32x32xbf16>
    %c0_88 = arith.constant 0 : index
    %c37_89 = arith.constant 37 : index
    %90 = vector.load %arg14[%c0_88, %c37_89] : memref<32x328xbf16, #tpu.memory_space<vmem>>, vector<32x288xbf16>
    %cst_90 = arith.constant dense<0.000000e+00> : vector<32x288xf32>
    %91 = tpu.matmul %89, %90, %cst_90 {dimension_numbers = #tpu.dot_dimension_numbers<[1], [0], [0], [1], [0, 0, 1, 1], [], []>} : vector<32x32xbf16>, vector<32x288xbf16>, vector<32x288xf32> -> vector<32x288xf32>
    %92 = arith.addf %88, %91 : vector<32x288xf32>
    %c256_91 = arith.constant 256 : index
    %c0_92 = arith.constant 0 : index
    %93 = vector.load %arg7[%c256_91, %c0_92] : memref<288x32xbf16, #tpu.memory_space<vmem>>, vector<32x32xbf16>
    %c0_93 = arith.constant 0 : index
    %c38_94 = arith.constant 38 : index
    %94 = vector.load %arg14[%c0_93, %c38_94] : memref<32x328xbf16, #tpu.memory_space<vmem>>, vector<32x288xbf16>
    %cst_95 = arith.constant dense<0.000000e+00> : vector<32x288xf32>
    %95 = tpu.matmul %93, %94, %cst_95 {dimension_numbers = #tpu.dot_dimension_numbers<[1], [0], [0], [1], [0, 0, 1, 1], [], []>} : vector<32x32xbf16>, vector<32x288xbf16>, vector<32x288xf32> -> vector<32x288xf32>
    %96 = arith.addf %92, %95 : vector<32x288xf32>
    %c0_96 = arith.constant 0 : index
    %c0_97 = arith.constant 0 : index
    %97 = vector.load %arg8[%c0_96, %c0_97] : memref<32x1xf32, #tpu.memory_space<vmem>>, vector<32x1xf32>
    %98 = vector.broadcast %97 : vector<32x1xf32> to vector<32x288xf32>
    %99 = arith.addf %96, %98 : vector<32x288xf32>
    %cst_98 = arith.constant 0.000000e+00 : f32
    %100 = vector.broadcast %cst_98 : f32 to vector<32x288xf32>
    %101 = arith.maximumf %99, %100 : vector<32x288xf32>
    %c0_99 = arith.constant 0 : index
    %c0_100 = arith.constant 0 : index
    %102 = vector.load %arg11[%c0_99, %c0_100] : memref<1x288xf32, #tpu.memory_space<vmem>>, vector<1x288xf32>
    %103 = vector.broadcast %102 : vector<1x288xf32> to vector<32x288xf32>
    %104 = arith.mulf %101, %103 : vector<32x288xf32>
    %cst_101 = arith.constant 0.000000e+00 : bf16
    %105 = vector.broadcast %cst_101 : bf16 to vector<32x19xbf16>
    %c0_102 = arith.constant 0 : index
    %c0_103 = arith.constant 0 : index
    %106 = vector.load %arg15[%c0_102, %c0_103] : memref<32x328xbf16, #tpu.memory_space<vmem>>, vector<32x19xbf16>
    tpu.vector_store %arg15[%c0_102, %c0_103], %105 {strides = array<i32>} : memref<32x328xbf16, #tpu.memory_space<vmem>>, vector<32x19xbf16>,
    %cst_104 = arith.constant 0.000000e+00 : bf16
    %107 = vector.broadcast %cst_104 : bf16 to vector<32x21xbf16>
    %c0_105 = arith.constant 0 : index
    %c307_106 = arith.constant 307 : index
    %108 = vector.load %arg15[%c0_105, %c307_106] : memref<32x328xbf16, #tpu.memory_space<vmem>>, vector<32x21xbf16>
    tpu.vector_store %arg15[%c0_105, %c307_106], %107 {strides = array<i32>} : memref<32x328xbf16, #tpu.memory_space<vmem>>, vector<32x21xbf16>,
    %109 = arith.truncf %104 : vector<32x288xf32> to vector<32x288xbf16>
    %c0_107 = arith.constant 0 : index
    %c19_108 = arith.constant 19 : index
    %110 = vector.load %arg15[%c0_107, %c19_108] : memref<32x328xbf16, #tpu.memory_space<vmem>>, vector<32x288xbf16>
    tpu.vector_store %arg15[%c0_107, %c19_108], %109 {strides = array<i32>} : memref<32x328xbf16, #tpu.memory_space<vmem>>, vector<32x288xbf16>,
    %c0_109 = arith.constant 0 : index
    %c0_110 = arith.constant 0 : index
    %111 = vector.load %arg9[%c0_109, %c0_110] : memref<144x32xbf16, #tpu.memory_space<vmem>>, vector<16x32xbf16>
    %c0_111 = arith.constant 0 : index
    %c0_112 = arith.constant 0 : index
    %112 = vector.load %arg15[%c0_111, %c0_112] : memref<32x328xbf16, #tpu.memory_space<vmem>>, vector<32x288xbf16>
    %cst_113 = arith.constant dense<0.000000e+00> : vector<16x288xf32>
    %113 = tpu.matmul %111, %112, %cst_113 {dimension_numbers = #tpu.dot_dimension_numbers<[1], [0], [0], [1], [0, 0, 1, 1], [], []>} : vector<16x32xbf16>, vector<32x288xbf16>, vector<16x288xf32> -> vector<16x288xf32>
    %c16 = arith.constant 16 : index
    %c0_114 = arith.constant 0 : index
    %114 = vector.load %arg9[%c16, %c0_114] : memref<144x32xbf16, #tpu.memory_space<vmem>>, vector<16x32xbf16>
    %c0_115 = arith.constant 0 : index
    %c1_116 = arith.constant 1 : index
    %115 = vector.load %arg15[%c0_115, %c1_116] : memref<32x328xbf16, #tpu.memory_space<vmem>>, vector<32x288xbf16>
    %cst_117 = arith.constant dense<0.000000e+00> : vector<16x288xf32>
    %116 = tpu.matmul %114, %115, %cst_117 {dimension_numbers = #tpu.dot_dimension_numbers<[1], [0], [0], [1], [0, 0, 1, 1], [], []>} : vector<16x32xbf16>, vector<32x288xbf16>, vector<16x288xf32> -> vector<16x288xf32>
    %117 = arith.addf %113, %116 : vector<16x288xf32>
    %c32_118 = arith.constant 32 : index
    %c0_119 = arith.constant 0 : index
    %118 = vector.load %arg9[%c32_118, %c0_119] : memref<144x32xbf16, #tpu.memory_space<vmem>>, vector<16x32xbf16>
    %c0_120 = arith.constant 0 : index
    %c2_121 = arith.constant 2 : index
    %119 = vector.load %arg15[%c0_120, %c2_121] : memref<32x328xbf16, #tpu.memory_space<vmem>>, vector<32x288xbf16>
    %cst_122 = arith.constant dense<0.000000e+00> : vector<16x288xf32>
    %120 = tpu.matmul %118, %119, %cst_122 {dimension_numbers = #tpu.dot_dimension_numbers<[1], [0], [0], [1], [0, 0, 1, 1], [], []>} : vector<16x32xbf16>, vector<32x288xbf16>, vector<16x288xf32> -> vector<16x288xf32>
    %121 = arith.addf %117, %120 : vector<16x288xf32>
    %c48 = arith.constant 48 : index
    %c0_123 = arith.constant 0 : index
    %122 = vector.load %arg9[%c48, %c0_123] : memref<144x32xbf16, #tpu.memory_space<vmem>>, vector<16x32xbf16>
    %c0_124 = arith.constant 0 : index
    %c18_125 = arith.constant 18 : index
    %123 = vector.load %arg15[%c0_124, %c18_125] : memref<32x328xbf16, #tpu.memory_space<vmem>>, vector<32x288xbf16>
    %cst_126 = arith.constant dense<0.000000e+00> : vector<16x288xf32>
    %124 = tpu.matmul %122, %123, %cst_126 {dimension_numbers = #tpu.dot_dimension_numbers<[1], [0], [0], [1], [0, 0, 1, 1], [], []>} : vector<16x32xbf16>, vector<32x288xbf16>, vector<16x288xf32> -> vector<16x288xf32>
    %125 = arith.addf %121, %124 : vector<16x288xf32>
    %c64_127 = arith.constant 64 : index
    %c0_128 = arith.constant 0 : index
    %126 = vector.load %arg9[%c64_127, %c0_128] : memref<144x32xbf16, #tpu.memory_space<vmem>>, vector<16x32xbf16>
    %c0_129 = arith.constant 0 : index
    %c19_130 = arith.constant 19 : index
    %127 = vector.load %arg15[%c0_129, %c19_130] : memref<32x328xbf16, #tpu.memory_space<vmem>>, vector<32x288xbf16>
    %cst_131 = arith.constant dense<0.000000e+00> : vector<16x288xf32>
    %128 = tpu.matmul %126, %127, %cst_131 {dimension_numbers = #tpu.dot_dimension_numbers<[1], [0], [0], [1], [0, 0, 1, 1], [], []>} : vector<16x32xbf16>, vector<32x288xbf16>, vector<16x288xf32> -> vector<16x288xf32>
    %129 = arith.addf %125, %128 : vector<16x288xf32>
    %c80 = arith.constant 80 : index
    %c0_132 = arith.constant 0 : index
    %130 = vector.load %arg9[%c80, %c0_132] : memref<144x32xbf16, #tpu.memory_space<vmem>>, vector<16x32xbf16>
    %c0_133 = arith.constant 0 : index
    %c20_134 = arith.constant 20 : index
    %131 = vector.load %arg15[%c0_133, %c20_134] : memref<32x328xbf16, #tpu.memory_space<vmem>>, vector<32x288xbf16>
    %cst_135 = arith.constant dense<0.000000e+00> : vector<16x288xf32>
    %132 = tpu.matmul %130, %131, %cst_135 {dimension_numbers = #tpu.dot_dimension_numbers<[1], [0], [0], [1], [0, 0, 1, 1], [], []>} : vector<16x32xbf16>, vector<32x288xbf16>, vector<16x288xf32> -> vector<16x288xf32>
    %133 = arith.addf %129, %132 : vector<16x288xf32>
    %c96_136 = arith.constant 96 : index
    %c0_137 = arith.constant 0 : index
    %134 = vector.load %arg9[%c96_136, %c0_137] : memref<144x32xbf16, #tpu.memory_space<vmem>>, vector<16x32xbf16>
    %c0_138 = arith.constant 0 : index
    %c36_139 = arith.constant 36 : index
    %135 = vector.load %arg15[%c0_138, %c36_139] : memref<32x328xbf16, #tpu.memory_space<vmem>>, vector<32x288xbf16>
    %cst_140 = arith.constant dense<0.000000e+00> : vector<16x288xf32>
    %136 = tpu.matmul %134, %135, %cst_140 {dimension_numbers = #tpu.dot_dimension_numbers<[1], [0], [0], [1], [0, 0, 1, 1], [], []>} : vector<16x32xbf16>, vector<32x288xbf16>, vector<16x288xf32> -> vector<16x288xf32>
    %137 = arith.addf %133, %136 : vector<16x288xf32>
    %c112 = arith.constant 112 : index
    %c0_141 = arith.constant 0 : index
    %138 = vector.load %arg9[%c112, %c0_141] : memref<144x32xbf16, #tpu.memory_space<vmem>>, vector<16x32xbf16>
    %c0_142 = arith.constant 0 : index
    %c37_143 = arith.constant 37 : index
    %139 = vector.load %arg15[%c0_142, %c37_143] : memref<32x328xbf16, #tpu.memory_space<vmem>>, vector<32x288xbf16>
    %cst_144 = arith.constant dense<0.000000e+00> : vector<16x288xf32>
    %140 = tpu.matmul %138, %139, %cst_144 {dimension_numbers = #tpu.dot_dimension_numbers<[1], [0], [0], [1], [0, 0, 1, 1], [], []>} : vector<16x32xbf16>, vector<32x288xbf16>, vector<16x288xf32> -> vector<16x288xf32>
    %141 = arith.addf %137, %140 : vector<16x288xf32>
    %c128_145 = arith.constant 128 : index
    %c0_146 = arith.constant 0 : index
    %142 = vector.load %arg9[%c128_145, %c0_146] : memref<144x32xbf16, #tpu.memory_space<vmem>>, vector<16x32xbf16>
    %c0_147 = arith.constant 0 : index
    %c38_148 = arith.constant 38 : index
    %143 = vector.load %arg15[%c0_147, %c38_148] : memref<32x328xbf16, #tpu.memory_space<vmem>>, vector<32x288xbf16>
    %cst_149 = arith.constant dense<0.000000e+00> : vector<16x288xf32>
    %144 = tpu.matmul %142, %143, %cst_149 {dimension_numbers = #tpu.dot_dimension_numbers<[1], [0], [0], [1], [0, 0, 1, 1], [], []>} : vector<16x32xbf16>, vector<32x288xbf16>, vector<16x288xf32> -> vector<16x288xf32>
    %145 = arith.addf %141, %144 : vector<16x288xf32>
    %c0_150 = arith.constant 0 : index
    %c0_151 = arith.constant 0 : index
    %146 = vector.load %arg10[%c0_150, %c0_151] : memref<16x1xf32, #tpu.memory_space<vmem>>, vector<16x1xf32>
    %147 = vector.broadcast %146 : vector<16x1xf32> to vector<16x288xf32>
    %148 = arith.addf %145, %147 : vector<16x288xf32>
    %149 = math.tanh %148 : vector<16x288xf32>
    %c0_152 = arith.constant 0 : index
    %c0_153 = arith.constant 0 : index
    %c0_154 = arith.constant 0 : index
    %150 = vector.load %arg12[%c0_152, %c0_153, %c0_154] : memref<1x16x288xf32, #tpu.memory_space<vmem>>, vector<1x16x288xf32>
    %151 = vector.shape_cast %150 : vector<1x16x288xf32> to vector<16x288xf32>
    %152 = vector.shape_cast %149 : vector<16x288xf32> to vector<1x16x288xf32>
    tpu.vector_store %arg12[%c0_152, %c0_153, %c0_154], %152 {strides = array<i32>} : memref<1x16x288xf32, #tpu.memory_space<vmem>>, vector<1x16x288xf32>,
    return
  }
  func.func @transform_0(%arg0: i32) -> (i32, i32, i32) {
    %c0_i32 = arith.constant 0 : i32
    %c0_i32_0 = arith.constant 0 : i32
    %c0_i32_1 = arith.constant 0 : i32
    return %arg0, %c0_i32, %c0_i32_0 : i32, i32, i32
  }
  func.func @transform_1(%arg0: i32) -> (i32, i32) {
    %c0_i32 = arith.constant 0 : i32
    %c0_i32_0 = arith.constant 0 : i32
    %c0_i32_1 = arith.constant 0 : i32
    return %c0_i32, %c0_i32_0 : i32, i32
  }
  func.func @transform_2(%arg0: i32) -> (i32, i32) {
    %c0_i32 = arith.constant 0 : i32
    %c0_i32_0 = arith.constant 0 : i32
    %c0_i32_1 = arith.constant 0 : i32
    return %c0_i32, %c0_i32_0 : i32, i32
  }
  func.func @transform_3(%arg0: i32) -> (i32, i32) {
    %c0_i32 = arith.constant 0 : i32
    %c0_i32_0 = arith.constant 0 : i32
    %c0_i32_1 = arith.constant 0 : i32
    return %c0_i32, %c0_i32_0 : i32, i32
  }
  func.func @transform_4(%arg0: i32) -> (i32, i32) {
    %c0_i32 = arith.constant 0 : i32
    %c0_i32_0 = arith.constant 0 : i32
    %c0_i32_1 = arith.constant 0 : i32
    return %c0_i32, %c0_i32_0 : i32, i32
  }
  func.func @transform_5(%arg0: i32) -> (i32, i32) {
    %c0_i32 = arith.constant 0 : i32
    %c0_i32_0 = arith.constant 0 : i32
    %c0_i32_1 = arith.constant 0 : i32
    return %c0_i32, %c0_i32_0 : i32, i32
  }
  func.func @transform_6(%arg0: i32) -> (i32, i32) {
    %c0_i32 = arith.constant 0 : i32
    %c0_i32_0 = arith.constant 0 : i32
    %c0_i32_1 = arith.constant 0 : i32
    return %c0_i32, %c0_i32_0 : i32, i32
  }
  func.func @transform_7(%arg0: i32) -> (i32, i32) {
    %c0_i32 = arith.constant 0 : i32
    %c0_i32_0 = arith.constant 0 : i32
    %c0_i32_1 = arith.constant 0 : i32
    return %c0_i32, %c0_i32_0 : i32, i32
  }
  func.func @transform_8(%arg0: i32) -> (i32, i32) {
    %c0_i32 = arith.constant 0 : i32
    %c0_i32_0 = arith.constant 0 : i32
    %c0_i32_1 = arith.constant 0 : i32
    return %c0_i32, %c0_i32_0 : i32, i32
  }
  func.func @transform_9(%arg0: i32) -> (i32, i32) {
    %c0_i32 = arith.constant 0 : i32
    %c0_i32_0 = arith.constant 0 : i32
    %c0_i32_1 = arith.constant 0 : i32
    return %c0_i32, %c0_i32_0 : i32, i32
  }
  func.func @transform_10(%arg0: i32) -> (i32, i32) {
    %c0_i32 = arith.constant 0 : i32
    %c0_i32_0 = arith.constant 0 : i32
    %c0_i32_1 = arith.constant 0 : i32
    return %c0_i32, %c0_i32_0 : i32, i32
  }
  func.func @transform_11(%arg0: i32) -> (i32, i32, i32) {
    %c0_i32 = arith.constant 0 : i32
    %c0_i32_0 = arith.constant 0 : i32
    %c0_i32_1 = arith.constant 0 : i32
    return %arg0, %c0_i32, %c0_i32_0 : i32, i32, i32
  }
}

</mosaic_0001>

<llo_original>
// kernel: vgg_forward.1
$region0: #{vgg_forward.1}
  #allocation0 [shape = 'u32[]', space=smem, size = 0x4, offset = 0x4, fixed_abs, tag = 'smem constant byte address 0x4 - core index']
  #allocation1 [shape = 'u32[72,128]{1,0:T(1,128)}', space=vmem, size = 0x9000, scoped, tag = 'internal scratch']
  #allocation2 [shape = 'bf16[256,328]{1,0:T(8,128)(2,1)}', space=vmem, size = 0x30000, scoped, tag = 'scratch operand']
  #allocation3 [shape = 'bf16[32,328]{1,0:T(8,128)(2,1)}', space=vmem, size = 0x6000, scoped, tag = 'scratch operand']
  #allocation4 [shape = 'bf16[32,328]{1,0:T(8,128)(2,1)}', space=vmem, size = 0x6000, scoped, tag = 'scratch operand']
  %s0 = inlined_call_operand.vmem [shape: f32[2,256,64], index: 0, kind: input, shape index: {}]
  %s1 = inlined_call_operand.vmem [shape: f32[256,1], index: 1, kind: input, shape index: {}]
  %s2 = inlined_call_operand.vmem [shape: f32[256,1], index: 2, kind: input, shape index: {}]
  %s3 = inlined_call_operand.hbm [shape: bf16[64,328], index: 3, kind: input, shape index: {}]
  %s4 = inlined_call_operand.hbm [shape: bf16[288,256], index: 4, kind: input, shape index: {}]
  %s5 = inlined_call_operand.vmem [shape: f32[32,1], index: 5, kind: input, shape index: {}]
  %s6 = inlined_call_operand.vmem [shape: bf16[288,32], index: 6, kind: input, shape index: {}]
  %s7 = inlined_call_operand.vmem [shape: f32[32,1], index: 7, kind: input, shape index: {}]
  %s8 = inlined_call_operand.vmem [shape: bf16[144,32], index: 8, kind: input, shape index: {}]
  %s9 = inlined_call_operand.vmem [shape: f32[16,1], index: 9, kind: input, shape index: {}]
  %s10 = inlined_call_operand.hbm [shape: f32[1,288], index: 10, kind: input, shape index: {}]
  %s11 = inlined_call_operand.vmem [shape: f32[2,16,288], index: 11, kind: output, shape index: {}]
  %s12 = sld [smem:[#allocation0]]
  $region89: #{vgg_forward.1} parent=0
    _
  %s14 = ssub.s32 1, %s12
  %s15 = scalar_select 0, %s14, %s12
  $region1: #{vgg_forward.1} parent=0
    #allocation5 [shape = 'u8[49152]{0}', space=vmem, size = 0xc000, scoped, tag = 'input window, operand 3, single buffered']
    #allocation6 [shape = 's32[2]{0}', space=sflag, size = 0x8, scoped, tag = 'scoped memory for vgg_forward.1']
    #allocation7 [shape = 'u8[147456]{0}', space=vmem, size = 0x24000, scoped, tag = 'input window, operand 4, single buffered']
    #allocation8 [shape = 's32[1]{0}', space=sflag, size = 0x4, scoped, tag = 'scoped memory for vgg_forward.1']
    #allocation9 [shape = 'u8[1536]{0}', space=vmem, size = 0x800, scoped, tag = 'input window, operand 10, single buffered']
    %16 = vsyncpa [#allocation6], 0
    %17 = vsyncpa [#allocation8], 0
    loop: start=0, step=1, limit=4
    $region2: #{vgg_forward.1} parent=1 // loop_pre_header
      _
    $region3: #{vgg_forward.1} parent=1 // loop_header
      %s19 = sphi 0, %s23
      %p20 = scmp.ge.s32.totalorder %s19, 4
      %s29 = sphi 0, %s31
      %s32 = sphi 0, %s29
      %s33 = sphi 0, %s32
      %s49 = sphi 0, %s33
      %s53 = sphi 0, %s53
      %s55 = sphi 0, %s53
      %s56 = sphi 0, %s55
      %s70 = sphi 0, %s56
      %s74 = sphi 0, %s74
      %s76 = sphi 0, %s74
      %s77 = sphi 0, %s76
      %s91 = sphi 0, %s77
      %s95 = sphi 0, %s95
      %s97 = sphi 0, %s95
      %s98 = sphi 0, %s97
      %s112 = sphi 0, %s98
      %s116 = sphi 0, %s116
      %s118 = sphi 0, %s116
      %s119 = sphi 0, %s118
      %s133 = sphi 0, %s119
      %s137 = sphi 0, %s137
      %s139 = sphi 0, %s137
      %s140 = sphi 0, %s139
      %s154 = sphi 0, %s140
      %s158 = sphi 0, %s158
      %s160 = sphi 0, %s158
      %s161 = sphi 0, %s160
      %s175 = sphi 0, %s161
      %s179 = sphi 0, %s179
      %s181 = sphi 0, %s179
      %s182 = sphi 0, %s181
      %s196 = sphi 0, %s182
      %s200 = sphi 0, %s200
      %s202 = sphi 0, %s200
      %s203 = sphi 0, %s202
      %s217 = sphi 0, %s203
      %s221 = sphi 0, %s221
      %s223 = sphi 0, %s221
      %s224 = sphi 0, %s223
      %s238 = sphi 0, %s224
      %s242 = sphi 0, %s242
      %s244 = sphi 0, %s242
      %s245 = sphi 0, %s244
      %s259 = sphi 0, %s245
      %s265 = sphi 0, %s267
      %s268 = sphi 0, %s265
      %s269 = sphi 0, %s268
      %s285 = sphi 0, %s269
    $region4: #{vgg_forward.1} parent=1 // loop_header_branch
      %22 = sbr.rel (%p20) target = $region8
    $region5: #{vgg_forward.1} parent=1 // loop_body
      %s24 = ssub.s32 %s19, 1
      %s25 = ssub.s32 %s19, 2
      %s26 = sadd.s32 %s19, 1
      %s27 = ssub.s32 %s19, %s26
      %p28 = scmp.eq.s32.totalorder %s27, 0
      %s30 = sadd.s32 %s29, 1
      %s31 = scalar_select %p28, %s29, %s30
      %p34 = pneg %p28
      %p35 = scmp.eq.s32.totalorder %s19, 1
      %p36 = por %p34, %p35
      %p37 = scmp.ne.s32.totalorder %s29, %s32
      %p38 = scmp.eq.s32.totalorder %s19, 0
      %p39 = por %p37, %p38
      %p40 = scmp.ne.s32.totalorder %s29, %s32
      %p41 = scmp.eq.s32.totalorder %s24, 1
      %p42 = por %p40, %p41
      %p43 = scmp.ne.s32.totalorder %s32, %s33
      %p44 = scmp.eq.s32.totalorder %s24, 0
      %p45 = por %p43, %p44
      %p46 = scmp.ne.s32.totalorder %s32, %s33
      %p47 = scmp.eq.s32.totalorder %s25, 1
      %p48 = por %p46, %p47
      %p50 = scmp.ne.s32.totalorder %s33, %s49
      %p51 = scmp.eq.s32.totalorder %s25, 0
      %p52 = por %p50, %p51
      %s54 = sadd.s32 %s53, 1
      %p57 = scmp.eq.s32.totalorder %s19, 1
      %p58 = scmp.ne.s32.totalorder %s53, %s55
      %p59 = scmp.eq.s32.totalorder %s19, 0
      %p60 = por %p58, %p59
      %p61 = scmp.ne.s32.totalorder %s53, %s55
      %p62 = scmp.eq.s32.totalorder %s24, 1
      %p63 = por %p61, %p62
      %p64 = scmp.ne.s32.totalorder %s55, %s56
      %p65 = scmp.eq.s32.totalorder %s24, 0
      %p66 = por %p64, %p65
      %p67 = scmp.ne.s32.totalorder %s55, %s56
      %p68 = scmp.eq.s32.totalorder %s25, 1
      %p69 = por %p67, %p68
      %p71 = scmp.ne.s32.totalorder %s56, %s70
      %p72 = scmp.eq.s32.totalorder %s25, 0
      %p73 = por %p71, %p72
      %s75 = sadd.s32 %s74, 1
      %p78 = scmp.eq.s32.totalorder %s19, 1
      %p79 = scmp.ne.s32.totalorder %s74, %s76
      %p80 = scmp.eq.s32.totalorder %s19, 0
      %p81 = por %p79, %p80
      %p82 = scmp.ne.s32.totalorder %s74, %s76
      %p83 = scmp.eq.s32.totalorder %s24, 1
      %p84 = por %p82, %p83
      %p85 = scmp.ne.s32.totalorder %s76, %s77
      %p86 = scmp.eq.s32.totalorder %s24, 0
      %p87 = por %p85, %p86
      %p88 = scmp.ne.s32.totalorder %s76, %s77
      %p89 = scmp.eq.s32.totalorder %s25, 1
      %p90 = por %p88, %p89
      %p92 = scmp.ne.s32.totalorder %s77, %s91
      %p93 = scmp.eq.s32.totalorder %s25, 0
      %p94 = por %p92, %p93
      %s96 = sadd.s32 %s95, 1
      %p99 = scmp.eq.s32.totalorder %s19, 1
      %p100 = scmp.ne.s32.totalorder %s95, %s97
      %p101 = scmp.eq.s32.totalorder %s19, 0
      %p102 = por %p100, %p101
      %p103 = scmp.ne.s32.totalorder %s95, %s97
      %p104 = scmp.eq.s32.totalorder %s24, 1
      %p105 = por %p103, %p104
      %p106 = scmp.ne.s32.totalorder %s97, %s98
      %p107 = scmp.eq.s32.totalorder %s24, 0
      %p108 = por %p106, %p107
      %p109 = scmp.ne.s32.totalorder %s97, %s98
      %p110 = scmp.eq.s32.totalorder %s25, 1
      %p111 = por %p109, %p110
      %p113 = scmp.ne.s32.totalorder %s98, %s112
      %p114 = scmp.eq.s32.totalorder %s25, 0
      %p115 = por %p113, %p114
      %s117 = sadd.s32 %s116, 1
      %p120 = scmp.eq.s32.totalorder %s19, 1
      %p121 = scmp.ne.s32.totalorder %s116, %s118
      %p122 = scmp.eq.s32.totalorder %s19, 0
      %p123 = por %p121, %p122
      %p124 = scmp.ne.s32.totalorder %s116, %s118
      %p125 = scmp.eq.s32.totalorder %s24, 1
      %p126 = por %p124, %p125
      %p127 = scmp.ne.s32.totalorder %s118, %s119
      %p128 = scmp.eq.s32.totalorder %s24, 0
      %p129 = por %p127, %p128
      %p130 = scmp.ne.s32.totalorder %s118, %s119
      %p131 = scmp.eq.s32.totalorder %s25, 1
      %p132 = por %p130, %p131
      %p134 = scmp.ne.s32.totalorder %s119, %s133
      %p135 = scmp.eq.s32.totalorder %s25, 0
      %p136 = por %p134, %p135
      %s138 = sadd.s32 %s137, 1
      %p141 = scmp.eq.s32.totalorder %s19, 1
      %p142 = scmp.ne.s32.totalorder %s137, %s139
      %p143 = scmp.eq.s32.totalorder %s19, 0
      %p144 = por %p142, %p143
      %p145 = scmp.ne.s32.totalorder %s137, %s139
      %p146 = scmp.eq.s32.totalorder %s24, 1
      %p147 = por %p145, %p146
      %p148 = scmp.ne.s32.totalorder %s139, %s140
      %p149 = scmp.eq.s32.totalorder %s24, 0
      %p150 = por %p148, %p149
      %p151 = scmp.ne.s32.totalorder %s139, %s140
      %p152 = scmp.eq.s32.totalorder %s25, 1
      %p153 = por %p151, %p152
      %p155 = scmp.ne.s32.totalorder %s140, %s154
      %p156 = scmp.eq.s32.totalorder %s25, 0
      %p157 = por %p155, %p156
      %s159 = sadd.s32 %s158, 1
      %p162 = scmp.eq.s32.totalorder %s19, 1
      %p163 = scmp.ne.s32.totalorder %s158, %s160
      %p164 = scmp.eq.s32.totalorder %s19, 0
      %p165 = por %p163, %p164
      %p166 = scmp.ne.s32.totalorder %s158, %s160
      %p167 = scmp.eq.s32.totalorder %s24, 1
      %p168 = por %p166, %p167
      %p169 = scmp.ne.s32.totalorder %s160, %s161
      %p170 = scmp.eq.s32.totalorder %s24, 0
      %p171 = por %p169, %p170
      %p172 = scmp.ne.s32.totalorder %s160, %s161
      %p173 = scmp.eq.s32.totalorder %s25, 1
      %p174 = por %p172, %p173
      %p176 = scmp.ne.s32.totalorder %s161, %s175
      %p177 = scmp.eq.s32.totalorder %s25, 0
      %p178 = por %p176, %p177
      %s180 = sadd.s32 %s179, 1
      %p183 = scmp.eq.s32.totalorder %s19, 1
      %p184 = scmp.ne.s32.totalorder %s179, %s181
      %p185 = scmp.eq.s32.totalorder %s19, 0
      %p186 = por %p184, %p185
      %p187 = scmp.ne.s32.totalorder %s179, %s181
      %p188 = scmp.eq.s32.totalorder %s24, 1
      %p189 = por %p187, %p188
      %p190 = scmp.ne.s32.totalorder %s181, %s182
      %p191 = scmp.eq.s32.totalorder %s24, 0
      %p192 = por %p190, %p191
      %p193 = scmp.ne.s32.totalorder %s181, %s182
      %p194 = scmp.eq.s32.totalorder %s25, 1
      %p195 = por %p193, %p194
      %p197 = scmp.ne.s32.totalorder %s182, %s196
      %p198 = scmp.eq.s32.totalorder %s25, 0
      %p199 = por %p197, %p198
      %s201 = sadd.s32 %s200, 1
      %p204 = scmp.eq.s32.totalorder %s19, 1
      %p205 = scmp.ne.s32.totalorder %s200, %s202
      %p206 = scmp.eq.s32.totalorder %s19, 0
      %p207 = por %p205, %p206
      %p208 = scmp.ne.s32.totalorder %s200, %s202
      %p209 = scmp.eq.s32.totalorder %s24, 1
      %p210 = por %p208, %p209
      %p211 = scmp.ne.s32.totalorder %s202, %s203
      %p212 = scmp.eq.s32.totalorder %s24, 0
      %p213 = por %p211, %p212
      %p214 = scmp.ne.s32.totalorder %s202, %s203
      %p215 = scmp.eq.s32.totalorder %s25, 1
      %p216 = por %p214, %p215
      %p218 = scmp.ne.s32.totalorder %s203, %s217
      %p219 = scmp.eq.s32.totalorder %s25, 0
      %p220 = por %p218, %p219
      %s222 = sadd.s32 %s221, 1
      %p225 = scmp.eq.s32.totalorder %s19, 1
      %p226 = scmp.ne.s32.totalorder %s221, %s223
      %p227 = scmp.eq.s32.totalorder %s19, 0
      %p228 = por %p226, %p227
      %p229 = scmp.ne.s32.totalorder %s221, %s223
      %p230 = scmp.eq.s32.totalorder %s24, 1
      %p231 = por %p229, %p230
      %p232 = scmp.ne.s32.totalorder %s223, %s224
      %p233 = scmp.eq.s32.totalorder %s24, 0
      %p234 = por %p232, %p233
      %p235 = scmp.ne.s32.totalorder %s223, %s224
      %p236 = scmp.eq.s32.totalorder %s25, 1
      %p237 = por %p235, %p236
      %p239 = scmp.ne.s32.totalorder %s224, %s238
      %p240 = scmp.eq.s32.totalorder %s25, 0
      %p241 = por %p239, %p240
      %s243 = sadd.s32 %s242, 1
      %p246 = scmp.eq.s32.totalorder %s19, 1
      %p247 = scmp.ne.s32.totalorder %s242, %s244
      %p248 = scmp.eq.s32.totalorder %s19, 0
      %p249 = por %p247, %p248
      %p250 = scmp.ne.s32.totalorder %s242, %s244
      %p251 = scmp.eq.s32.totalorder %s24, 1
      %p252 = por %p250, %p251
      %p253 = scmp.ne.s32.totalorder %s244, %s245
      %p254 = scmp.eq.s32.totalorder %s24, 0
      %p255 = por %p253, %p254
      %p256 = scmp.ne.s32.totalorder %s244, %s245
      %p257 = scmp.eq.s32.totalorder %s25, 1
      %p258 = por %p256, %p257
      %p260 = scmp.ne.s32.totalorder %s245, %s259
      %p261 = scmp.eq.s32.totalorder %s25, 0
      %p262 = por %p260, %p261
      %s263 = ssub.s32 %s19, %s26
      %p264 = scmp.eq.s32.totalorder %s263, 0
      %s266 = sadd.s32 %s265, 1
      %s267 = scalar_select %p264, %s265, %s266
      %p270 = pneg %p264
      %p271 = scmp.eq.s32.totalorder %s19, 1
      %p272 = por %p270, %p271
      %p273 = scmp.ne.s32.totalorder %s265, %s268
      %p274 = scmp.eq.s32.totalorder %s19, 0
      %p275 = por %p273, %p274
      %p276 = scmp.ne.s32.totalorder %s265, %s268
      %p277 = scmp.eq.s32.totalorder %s24, 1
      %p278 = por %p276, %p277
      %p279 = scmp.ne.s32.totalorder %s268, %s269
      %p280 = scmp.eq.s32.totalorder %s24, 0
      %p281 = por %p279, %p280
      %p282 = scmp.ne.s32.totalorder %s268, %s269
      %p283 = scmp.eq.s32.totalorder %s25, 1
      %p284 = por %p282, %p283
      %p286 = scmp.ne.s32.totalorder %s269, %s285
      %p287 = scmp.eq.s32.totalorder %s25, 0
      %p288 = por %p286, %p287
      %p289 = scmp.le.s32.totalorder 1, %s19
      %p290 = scmp.lt.s32.totalorder %s19, 3
      %p291 = pnand %p289, %p290
      %p292 = pneg %p291
      // Predicated region
      $region9: #{vgg_forward.1} parent=5 // pred_check
        _
      $region10: #{vgg_forward.1} parent=5 // pred_check_branch
        %294 = sbr.rel (%p291) target = $region12
      $region11: #{vgg_forward.1} parent=5 // pred_region
        %s295 = ssub.s32 %s19, 1
        // Predicated region
        $region13: #{vgg_forward.1} parent=11 // pred_check
          %p296 = pneg %p66
        $region14: #{vgg_forward.1} parent=11 // pred_check_branch
          %298 = sbr.rel (%p296) target = $region16
        $region15: #{vgg_forward.1} parent=11 // pred_region
          _
        $region16: #{vgg_forward.1} parent=11 // pred_fallthru
          _
        // Predicated region
        $region17: #{vgg_forward.1} parent=11 // pred_check
          %p299 = pneg %p87
        $region18: #{vgg_forward.1} parent=11 // pred_check_branch
          %301 = sbr.rel (%p299) target = $region20
        $region19: #{vgg_forward.1} parent=11 // pred_region
          _
        $region20: #{vgg_forward.1} parent=11 // pred_fallthru
          _
        // Predicated region
        $region21: #{vgg_forward.1} parent=11 // pred_check
          %p302 = pneg %p108
        $region22: #{vgg_forward.1} parent=11 // pred_check_branch
          %304 = sbr.rel (%p302) target = $region24
        $region23: #{vgg_forward.1} parent=11 // pred_region
          %306 = vsyncadd [#allocation6], 0
          %s307 = sshll.u32 %s3, 4
          %s308 = int_to_ptr.hbm [resolvable:$true] %s307
          %s309 = sshll.u32 [#allocation5], 4
          %s310 = int_to_ptr.vmem [resolvable:$true] %s309
          %315 = dma.hbm_to_vmem [thread:$0]  %s308, 1536, %s310, [#allocation6], 192, 192, 12
        $region24: #{vgg_forward.1} parent=11 // pred_fallthru
          _
        // Predicated region
        $region25: #{vgg_forward.1} parent=11 // pred_check
          %p316 = pneg %p129
        $region26: #{vgg_forward.1} parent=11 // pred_check_branch
          %318 = sbr.rel (%p316) target = $region28
        $region27: #{vgg_forward.1} parent=11 // pred_region
          %320 = vsyncadd [#allocation8], 0
          %s321 = sshll.u32 %s4, 4
          %s322 = int_to_ptr.hbm [resolvable:$true] %s321
          %s323 = sshll.u32 [#allocation7], 4
          %s324 = int_to_ptr.vmem [resolvable:$true] %s323
          %329 = dma.hbm_to_vmem [thread:$0]  %s322, 4608, %s324, [#allocation8], 128, 128, 8
        $region28: #{vgg_forward.1} parent=11 // pred_fallthru
          _
        // Predicated region
        $region29: #{vgg_forward.1} parent=11 // pred_check
          %p330 = pneg %p150
        $region30: #{vgg_forward.1} parent=11 // pred_check_branch
          %332 = sbr.rel (%p330) target = $region32
        $region31: #{vgg_forward.1} parent=11 // pred_region
          _
        $region32: #{vgg_forward.1} parent=11 // pred_fallthru
          _
        // Predicated region
        $region33: #{vgg_forward.1} parent=11 // pred_check
          %p333 = pneg %p171
        $region34: #{vgg_forward.1} parent=11 // pred_check_branch
          %335 = sbr.rel (%p333) target = $region36
        $region35: #{vgg_forward.1} parent=11 // pred_region
          _
        $region36: #{vgg_forward.1} parent=11 // pred_fallthru
          _
        // Predicated region
        $region37: #{vgg_forward.1} parent=11 // pred_check
          %p336 = pneg %p192
        $region38: #{vgg_forward.1} parent=11 // pred_check_branch
          %338 = sbr.rel (%p336) target = $region40
        $region39: #{vgg_forward.1} parent=11 // pred_region
          _
        $region40: #{vgg_forward.1} parent=11 // pred_fallthru
          _
        // Predicated region
        $region41: #{vgg_forward.1} parent=11 // pred_check
          %p339 = pneg %p213
        $region42: #{vgg_forward.1} parent=11 // pred_check_branch
          %341 = sbr.rel (%p339) target = $region44
        $region43: #{vgg_forward.1} parent=11 // pred_region
          _
        $region44: #{vgg_forward.1} parent=11 // pred_fallthru
          _
        // Predicated region
        $region45: #{vgg_forward.1} parent=11 // pred_check
          %p342 = pneg %p234
        $region46: #{vgg_forward.1} parent=11 // pred_check_branch
          %344 = sbr.rel (%p342) target = $region48
        $region47: #{vgg_forward.1} parent=11 // pred_region
          _
        $region48: #{vgg_forward.1} parent=11 // pred_fallthru
          _
        // Predicated region
        $region49: #{vgg_forward.1} parent=11 // pred_check
          %p345 = pneg %p255
        $region50: #{vgg_forward.1} parent=11 // pred_check_branch
          %347 = sbr.rel (%p345) target = $region52
        $region51: #{vgg_forward.1} parent=11 // pred_region
          %349 = vsyncadd [#allocation8], 0
          %s351 = sshll.u32 %s10, 4
          %s352 = int_to_ptr.hbm [resolvable:$true] %s351
          %s353 = sshll.u32 [#allocation9], 4
          %s354 = int_to_ptr.vmem [resolvable:$true] %s353
          %356 = dma.hbm_to_vmem [thread:$0]  %s352, 48, %s354, [#allocation8]
        $region52: #{vgg_forward.1} parent=11 // pred_fallthru
          _
      $region12: #{vgg_forward.1} parent=5 // pred_fallthru
        _
      %p357 = scmp.lt.s32.totalorder %s19, 2
      // Predicated region
      $region53: #{vgg_forward.1} parent=5 // pred_check
        %p358 = pneg %p357
      $region54: #{vgg_forward.1} parent=5 // pred_check_branch
        %360 = sbr.rel (%p358) target = $region56
      $region55: #{vgg_forward.1} parent=5 // pred_region
        // Predicated region
        $region57: #{vgg_forward.1} parent=55 // pred_check
          %p361 = pneg %p39
        $region58: #{vgg_forward.1} parent=55 // pred_check_branch
          %363 = sbr.rel (%p361) target = $region60
        $region59: #{vgg_forward.1} parent=55 // pred_region
          %p364 = scmp.lt.s32.totalorder %s19, 1
          %s365 = scalar_select %p364, %s19, 1
          %s366 = smul.addr %s365, 32
          %s367 = smul.addr %s366, 8
          %s368 = scalar_lea.vmem %s0, %s367
        $region60: #{vgg_forward.1} parent=55 // pred_fallthru
          _
      $region56: #{vgg_forward.1} parent=5 // pred_fallthru
        _
      %p369 = scmp.le.s32.totalorder 1, %s19
      %p370 = scmp.lt.s32.totalorder %s19, 3
      %p371 = pnand %p369, %p370
      %p372 = pneg %p371
      // Predicated region
      $region61: #{vgg_forward.1} parent=5 // pred_check
        _
      $region62: #{vgg_forward.1} parent=5 // pred_check_branch
        %374 = sbr.rel (%p371) target = $region64
      $region63: #{vgg_forward.1} parent=5 // pred_region
        %s375 = ssub.s32 %s19, 1
        // Predicated region
        $region65: #{vgg_forward.1} parent=63 // pred_check
          %p376 = pneg %p108
        $region66: #{vgg_forward.1} parent=63 // pred_check_branch
          %378 = sbr.rel (%p376) target = $region68
        $region67: #{vgg_forward.1} parent=63 // pred_region
          %380 = dma.done [#allocation6], 1536
        $region68: #{vgg_forward.1} parent=63 // pred_fallthru
          _
        // Predicated region
        $region69: #{vgg_forward.1} parent=63 // pred_check
          %p381 = pneg %p129
        $region70: #{vgg_forward.1} parent=63 // pred_check_branch
          %383 = sbr.rel (%p381) target = $region72
        $region71: #{vgg_forward.1} parent=63 // pred_region
          %385 = dma.done [#allocation8], 4608
        $region72: #{vgg_forward.1} parent=63 // pred_fallthru
          _
        // Predicated region
        $region73: #{vgg_forward.1} parent=63 // pred_check
          %p386 = pneg %p255
        $region74: #{vgg_forward.1} parent=63 // pred_check_branch
          %388 = sbr.rel (%p386) target = $region76
        $region75: #{vgg_forward.1} parent=63 // pred_region
          %390 = dma.done [#allocation8], 48
        $region76: #{vgg_forward.1} parent=63 // pred_fallthru
          _
        %p391 = scmp.lt.s32.totalorder %s24, 1
        %s392 = scalar_select %p391, %s24, 1
        %s393 = smul.addr %s392, 32
        %s394 = smul.addr %s393, 8
        %s395 = scalar_lea.vmem %s0, %s394
        %p396 = pneg %p45
        %p397 = pneg %p42
        %p398 = pneg %p66
        %p399 = pneg %p63
        %p400 = pneg %p87
        %p401 = pneg %p84
        %p402 = pneg %p108
        %p403 = pneg %p105
        %p404 = pneg %p129
        %p405 = pneg %p126
        %p406 = pneg %p150
        %p407 = pneg %p147
        %p408 = pneg %p171
        %p409 = pneg %p168
        %p410 = pneg %p192
        %p411 = pneg %p189
        %p412 = pneg %p213
        %p413 = pneg %p210
        %p414 = pneg %p234
        %p415 = pneg %p231
        %p416 = pneg %p255
        %p417 = pneg %p252
        %p418 = pneg %p281
        %p419 = pneg %p278
        %p420 = scmp.lt.s32.totalorder %s24, 1
        %s421 = scalar_select %p420, %s24, 1
        %s422 = smul.addr %s421, 6
        %s423 = smul.addr %s422, 8
        %s424 = scalar_lea.vmem %s11, %s423
        %p425 = scmp.lt.s32.totalorder %s24, 1
        %s426 = scalar_select %p425, %s24, 1
        %s427 = smul.addr %s426, 32
        %s428 = smul.addr %s427, 8
        %s429 = scalar_lea.vmem %s0, %s428
        %p430 = scmp.lt.s32.totalorder %s24, 1
        %s431 = scalar_select %p430, %s24, 1
        %s432 = smul.addr %s431, 6
        %s433 = smul.addr %s432, 8
        %s434 = scalar_lea.vmem %s11, %s433
        %v436 = vld [vmem:[%s429] sm:$0xff]
        %v437 = vld [vmem:[%s429 + $0x8] sm:$0xff]
        %v438 = vld [vmem:[%s429 + $0x10] sm:$0xff]
        %v439 = vld [vmem:[%s429 + $0x18] sm:$0xff]
        %v440 = vld [vmem:[%s429 + $0x20] sm:$0xff]
        %v441 = vld [vmem:[%s429 + $0x28] sm:$0xff]
        %v442 = vld [vmem:[%s429 + $0x30] sm:$0xff]
        %v443 = vld [vmem:[%s429 + $0x38] sm:$0xff]
        %v444 = vld [vmem:[%s429 + $0x40] sm:$0xff]
        %v445 = vld [vmem:[%s429 + $0x48] sm:$0xff]
        %v446 = vld [vmem:[%s429 + $0x50] sm:$0xff]
        %v447 = vld [vmem:[%s429 + $0x58] sm:$0xff]
        %v448 = vld [vmem:[%s429 + $0x60] sm:$0xff]
        %v449 = vld [vmem:[%s429 + $0x68] sm:$0xff]
        %v450 = vld [vmem:[%s429 + $0x70] sm:$0xff]
        %v451 = vld [vmem:[%s429 + $0x78] sm:$0xff]
        %v452 = vld [vmem:[%s429 + $0x80] sm:$0xff]
        %v453 = vld [vmem:[%s429 + $0x88] sm:$0xff]
        %v454 = vld [vmem:[%s429 + $0x90] sm:$0xff]
        %v455 = vld [vmem:[%s429 + $0x98] sm:$0xff]
        %v456 = vld [vmem:[%s429 + $0xa0] sm:$0xff]
        %v457 = vld [vmem:[%s429 + $0xa8] sm:$0xff]
        %v458 = vld [vmem:[%s429 + $0xb0] sm:$0xff]
        %v459 = vld [vmem:[%s429 + $0xb8] sm:$0xff]
        %v460 = vld [vmem:[%s429 + $0xc0] sm:$0xff]
        %v461 = vld [vmem:[%s429 + $0xc8] sm:$0xff]
        %v462 = vld [vmem:[%s429 + $0xd0] sm:$0xff]
        %v463 = vld [vmem:[%s429 + $0xd8] sm:$0xff]
        %v464 = vld [vmem:[%s429 + $0xe0] sm:$0xff]
        %v465 = vld [vmem:[%s429 + $0xe8] sm:$0xff]
        %v466 = vld [vmem:[%s429 + $0xf0] sm:$0xff]
        %v467 = vld [vmem:[%s429 + $0xf8] sm:$0xff]
        %v468 = vld [vmem:[%s1] sm:$0xff]
        %v469 = vld [vmem:[%s1 + $0x8] sm:$0xff]
        %v470 = vld [vmem:[%s1 + $0x10] sm:$0xff]
        %v471 = vld [vmem:[%s1 + $0x18] sm:$0xff]
        %v472 = vld [vmem:[%s1 + $0x20] sm:$0xff]
        %v473 = vld [vmem:[%s1 + $0x28] sm:$0xff]
        %v474 = vld [vmem:[%s1 + $0x30] sm:$0xff]
        %v475 = vld [vmem:[%s1 + $0x38] sm:$0xff]
        %v476 = vld [vmem:[%s1 + $0x40] sm:$0xff]
        %v477 = vld [vmem:[%s1 + $0x48] sm:$0xff]
        %v478 = vld [vmem:[%s1 + $0x50] sm:$0xff]
        %v479 = vld [vmem:[%s1 + $0x58] sm:$0xff]
        %v480 = vld [vmem:[%s1 + $0x60] sm:$0xff]
        %v481 = vld [vmem:[%s1 + $0x68] sm:$0xff]
        %v482 = vld [vmem:[%s1 + $0x70] sm:$0xff]
        %v483 = vld [vmem:[%s1 + $0x78] sm:$0xff]
        %v484 = vld [vmem:[%s1 + $0x80] sm:$0xff]
        %v485 = vld [vmem:[%s1 + $0x88] sm:$0xff]
        %v486 = vld [vmem:[%s1 + $0x90] sm:$0xff]
        %v487 = vld [vmem:[%s1 + $0x98] sm:$0xff]
        %v488 = vld [vmem:[%s1 + $0xa0] sm:$0xff]
        %v489 = vld [vmem:[%s1 + $0xa8] sm:$0xff]
        %v490 = vld [vmem:[%s1 + $0xb0] sm:$0xff]
        %v491 = vld [vmem:[%s1 + $0xb8] sm:$0xff]
        %v492 = vld [vmem:[%s1 + $0xc0] sm:$0xff]
        %v493 = vld [vmem:[%s1 + $0xc8] sm:$0xff]
        %v494 = vld [vmem:[%s1 + $0xd0] sm:$0xff]
        %v495 = vld [vmem:[%s1 + $0xd8] sm:$0xff]
        %v496 = vld [vmem:[%s1 + $0xe0] sm:$0xff]
        %v497 = vld [vmem:[%s1 + $0xe8] sm:$0xff]
        %v498 = vld [vmem:[%s1 + $0xf0] sm:$0xff]
        %v499 = vld [vmem:[%s1 + $0xf8] sm:$0xff]
        %501 = vset.pattern.permute.xlu0 0
        %502 = vperm.xlu0 %501, %v468
        %v503 = vpop.permute.xlu0 %502
        %506 = vset.pattern.permute.xlu0 0
        %507 = vperm.xlu0 %506, %v469
        %v508 = vpop.permute.xlu0 %507
        %511 = vset.pattern.permute.xlu0 0
        %512 = vperm.xlu0 %511, %v470
        %v513 = vpop.permute.xlu0 %512
        %516 = vset.pattern.permute.xlu0 0
        %517 = vperm.xlu0 %516, %v471
        %v518 = vpop.permute.xlu0 %517
        %521 = vset.pattern.permute.xlu0 0
        %522 = vperm.xlu0 %521, %v472
        %v523 = vpop.permute.xlu0 %522
        %526 = vset.pattern.permute.xlu0 0
        %527 = vperm.xlu0 %526, %v473
        %v528 = vpop.permute.xlu0 %527
        %531 = vset.pattern.permute.xlu0 0
        %532 = vperm.xlu0 %531, %v474
        %v533 = vpop.permute.xlu0 %532
        %536 = vset.pattern.permute.xlu0 0
        %537 = vperm.xlu0 %536, %v475
        %v538 = vpop.permute.xlu0 %537
        %541 = vset.pattern.permute.xlu0 0
        %542 = vperm.xlu0 %541, %v476
        %v543 = vpop.permute.xlu0 %542
        %546 = vset.pattern.permute.xlu0 0
        %547 = vperm.xlu0 %546, %v477
        %v548 = vpop.permute.xlu0 %547
        %551 = vset.pattern.permute.xlu0 0
        %552 = vperm.xlu0 %551, %v478
        %v553 = vpop.permute.xlu0 %552
        %556 = vset.pattern.permute.xlu0 0
        %557 = vperm.xlu0 %556, %v479
        %v558 = vpop.permute.xlu0 %557
        %561 = vset.pattern.permute.xlu0 0
        %562 = vperm.xlu0 %561, %v480
        %v563 = vpop.permute.xlu0 %562
        %566 = vset.pattern.permute.xlu0 0
        %567 = vperm.xlu0 %566, %v481
        %v568 = vpop.permute.xlu0 %567
        %571 = vset.pattern.permute.xlu0 0
        %572 = vperm.xlu0 %571, %v482
        %v573 = vpop.permute.xlu0 %572
        %576 = vset.pattern.permute.xlu0 0
        %577 = vperm.xlu0 %576, %v483
        %v578 = vpop.permute.xlu0 %577
        %581 = vset.pattern.permute.xlu0 0
        %582 = vperm.xlu0 %581, %v484
        %v583 = vpop.permute.xlu0 %582
        %586 = vset.pattern.permute.xlu0 0
        %587 = vperm.xlu0 %586, %v485
        %v588 = vpop.permute.xlu0 %587
        %591 = vset.pattern.permute.xlu0 0
        %592 = vperm.xlu0 %591, %v486
        %v593 = vpop.permute.xlu0 %592
        %596 = vset.pattern.permute.xlu0 0
        %597 = vperm.xlu0 %596, %v487
        %v598 = vpop.permute.xlu0 %597
        %601 = vset.pattern.permute.xlu0 0
        %602 = vperm.xlu0 %601, %v488
        %v603 = vpop.permute.xlu0 %602
        %606 = vset.pattern.permute.xlu0 0
        %607 = vperm.xlu0 %606, %v489
        %v608 = vpop.permute.xlu0 %607
        %611 = vset.pattern.permute.xlu0 0
        %612 = vperm.xlu0 %611, %v490
        %v613 = vpop.permute.xlu0 %612
        %616 = vset.pattern.permute.xlu0 0
        %617 = vperm.xlu0 %616, %v491
        %v618 = vpop.permute.xlu0 %617
        %621 = vset.pattern.permute.xlu0 0
        %622 = vperm.xlu0 %621, %v492
        %v623 = vpop.permute.xlu0 %622
        %626 = vset.pattern.permute.xlu0 0
        %627 = vperm.xlu0 %626, %v493
        %v628 = vpop.permute.xlu0 %627
        %631 = vset.pattern.permute.xlu0 0
        %632 = vperm.xlu0 %631, %v494
        %v633 = vpop.permute.xlu0 %632
        %636 = vset.pattern.permute.xlu0 0
        %637 = vperm.xlu0 %636, %v495
        %v638 = vpop.permute.xlu0 %637
        %641 = vset.pattern.permute.xlu0 0
        %642 = vperm.xlu0 %641, %v496
        %v643 = vpop.permute.xlu0 %642
        %646 = vset.pattern.permute.xlu0 0
        %647 = vperm.xlu0 %646, %v497
        %v648 = vpop.permute.xlu0 %647
        %651 = vset.pattern.permute.xlu0 0
        %652 = vperm.xlu0 %651, %v498
        %v653 = vpop.permute.xlu0 %652
        %656 = vset.pattern.permute.xlu0 0
        %657 = vperm.xlu0 %656, %v499
        %v658 = vpop.permute.xlu0 %657
        %v660 = vmul.f32 %v436, %v503
        %v661 = vmul.f32 %v437, %v508
        %v662 = vmul.f32 %v438, %v513
        %v663 = vmul.f32 %v439, %v518
        %v664 = vmul.f32 %v440, %v523
        %v665 = vmul.f32 %v441, %v528
        %v666 = vmul.f32 %v442, %v533
        %v667 = vmul.f32 %v443, %v538
        %v668 = vmul.f32 %v444, %v543
        %v669 = vmul.f32 %v445, %v548
        %v670 = vmul.f32 %v446, %v553
        %v671 = vmul.f32 %v447, %v558
        %v672 = vmul.f32 %v448, %v563
        %v673 = vmul.f32 %v449, %v568
        %v674 = vmul.f32 %v450, %v573
        %v675 = vmul.f32 %v451, %v578
        %v676 = vmul.f32 %v452, %v583
        %v677 = vmul.f32 %v453, %v588
        %v678 = vmul.f32 %v454, %v593
        %v679 = vmul.f32 %v455, %v598
        %v680 = vmul.f32 %v456, %v603
        %v681 = vmul.f32 %v457, %v608
        %v682 = vmul.f32 %v458, %v613
        %v683 = vmul.f32 %v459, %v618
        %v684 = vmul.f32 %v460, %v623
        %v685 = vmul.f32 %v461, %v628
        %v686 = vmul.f32 %v462, %v633
        %v687 = vmul.f32 %v463, %v638
        %v688 = vmul.f32 %v464, %v643
        %v689 = vmul.f32 %v465, %v648
        %v690 = vmul.f32 %v466, %v653
        %v691 = vmul.f32 %v467, %v658
        %v692 = vld [vmem:[%s2] sm:$0xff]
        %v693 = vld [vmem:[%s2 + $0x8] sm:$0xff]
        %v694 = vld [vmem:[%s2 + $0x10] sm:$0xff]
        %v695 = vld [vmem:[%s2 + $0x18] sm:$0xff]
        %v696 = vld [vmem:[%s2 + $0x20] sm:$0xff]
        %v697 = vld [vmem:[%s2 + $0x28] sm:$0xff]
        %v698 = vld [vmem:[%s2 + $0x30] sm:$0xff]
        %v699 = vld [vmem:[%s2 + $0x38] sm:$0xff]
        %v700 = vld [vmem:[%s2 + $0x40] sm:$0xff]
        %v701 = vld [vmem:[%s2 + $0x48] sm:$0xff]
        %v702 = vld [vmem:[%s2 + $0x50] sm:$0xff]
        %v703 = vld [vmem:[%s2 + $0x58] sm:$0xff]
        %v704 = vld [vmem:[%s2 + $0x60] sm:$0xff]
        %v705 = vld [vmem:[%s2 + $0x68] sm:$0xff]
        %v706 = vld [vmem:[%s2 + $0x70] sm:$0xff]
        %v707 = vld [vmem:[%s2 + $0x78] sm:$0xff]
        %v708 = vld [vmem:[%s2 + $0x80] sm:$0xff]
        %v709 = vld [vmem:[%s2 + $0x88] sm:$0xff]
        %v710 = vld [vmem:[%s2 + $0x90] sm:$0xff]
        %v711 = vld [vmem:[%s2 + $0x98] sm:$0xff]
        %v712 = vld [vmem:[%s2 + $0xa0] sm:$0xff]
        %v713 = vld [vmem:[%s2 + $0xa8] sm:$0xff]
        %v714 = vld [vmem:[%s2 + $0xb0] sm:$0xff]
        %v715 = vld [vmem:[%s2 + $0xb8] sm:$0xff]
        %v716 = vld [vmem:[%s2 + $0xc0] sm:$0xff]
        %v717 = vld [vmem:[%s2 + $0xc8] sm:$0xff]
        %v718 = vld [vmem:[%s2 + $0xd0] sm:$0xff]
        %v719 = vld [vmem:[%s2 + $0xd8] sm:$0xff]
        %v720 = vld [vmem:[%s2 + $0xe0] sm:$0xff]
        %v721 = vld [vmem:[%s2 + $0xe8] sm:$0xff]
        %v722 = vld [vmem:[%s2 + $0xf0] sm:$0xff]
        %v723 = vld [vmem:[%s2 + $0xf8] sm:$0xff]
        %725 = vset.pattern.permute.xlu0 0
        %726 = vperm.xlu0 %725, %v692
        %v727 = vpop.permute.xlu0 %726
        %730 = vset.pattern.permute.xlu0 0
        %731 = vperm.xlu0 %730, %v693
        %v732 = vpop.permute.xlu0 %731
        %735 = vset.pattern.permute.xlu0 0
        %736 = vperm.xlu0 %735, %v694
        %v737 = vpop.permute.xlu0 %736
        %740 = vset.pattern.permute.xlu0 0
        %741 = vperm.xlu0 %740, %v695
        %v742 = vpop.permute.xlu0 %741
        %745 = vset.pattern.permute.xlu0 0
        %746 = vperm.xlu0 %745, %v696
        %v747 = vpop.permute.xlu0 %746
        %750 = vset.pattern.permute.xlu0 0
        %751 = vperm.xlu0 %750, %v697
        %v752 = vpop.permute.xlu0 %751
        %755 = vset.pattern.permute.xlu0 0
        %756 = vperm.xlu0 %755, %v698
        %v757 = vpop.permute.xlu0 %756
        %760 = vset.pattern.permute.xlu0 0
        %761 = vperm.xlu0 %760, %v699
        %v762 = vpop.permute.xlu0 %761
        %765 = vset.pattern.permute.xlu0 0
        %766 = vperm.xlu0 %765, %v700
        %v767 = vpop.permute.xlu0 %766
        %770 = vset.pattern.permute.xlu0 0
        %771 = vperm.xlu0 %770, %v701
        %v772 = vpop.permute.xlu0 %771
        %775 = vset.pattern.permute.xlu0 0
        %776 = vperm.xlu0 %775, %v702
        %v777 = vpop.permute.xlu0 %776
        %780 = vset.pattern.permute.xlu0 0
        %781 = vperm.xlu0 %780, %v703
        %v782 = vpop.permute.xlu0 %781
        %785 = vset.pattern.permute.xlu0 0
        %786 = vperm.xlu0 %785, %v704
        %v787 = vpop.permute.xlu0 %786
        %790 = vset.pattern.permute.xlu0 0
        %791 = vperm.xlu0 %790, %v705
        %v792 = vpop.permute.xlu0 %791
        %795 = vset.pattern.permute.xlu0 0
        %796 = vperm.xlu0 %795, %v706
        %v797 = vpop.permute.xlu0 %796
        %800 = vset.pattern.permute.xlu0 0
        %801 = vperm.xlu0 %800, %v707
        %v802 = vpop.permute.xlu0 %801
        %805 = vset.pattern.permute.xlu0 0
        %806 = vperm.xlu0 %805, %v708
        %v807 = vpop.permute.xlu0 %806
        %810 = vset.pattern.permute.xlu0 0
        %811 = vperm.xlu0 %810, %v709
        %v812 = vpop.permute.xlu0 %811
        %815 = vset.pattern.permute.xlu0 0
        %816 = vperm.xlu0 %815, %v710
        %v817 = vpop.permute.xlu0 %816
        %820 = vset.pattern.permute.xlu0 0
        %821 = vperm.xlu0 %820, %v711
        %v822 = vpop.permute.xlu0 %821
        %825 = vset.pattern.permute.xlu0 0
        %826 = vperm.xlu0 %825, %v712
        %v827 = vpop.permute.xlu0 %826
        %830 = vset.pattern.permute.xlu0 0
        %831 = vperm.xlu0 %830, %v713
        %v832 = vpop.permute.xlu0 %831
        %835 = vset.pattern.permute.xlu0 0
        %836 = vperm.xlu0 %835, %v714
        %v837 = vpop.permute.xlu0 %836
        %840 = vset.pattern.permute.xlu0 0
        %841 = vperm.xlu0 %840, %v715
        %v842 = vpop.permute.xlu0 %841
        %845 = vset.pattern.permute.xlu0 0
        %846 = vperm.xlu0 %845, %v716
        %v847 = vpop.permute.xlu0 %846
        %850 = vset.pattern.permute.xlu0 0
        %851 = vperm.xlu0 %850, %v717
        %v852 = vpop.permute.xlu0 %851
        %855 = vset.pattern.permute.xlu0 0
        %856 = vperm.xlu0 %855, %v718
        %v857 = vpop.permute.xlu0 %856
        %860 = vset.pattern.permute.xlu0 0
        %861 = vperm.xlu0 %860, %v719
        %v862 = vpop.permute.xlu0 %861
        %865 = vset.pattern.permute.xlu0 0
        %866 = vperm.xlu0 %865, %v720
        %v867 = vpop.permute.xlu0 %866
        %870 = vset.pattern.permute.xlu0 0
        %871 = vperm.xlu0 %870, %v721
        %v872 = vpop.permute.xlu0 %871
        %875 = vset.pattern.permute.xlu0 0
        %876 = vperm.xlu0 %875, %v722
        %v877 = vpop.permute.xlu0 %876
        %880 = vset.pattern.permute.xlu0 0
        %881 = vperm.xlu0 %880, %v723
        %v882 = vpop.permute.xlu0 %881
        %v884 = vadd.f32 %v660, %v727
        %v885 = vadd.f32 %v661, %v732
        %v886 = vadd.f32 %v662, %v737
        %v887 = vadd.f32 %v663, %v742
        %v888 = vadd.f32 %v664, %v747
        %v889 = vadd.f32 %v665, %v752
        %v890 = vadd.f32 %v666, %v757
        %v891 = vadd.f32 %v667, %v762
        %v892 = vadd.f32 %v668, %v767
        %v893 = vadd.f32 %v669, %v772
        %v894 = vadd.f32 %v670, %v777
        %v895 = vadd.f32 %v671, %v782
        %v896 = vadd.f32 %v672, %v787
        %v897 = vadd.f32 %v673, %v792
        %v898 = vadd.f32 %v674, %v797
        %v899 = vadd.f32 %v675, %v802
        %v900 = vadd.f32 %v676, %v807
        %v901 = vadd.f32 %v677, %v812
        %v902 = vadd.f32 %v678, %v817
        %v903 = vadd.f32 %v679, %v822
        %v904 = vadd.f32 %v680, %v827
        %v905 = vadd.f32 %v681, %v832
        %v906 = vadd.f32 %v682, %v837
        %v907 = vadd.f32 %v683, %v842
        %v908 = vadd.f32 %v684, %v847
        %v909 = vadd.f32 %v685, %v852
        %v910 = vadd.f32 %v686, %v857
        %v911 = vadd.f32 %v687, %v862
        %v912 = vadd.f32 %v688, %v867
        %v913 = vadd.f32 %v689, %v872
        %v914 = vadd.f32 %v690, %v877
        %v915 = vadd.f32 %v691, %v882
        %v916 = vpack.c.bf16 %v885, %v884
        %v917 = vpack.c.bf16 %v887, %v886
        %v918 = vpack.c.bf16 %v889, %v888
        %v919 = vpack.c.bf16 %v891, %v890
        %v920 = vpack.c.bf16 %v893, %v892
        %v921 = vpack.c.bf16 %v895, %v894
        %v922 = vpack.c.bf16 %v897, %v896
        %v923 = vpack.c.bf16 %v899, %v898
        %v924 = vpack.c.bf16 %v901, %v900
        %v925 = vpack.c.bf16 %v903, %v902
        %v926 = vpack.c.bf16 %v905, %v904
        %v927 = vpack.c.bf16 %v907, %v906
        %v928 = vpack.c.bf16 %v909, %v908
        %v929 = vpack.c.bf16 %v911, %v910
        %v930 = vpack.c.bf16 %v913, %v912
        %v931 = vpack.c.bf16 %v915, %v914
        %v932 = vld [vmem:[#allocation5] sm:$0xff]
        %v933 = vld [vmem:[#allocation5 + $0x8] sm:$0xf]
        %v934 = vld [vmem:[#allocation5 + $0xc] sm:$0xff]
        %v935 = vld [vmem:[#allocation5 + $0x14] sm:$0xf]
        %v936 = vld [vmem:[#allocation5 + $0x18] sm:$0xff]
        %v937 = vld [vmem:[#allocation5 + $0x20] sm:$0xf]
        %v938 = vld [vmem:[#allocation5 + $0x24] sm:$0xff]
        %v939 = vld [vmem:[#allocation5 + $0x2c] sm:$0xf]
        %v940 = vld [vmem:[#allocation5 + $0x30] sm:$0xff]
        %v941 = vld [vmem:[#allocation5 + $0x38] sm:$0xf]
        %v942 = vld [vmem:[#allocation5 + $0x3c] sm:$0xff]
        %v943 = vld [vmem:[#allocation5 + $0x44] sm:$0xf]
        %v944 = vld [vmem:[#allocation5 + $0x48] sm:$0xff]
        %v945 = vld [vmem:[#allocation5 + $0x50] sm:$0xf]
        %v946 = vld [vmem:[#allocation5 + $0x54] sm:$0xff]
        %v947 = vld [vmem:[#allocation5 + $0x5c] sm:$0xf]
        %v964 = vunpack.c.l.b16 %v932
        %v965 = vunpack.c.h.b16 %v932
        %v966 = vunpack.c.l.b16 %v933
        %v967 = vunpack.c.l.b16 %v934
        %v968 = vunpack.c.h.b16 %v934
        %v969 = vunpack.c.l.b16 %v935
        %v970 = vunpack.c.l.b16 %v936
        %v971 = vunpack.c.h.b16 %v936
        %v972 = vunpack.c.l.b16 %v937
        %v973 = vunpack.c.l.b16 %v938
        %v974 = vunpack.c.h.b16 %v938
        %v975 = vunpack.c.l.b16 %v939
        %v976 = vunpack.c.l.b16 %v940
        %v977 = vunpack.c.h.b16 %v940
        %v978 = vunpack.c.l.b16 %v941
        %v979 = vunpack.c.l.b16 %v942
        %v980 = vunpack.c.h.b16 %v942
        %v981 = vunpack.c.l.b16 %v943
        %v982 = vunpack.c.l.b16 %v944
        %v983 = vunpack.c.h.b16 %v944
        %v984 = vunpack.c.l.b16 %v945
        %v985 = vunpack.c.l.b16 %v946
        %v986 = vunpack.c.h.b16 %v946
        %v987 = vunpack.c.l.b16 %v947
        %v988 = vpack.c.b16 %v967, %v964
        %v989 = vpack.c.b16 %v968, %v965
        %v990 = vpack.c.b16 %v969, %v966
        %v991 = vpack.c.b16 %v973, %v970
        %v992 = vpack.c.b16 %v974, %v971
        %v993 = vpack.c.b16 %v975, %v972
        %v994 = vpack.c.b16 %v979, %v976
        %v995 = vpack.c.b16 %v980, %v977
        %v996 = vpack.c.b16 %v981, %v978
        %v997 = vpack.c.b16 %v985, %v982
        %v998 = vpack.c.b16 %v986, %v983
        %v999 = vpack.c.b16 %v987, %v984
        %vm1012 = vcmask 523264
        %v1014 = vsel %vm1012, %v916, 0
        %v1017 = vsel %vm1012, %v917, 0
        %v1020 = vsel %vm1012, %v918, 0
        %v1023 = vsel %vm1012, %v919, 0
        %v1026 = vsel %vm1012, %v920, 0
        %v1029 = vsel %vm1012, %v921, 0
        %v1032 = vsel %vm1012, %v922, 0
        %v1035 = vsel %vm1012, %v923, 0
        %v1038 = vsel %vm1012, %v924, 0
        %v1041 = vsel %vm1012, %v925, 0
        %v1044 = vsel %vm1012, %v926, 0
        %v1047 = vsel %vm1012, %v927, 0
        %v1050 = vsel %vm1012, %v928, 0
        %v1053 = vsel %vm1012, %v929, 0
        %v1056 = vsel %vm1012, %v930, 0
        %v1059 = vsel %vm1012, %v931, 0
        %1061 = vmatpush.bf16.msra.mxu0 0
        %1062 = vmatpush.bf16.msra.mxu0 0
        %1063 = vmatpush.bf16.msra.mxu0 0
        %1064 = vmatpush.bf16.msra.mxu0 0
        %1065 = vmatpush.bf16.msra.mxu0 %v997
        %1066 = vmatpush.bf16.msra.mxu0 %v994
        %1067 = vmatpush.bf16.msra.mxu0 %v991
        %1068 = vmatpush.bf16.msra.mxu0 %v988
        %1069 = vmatmul.bf16.gmra.mxu0 %v1014
        %v1070 = vpop.f32.mrf.mxu0
        %v1071 = vadd.f32 0.0, %v1070
        %v1072 = vpop.f32.mrf.mxu0
        %v1073 = vadd.f32 0.0, %v1072
        %1074 = vmatmul.bf16.gmra.mxu0 %v1017
        %v1075 = vpop.f32.mrf.mxu0
        %v1076 = vadd.f32 0.0, %v1075
        %v1077 = vpop.f32.mrf.mxu0
        %v1078 = vadd.f32 0.0, %v1077
        %1079 = vmatmul.bf16.gmra.mxu0 %v1020
        %v1080 = vpop.f32.mrf.mxu0
        %v1081 = vadd.f32 0.0, %v1080
        %v1082 = vpop.f32.mrf.mxu0
        %v1083 = vadd.f32 0.0, %v1082
        %1084 = vmatmul.bf16.gmra.mxu0 %v1023
        %v1085 = vpop.f32.mrf.mxu0
        %v1086 = vadd.f32 0.0, %v1085
        %v1087 = vpop.f32.mrf.mxu0
        %v1088 = vadd.f32 0.0, %v1087
        %1089 = vmatmul.bf16.gmra.mxu0 %v1026
        %v1090 = vpop.f32.mrf.mxu0
        %v1091 = vadd.f32 0.0, %v1090
        %v1092 = vpop.f32.mrf.mxu0
        %v1093 = vadd.f32 0.0, %v1092
        %1094 = vmatmul.bf16.gmra.mxu0 %v1029
        %v1095 = vpop.f32.mrf.mxu0
        %v1096 = vadd.f32 0.0, %v1095
        %v1097 = vpop.f32.mrf.mxu0
        %v1098 = vadd.f32 0.0, %v1097
        %1099 = vmatmul.bf16.gmra.mxu0 %v1032
        %v1100 = vpop.f32.mrf.mxu0
        %v1101 = vadd.f32 0.0, %v1100
        %v1102 = vpop.f32.mrf.mxu0
        %v1103 = vadd.f32 0.0, %v1102
        %1104 = vmatmul.bf16.gmra.mxu0 %v1035
        %v1105 = vpop.f32.mrf.mxu0
        %v1106 = vadd.f32 0.0, %v1105
        %v1107 = vpop.f32.mrf.mxu0
        %v1108 = vadd.f32 0.0, %v1107
        %1109 = vmatmul.bf16.gmra.mxu0 %v1038
        %v1110 = vpop.f32.mrf.mxu0
        %v1111 = vadd.f32 0.0, %v1110
        %v1112 = vpop.f32.mrf.mxu0
        %v1113 = vadd.f32 0.0, %v1112
        %1114 = vmatmul.bf16.gmra.mxu0 %v1041
        %v1115 = vpop.f32.mrf.mxu0
        %v1116 = vadd.f32 0.0, %v1115
        %v1117 = vpop.f32.mrf.mxu0
        %v1118 = vadd.f32 0.0, %v1117
        %1119 = vmatmul.bf16.gmra.mxu0 %v1044
        %v1120 = vpop.f32.mrf.mxu0
        %v1121 = vadd.f32 0.0, %v1120
        %v1122 = vpop.f32.mrf.mxu0
        %v1123 = vadd.f32 0.0, %v1122
        %1124 = vmatmul.bf16.gmra.mxu0 %v1047
        %v1125 = vpop.f32.mrf.mxu0
        %v1126 = vadd.f32 0.0, %v1125
        %v1127 = vpop.f32.mrf.mxu0
        %v1128 = vadd.f32 0.0, %v1127
        %1129 = vmatmul.bf16.gmra.mxu0 %v1050
        %v1130 = vpop.f32.mrf.mxu0
        %v1131 = vadd.f32 0.0, %v1130
        %v1132 = vpop.f32.mrf.mxu0
        %v1133 = vadd.f32 0.0, %v1132
        %1134 = vmatmul.bf16.gmra.mxu0 %v1053
        %v1135 = vpop.f32.mrf.mxu0
        %v1136 = vadd.f32 0.0, %v1135
        %v1137 = vpop.f32.mrf.mxu0
        %v1138 = vadd.f32 0.0, %v1137
        %1139 = vmatmul.bf16.gmra.mxu0 %v1056
        %v1140 = vpop.f32.mrf.mxu0
        %v1141 = vadd.f32 0.0, %v1140
        %v1142 = vpop.f32.mrf.mxu0
        %v1143 = vadd.f32 0.0, %v1142
        %1144 = vmatmul.bf16.gmra.mxu0 %v1059
        %v1145 = vpop.f32.mrf.mxu0
        %v1146 = vadd.f32 0.0, %v1145
        %v1147 = vpop.f32.mrf.mxu0
        %v1148 = vadd.f32 0.0, %v1147
        %1149 = vdwg.mxu0
        %1150 = vmatpush.bf16.msra.mxu0 0
        %1151 = vmatpush.bf16.msra.mxu0 0
        %1152 = vmatpush.bf16.msra.mxu0 0
        %1153 = vmatpush.bf16.msra.mxu0 0
        %1154 = vmatpush.bf16.msra.mxu0 %v998
        %1155 = vmatpush.bf16.msra.mxu0 %v995
        %1156 = vmatpush.bf16.msra.mxu0 %v992
        %1157 = vmatpush.bf16.msra.mxu0 %v989
        %1158 = vmatmul.bf16.gmra.mxu0 %v1014
        %v1159 = vpop.f32.mrf.mxu0
        %v1160 = vadd.f32 0.0, %v1159
        %v1161 = vpop.f32.mrf.mxu0
        %v1162 = vadd.f32 0.0, %v1161
        %1163 = vmatmul.bf16.gmra.mxu0 %v1017
        %v1164 = vpop.f32.mrf.mxu0
        %v1165 = vadd.f32 0.0, %v1164
        %v1166 = vpop.f32.mrf.mxu0
        %v1167 = vadd.f32 0.0, %v1166
        %1168 = vmatmul.bf16.gmra.mxu0 %v1020
        %v1169 = vpop.f32.mrf.mxu0
        %v1170 = vadd.f32 0.0, %v1169
        %v1171 = vpop.f32.mrf.mxu0
        %v1172 = vadd.f32 0.0, %v1171
        %1173 = vmatmul.bf16.gmra.mxu0 %v1023
        %v1174 = vpop.f32.mrf.mxu0
        %v1175 = vadd.f32 0.0, %v1174
        %v1176 = vpop.f32.mrf.mxu0
        %v1177 = vadd.f32 0.0, %v1176
        %1178 = vmatmul.bf16.gmra.mxu0 %v1026
        %v1179 = vpop.f32.mrf.mxu0
        %v1180 = vadd.f32 0.0, %v1179
        %v1181 = vpop.f32.mrf.mxu0
        %v1182 = vadd.f32 0.0, %v1181
        %1183 = vmatmul.bf16.gmra.mxu0 %v1029
        %v1184 = vpop.f32.mrf.mxu0
        %v1185 = vadd.f32 0.0, %v1184
        %v1186 = vpop.f32.mrf.mxu0
        %v1187 = vadd.f32 0.0, %v1186
        %1188 = vmatmul.bf16.gmra.mxu0 %v1032
        %v1189 = vpop.f32.mrf.mxu0
        %v1190 = vadd.f32 0.0, %v1189
        %v1191 = vpop.f32.mrf.mxu0
        %v1192 = vadd.f32 0.0, %v1191
        %1193 = vmatmul.bf16.gmra.mxu0 %v1035
        %v1194 = vpop.f32.mrf.mxu0
        %v1195 = vadd.f32 0.0, %v1194
        %v1196 = vpop.f32.mrf.mxu0
        %v1197 = vadd.f32 0.0, %v1196
        %1198 = vmatmul.bf16.gmra.mxu0 %v1038
        %v1199 = vpop.f32.mrf.mxu0
        %v1200 = vadd.f32 0.0, %v1199
        %v1201 = vpop.f32.mrf.mxu0
        %v1202 = vadd.f32 0.0, %v1201
        %1203 = vmatmul.bf16.gmra.mxu0 %v1041
        %v1204 = vpop.f32.mrf.mxu0
        %v1205 = vadd.f32 0.0, %v1204
        %v1206 = vpop.f32.mrf.mxu0
        %v1207 = vadd.f32 0.0, %v1206
        %1208 = vmatmul.bf16.gmra.mxu0 %v1044
        %v1209 = vpop.f32.mrf.mxu0
        %v1210 = vadd.f32 0.0, %v1209
        %v1211 = vpop.f32.mrf.mxu0
        %v1212 = vadd.f32 0.0, %v1211
        %1213 = vmatmul.bf16.gmra.mxu0 %v1047
        %v1214 = vpop.f32.mrf.mxu0
        %v1215 = vadd.f32 0.0, %v1214
        %v1216 = vpop.f32.mrf.mxu0
        %v1217 = vadd.f32 0.0, %v1216
        %1218 = vmatmul.bf16.gmra.mxu0 %v1050
        %v1219 = vpop.f32.mrf.mxu0
        %v1220 = vadd.f32 0.0, %v1219
        %v1221 = vpop.f32.mrf.mxu0
        %v1222 = vadd.f32 0.0, %v1221
        %1223 = vmatmul.bf16.gmra.mxu0 %v1053
        %v1224 = vpop.f32.mrf.mxu0
        %v1225 = vadd.f32 0.0, %v1224
        %v1226 = vpop.f32.mrf.mxu0
        %v1227 = vadd.f32 0.0, %v1226
        %1228 = vmatmul.bf16.gmra.mxu0 %v1056
        %v1229 = vpop.f32.mrf.mxu0
        %v1230 = vadd.f32 0.0, %v1229
        %v1231 = vpop.f32.mrf.mxu0
        %v1232 = vadd.f32 0.0, %v1231
        %1233 = vmatmul.bf16.gmra.mxu0 %v1059
        %v1234 = vpop.f32.mrf.mxu0
        %v1235 = vadd.f32 0.0, %v1234
        %v1236 = vpop.f32.mrf.mxu0
        %v1237 = vadd.f32 0.0, %v1236
        %1238 = vdwg.mxu0
        %1239 = vmatpush.bf16.msra.mxu0 0
        %1240 = vmatpush.bf16.msra.mxu0 0
        %1241 = vmatpush.bf16.msra.mxu0 0
        %1242 = vmatpush.bf16.msra.mxu0 0
        %1243 = vmatpush.bf16.msra.mxu0 %v999
        %1244 = vmatpush.bf16.msra.mxu0 %v996
        %1245 = vmatpush.bf16.msra.mxu0 %v993
        %1246 = vmatpush.bf16.msra.mxu0 %v990
        %1247 = vmatmul.bf16.gmra.mxu0 %v1014
        %v1248 = vpop.f32.mrf.mxu0
        %v1249 = vadd.f32 0.0, %v1248
        %v1250 = vpop.f32.mrf.mxu0
        %v1251 = vadd.f32 0.0, %v1250
        %1252 = vmatmul.bf16.gmra.mxu0 %v1017
        %v1253 = vpop.f32.mrf.mxu0
        %v1254 = vadd.f32 0.0, %v1253
        %v1255 = vpop.f32.mrf.mxu0
        %v1256 = vadd.f32 0.0, %v1255
        %1257 = vmatmul.bf16.gmra.mxu0 %v1020
        %v1258 = vpop.f32.mrf.mxu0
        %v1259 = vadd.f32 0.0, %v1258
        %v1260 = vpop.f32.mrf.mxu0
        %v1261 = vadd.f32 0.0, %v1260
        %1262 = vmatmul.bf16.gmra.mxu0 %v1023
        %v1263 = vpop.f32.mrf.mxu0
        %v1264 = vadd.f32 0.0, %v1263
        %v1265 = vpop.f32.mrf.mxu0
        %v1266 = vadd.f32 0.0, %v1265
        %1267 = vmatmul.bf16.gmra.mxu0 %v1026
        %v1268 = vpop.f32.mrf.mxu0
        %v1269 = vadd.f32 0.0, %v1268
        %v1270 = vpop.f32.mrf.mxu0
        %v1271 = vadd.f32 0.0, %v1270
        %1272 = vmatmul.bf16.gmra.mxu0 %v1029
        %v1273 = vpop.f32.mrf.mxu0
        %v1274 = vadd.f32 0.0, %v1273
        %v1275 = vpop.f32.mrf.mxu0
        %v1276 = vadd.f32 0.0, %v1275
        %1277 = vmatmul.bf16.gmra.mxu0 %v1032
        %v1278 = vpop.f32.mrf.mxu0
        %v1279 = vadd.f32 0.0, %v1278
        %v1280 = vpop.f32.mrf.mxu0
        %v1281 = vadd.f32 0.0, %v1280
        %1282 = vmatmul.bf16.gmra.mxu0 %v1035
        %v1283 = vpop.f32.mrf.mxu0
        %v1284 = vadd.f32 0.0, %v1283
        %v1285 = vpop.f32.mrf.mxu0
        %v1286 = vadd.f32 0.0, %v1285
        %1287 = vmatmul.bf16.gmra.mxu0 %v1038
        %v1288 = vpop.f32.mrf.mxu0
        %v1289 = vadd.f32 0.0, %v1288
        %v1290 = vpop.f32.mrf.mxu0
        %v1291 = vadd.f32 0.0, %v1290
        %1292 = vmatmul.bf16.gmra.mxu0 %v1041
        %v1293 = vpop.f32.mrf.mxu0
        %v1294 = vadd.f32 0.0, %v1293
        %v1295 = vpop.f32.mrf.mxu0
        %v1296 = vadd.f32 0.0, %v1295
        %1297 = vmatmul.bf16.gmra.mxu0 %v1044
        %v1298 = vpop.f32.mrf.mxu0
        %v1299 = vadd.f32 0.0, %v1298
        %v1300 = vpop.f32.mrf.mxu0
        %v1301 = vadd.f32 0.0, %v1300
        %1302 = vmatmul.bf16.gmra.mxu0 %v1047
        %v1303 = vpop.f32.mrf.mxu0
        %v1304 = vadd.f32 0.0, %v1303
        %v1305 = vpop.f32.mrf.mxu0
        %v1306 = vadd.f32 0.0, %v1305
        %1307 = vmatmul.bf16.gmra.mxu0 %v1050
        %v1308 = vpop.f32.mrf.mxu0
        %v1309 = vadd.f32 0.0, %v1308
        %v1310 = vpop.f32.mrf.mxu0
        %v1311 = vadd.f32 0.0, %v1310
        %1312 = vmatmul.bf16.gmra.mxu0 %v1053
        %v1313 = vpop.f32.mrf.mxu0
        %v1314 = vadd.f32 0.0, %v1313
        %v1315 = vpop.f32.mrf.mxu0
        %v1316 = vadd.f32 0.0, %v1315
        %1317 = vmatmul.bf16.gmra.mxu0 %v1056
        %v1318 = vpop.f32.mrf.mxu0
        %v1319 = vadd.f32 0.0, %v1318
        %v1320 = vpop.f32.mrf.mxu0
        %v1321 = vadd.f32 0.0, %v1320
        %1322 = vmatmul.bf16.gmra.mxu0 %v1059
        %v1323 = vpop.f32.mrf.mxu0
        %v1324 = vadd.f32 0.0, %v1323
        %v1325 = vpop.f32.mrf.mxu0
        %v1326 = vadd.f32 0.0, %v1325
        %1327 = vdwg.mxu0
        %v1328 = vpack.c.bf16 %v1160, %v1071
        %v1329 = vpack.c.bf16 %v1249, %v1249
        %v1330 = vpack.c.bf16 %v1162, %v1073
        %v1331 = vpack.c.bf16 %v1251, %v1251
        %v1332 = vpack.c.bf16 %v1165, %v1076
        %v1333 = vpack.c.bf16 %v1254, %v1254
        %v1334 = vpack.c.bf16 %v1167, %v1078
        %v1335 = vpack.c.bf16 %v1256, %v1256
        %v1336 = vpack.c.bf16 %v1170, %v1081
        %v1337 = vpack.c.bf16 %v1259, %v1259
        %v1338 = vpack.c.bf16 %v1172, %v1083
        %v1339 = vpack.c.bf16 %v1261, %v1261
        %v1340 = vpack.c.bf16 %v1175, %v1086
        %v1341 = vpack.c.bf16 %v1264, %v1264
        %v1342 = vpack.c.bf16 %v1177, %v1088
        %v1343 = vpack.c.bf16 %v1266, %v1266
        %v1344 = vpack.c.bf16 %v1180, %v1091
        %v1345 = vpack.c.bf16 %v1269, %v1269
        %v1346 = vpack.c.bf16 %v1182, %v1093
        %v1347 = vpack.c.bf16 %v1271, %v1271
        %v1348 = vpack.c.bf16 %v1185, %v1096
        %v1349 = vpack.c.bf16 %v1274, %v1274
        %v1350 = vpack.c.bf16 %v1187, %v1098
        %v1351 = vpack.c.bf16 %v1276, %v1276
        %v1352 = vpack.c.bf16 %v1190, %v1101
        %v1353 = vpack.c.bf16 %v1279, %v1279
        %v1354 = vpack.c.bf16 %v1192, %v1103
        %v1355 = vpack.c.bf16 %v1281, %v1281
        %v1356 = vpack.c.bf16 %v1195, %v1106
        %v1357 = vpack.c.bf16 %v1284, %v1284
        %v1358 = vpack.c.bf16 %v1197, %v1108
        %v1359 = vpack.c.bf16 %v1286, %v1286
        %v1360 = vpack.c.bf16 %v1200, %v1111
        %v1361 = vpack.c.bf16 %v1289, %v1289
        %v1362 = vpack.c.bf16 %v1202, %v1113
        %v1363 = vpack.c.bf16 %v1291, %v1291
        %v1364 = vpack.c.bf16 %v1205, %v1116
        %v1365 = vpack.c.bf16 %v1294, %v1294
        %v1366 = vpack.c.bf16 %v1207, %v1118
        %v1367 = vpack.c.bf16 %v1296, %v1296
        %v1368 = vpack.c.bf16 %v1210, %v1121
        %v1369 = vpack.c.bf16 %v1299, %v1299
        %v1370 = vpack.c.bf16 %v1212, %v1123
        %v1371 = vpack.c.bf16 %v1301, %v1301
        %v1372 = vpack.c.bf16 %v1215, %v1126
        %v1373 = vpack.c.bf16 %v1304, %v1304
        %v1374 = vpack.c.bf16 %v1217, %v1128
        %v1375 = vpack.c.bf16 %v1306, %v1306
        %v1376 = vpack.c.bf16 %v1220, %v1131
        %v1377 = vpack.c.bf16 %v1309, %v1309
        %v1378 = vpack.c.bf16 %v1222, %v1133
        %v1379 = vpack.c.bf16 %v1311, %v1311
        %v1380 = vpack.c.bf16 %v1225, %v1136
        %v1381 = vpack.c.bf16 %v1314, %v1314
        %v1382 = vpack.c.bf16 %v1227, %v1138
        %v1383 = vpack.c.bf16 %v1316, %v1316
        %v1384 = vpack.c.bf16 %v1230, %v1141
        %v1385 = vpack.c.bf16 %v1319, %v1319
        %v1386 = vpack.c.bf16 %v1232, %v1143
        %v1387 = vpack.c.bf16 %v1321, %v1321
        %v1388 = vpack.c.bf16 %v1235, %v1146
        %v1389 = vpack.c.bf16 %v1324, %v1324
        %v1390 = vpack.c.bf16 %v1237, %v1148
        %v1391 = vpack.c.bf16 %v1326, %v1326
        %1392 = vst [vmem:[#allocation2] sm:$0xff] %v1328
        %vm1393 = vcmask 584704
        %1394 = vst.msk [vmem:[#allocation2 + $0x8] sm:$0xf] %vm1393, %v1329
        %1395 = vst [vmem:[#allocation2 + $0xc] sm:$0xff] %v1330
        %1396 = vst.msk [vmem:[#allocation2 + $0x14] sm:$0xf] %vm1393, %v1331
        %1397 = vst [vmem:[#allocation2 + $0x18] sm:$0xff] %v1332
        %1398 = vst.msk [vmem:[#allocation2 + $0x20] sm:$0xf] %vm1393, %v1333
        %1399 = vst [vmem:[#allocation2 + $0x24] sm:$0xff] %v1334
        %1400 = vst.msk [vmem:[#allocation2 + $0x2c] sm:$0xf] %vm1393, %v1335
        %1401 = vst [vmem:[#allocation2 + $0x30] sm:$0xff] %v1336
        %1402 = vst.msk [vmem:[#allocation2 + $0x38] sm:$0xf] %vm1393, %v1337
        %1403 = vst [vmem:[#allocation2 + $0x3c] sm:$0xff] %v1338
        %1404 = vst.msk [vmem:[#allocation2 + $0x44] sm:$0xf] %vm1393, %v1339
        %1405 = vst [vmem:[#allocation2 + $0x48] sm:$0xff] %v1340
        %1406 = vst.msk [vmem:[#allocation2 + $0x50] sm:$0xf] %vm1393, %v1341
        %1407 = vst [vmem:[#allocation2 + $0x54] sm:$0xff] %v1342
        %1408 = vst.msk [vmem:[#allocation2 + $0x5c] sm:$0xf] %vm1393, %v1343
        %1409 = vst [vmem:[#allocation2 + $0x60] sm:$0xff] %v1344
        %1410 = vst.msk [vmem:[#allocation2 + $0x68] sm:$0xf] %vm1393, %v1345
        %1411 = vst [vmem:[#allocation2 + $0x6c] sm:$0xff] %v1346
        %1412 = vst.msk [vmem:[#allocation2 + $0x74] sm:$0xf] %vm1393, %v1347
        %1413 = vst [vmem:[#allocation2 + $0x78] sm:$0xff] %v1348
        %1414 = vst.msk [vmem:[#allocation2 + $0x80] sm:$0xf] %vm1393, %v1349
        %1415 = vst [vmem:[#allocation2 + $0x84] sm:$0xff] %v1350
        %1416 = vst.msk [vmem:[#allocation2 + $0x8c] sm:$0xf] %vm1393, %v1351
        %1417 = vst [vmem:[#allocation2 + $0x90] sm:$0xff] %v1352
        %1418 = vst.msk [vmem:[#allocation2 + $0x98] sm:$0xf] %vm1393, %v1353
        %1419 = vst [vmem:[#allocation2 + $0x9c] sm:$0xff] %v1354
        %1420 = vst.msk [vmem:[#allocation2 + $0xa4] sm:$0xf] %vm1393, %v1355
        %1421 = vst [vmem:[#allocation2 + $0xa8] sm:$0xff] %v1356
        %1422 = vst.msk [vmem:[#allocation2 + $0xb0] sm:$0xf] %vm1393, %v1357
        %1423 = vst [vmem:[#allocation2 + $0xb4] sm:$0xff] %v1358
        %1424 = vst.msk [vmem:[#allocation2 + $0xbc] sm:$0xf] %vm1393, %v1359
        %1425 = vst [vmem:[#allocation2 + $0xc0] sm:$0xff] %v1360
        %1426 = vst.msk [vmem:[#allocation2 + $0xc8] sm:$0xf] %vm1393, %v1361
        %1427 = vst [vmem:[#allocation2 + $0xcc] sm:$0xff] %v1362
        %1428 = vst.msk [vmem:[#allocation2 + $0xd4] sm:$0xf] %vm1393, %v1363
        %1429 = vst [vmem:[#allocation2 + $0xd8] sm:$0xff] %v1364
        %1430 = vst.msk [vmem:[#allocation2 + $0xe0] sm:$0xf] %vm1393, %v1365
        %1431 = vst [vmem:[#allocation2 + $0xe4] sm:$0xff] %v1366
        %1432 = vst.msk [vmem:[#allocation2 + $0xec] sm:$0xf] %vm1393, %v1367
        %1433 = vst [vmem:[#allocation2 + $0xf0] sm:$0xff] %v1368
        %1434 = vst.msk [vmem:[#allocation2 + $0xf8] sm:$0xf] %vm1393, %v1369
        %1435 = vst [vmem:[#allocation2 + $0xfc] sm:$0xff] %v1370
        %1436 = vst.msk [vmem:[#allocation2 + $0x104] sm:$0xf] %vm1393, %v1371
        %1437 = vst [vmem:[#allocation2 + $0x108] sm:$0xff] %v1372
        %1438 = vst.msk [vmem:[#allocation2 + $0x110] sm:$0xf] %vm1393, %v1373
        %1439 = vst [vmem:[#allocation2 + $0x114] sm:$0xff] %v1374
        %1440 = vst.msk [vmem:[#allocation2 + $0x11c] sm:$0xf] %vm1393, %v1375
        %1441 = vst [vmem:[#allocation2 + $0x120] sm:$0xff] %v1376
        %1442 = vst.msk [vmem:[#allocation2 + $0x128] sm:$0xf] %vm1393, %v1377
        %1443 = vst [vmem:[#allocation2 + $0x12c] sm:$0xff] %v1378
        %1444 = vst.msk [vmem:[#allocation2 + $0x134] sm:$0xf] %vm1393, %v1379
        %1445 = vst [vmem:[#allocation2 + $0x138] sm:$0xff] %v1380
        %1446 = vst.msk [vmem:[#allocation2 + $0x140] sm:$0xf] %vm1393, %v1381
        %1447 = vst [vmem:[#allocation2 + $0x144] sm:$0xff] %v1382
        %1448 = vst.msk [vmem:[#allocation2 + $0x14c] sm:$0xf] %vm1393, %v1383
        %1449 = vst [vmem:[#allocation2 + $0x150] sm:$0xff] %v1384
        %1450 = vst.msk [vmem:[#allocation2 + $0x158] sm:$0xf] %vm1393, %v1385
        %1451 = vst [vmem:[#allocation2 + $0x15c] sm:$0xff] %v1386
        %1452 = vst.msk [vmem:[#allocation2 + $0x164] sm:$0xf] %vm1393, %v1387
        %1453 = vst [vmem:[#allocation2 + $0x168] sm:$0xff] %v1388
        %1454 = vst.msk [vmem:[#allocation2 + $0x170] sm:$0xf] %vm1393, %v1389
        %1455 = vst [vmem:[#allocation2 + $0x174] sm:$0xff] %v1390
        %1456 = vst.msk [vmem:[#allocation2 + $0x17c] sm:$0xf] %vm1393, %v1391
        %v1457 = vld [vmem:[#allocation7] sm:$0xff]
        %v1458 = vld [vmem:[#allocation7 + $0x8] sm:$0xff]
        %v1459 = vld [vmem:[#allocation7 + $0x10] sm:$0xff]
        %v1460 = vld [vmem:[#allocation7 + $0x18] sm:$0xff]
        %v1461 = vld [vmem:[#allocation2] sm:$0xff]
        %v1462 = vld [vmem:[#allocation2 + $0x8] sm:$0xf]
        %v1463 = vld [vmem:[#allocation2 + $0xc] sm:$0xff]
        %v1464 = vld [vmem:[#allocation2 + $0x14] sm:$0xf]
        %v1465 = vld [vmem:[#allocation2 + $0x18] sm:$0xff]
        %v1466 = vld [vmem:[#allocation2 + $0x20] sm:$0xf]
        %v1467 = vld [vmem:[#allocation2 + $0x24] sm:$0xff]
        %v1468 = vld [vmem:[#allocation2 + $0x2c] sm:$0xf]
        %v1469 = vld [vmem:[#allocation2 + $0x30] sm:$0xff]
        %v1470 = vld [vmem:[#allocation2 + $0x38] sm:$0xf]
        %v1471 = vld [vmem:[#allocation2 + $0x3c] sm:$0xff]
        %v1472 = vld [vmem:[#allocation2 + $0x44] sm:$0xf]
        %v1473 = vld [vmem:[#allocation2 + $0x48] sm:$0xff]
        %v1474 = vld [vmem:[#allocation2 + $0x50] sm:$0xf]
        %v1475 = vld [vmem:[#allocation2 + $0x54] sm:$0xff]
        %v1476 = vld [vmem:[#allocation2 + $0x5c] sm:$0xf]
        %v1477 = vld [vmem:[#allocation2 + $0x60] sm:$0xff]
        %v1478 = vld [vmem:[#allocation2 + $0x68] sm:$0xf]
        %v1479 = vld [vmem:[#allocation2 + $0x6c] sm:$0xff]
        %v1480 = vld [vmem:[#allocation2 + $0x74] sm:$0xf]
        %v1481 = vld [vmem:[#allocation2 + $0x78] sm:$0xff]
        %v1482 = vld [vmem:[#allocation2 + $0x80] sm:$0xf]
        %v1483 = vld [vmem:[#allocation2 + $0x84] sm:$0xff]
        %v1484 = vld [vmem:[#allocation2 + $0x8c] sm:$0xf]
        %v1485 = vld [vmem:[#allocation2 + $0x90] sm:$0xff]
        %v1486 = vld [vmem:[#allocation2 + $0x98] sm:$0xf]
        %v1487 = vld [vmem:[#allocation2 + $0x9c] sm:$0xff]
        %v1488 = vld [vmem:[#allocation2 + $0xa4] sm:$0xf]
        %v1489 = vld [vmem:[#allocation2 + $0xa8] sm:$0xff]
        %v1490 = vld [vmem:[#allocation2 + $0xb0] sm:$0xf]
        %v1491 = vld [vmem:[#allocation2 + $0xb4] sm:$0xff]
        %v1492 = vld [vmem:[#allocation2 + $0xbc] sm:$0xf]
        %v1493 = vld [vmem:[#allocation2 + $0xc0] sm:$0xff]
        %v1494 = vld [vmem:[#allocation2 + $0xc8] sm:$0xf]
        %v1495 = vld [vmem:[#allocation2 + $0xcc] sm:$0xff]
        %v1496 = vld [vmem:[#allocation2 + $0xd4] sm:$0xf]
        %v1497 = vld [vmem:[#allocation2 + $0xd8] sm:$0xff]
        %v1498 = vld [vmem:[#allocation2 + $0xe0] sm:$0xf]
        %v1499 = vld [vmem:[#allocation2 + $0xe4] sm:$0xff]
        %v1500 = vld [vmem:[#allocation2 + $0xec] sm:$0xf]
        %v1501 = vld [vmem:[#allocation2 + $0xf0] sm:$0xff]
        %v1502 = vld [vmem:[#allocation2 + $0xf8] sm:$0xf]
        %v1503 = vld [vmem:[#allocation2 + $0xfc] sm:$0xff]
        %v1504 = vld [vmem:[#allocation2 + $0x104] sm:$0xf]
        %v1505 = vld [vmem:[#allocation2 + $0x108] sm:$0xff]
        %v1506 = vld [vmem:[#allocation2 + $0x110] sm:$0xf]
        %v1507 = vld [vmem:[#allocation2 + $0x114] sm:$0xff]
        %v1508 = vld [vmem:[#allocation2 + $0x11c] sm:$0xf]
        %v1509 = vld [vmem:[#allocation2 + $0x120] sm:$0xff]
        %v1510 = vld [vmem:[#allocation2 + $0x128] sm:$0xf]
        %v1511 = vld [vmem:[#allocation2 + $0x12c] sm:$0xff]
        %v1512 = vld [vmem:[#allocation2 + $0x134] sm:$0xf]
        %v1513 = vld [vmem:[#allocation2 + $0x138] sm:$0xff]
        %v1514 = vld [vmem:[#allocation2 + $0x140] sm:$0xf]
        %v1515 = vld [vmem:[#allocation2 + $0x144] sm:$0xff]
        %v1516 = vld [vmem:[#allocation2 + $0x14c] sm:$0xf]
        %v1517 = vld [vmem:[#allocation2 + $0x150] sm:$0xff]
        %v1518 = vld [vmem:[#allocation2 + $0x158] sm:$0xf]
        %v1519 = vld [vmem:[#allocation2 + $0x15c] sm:$0xff]
        %v1520 = vld [vmem:[#allocation2 + $0x164] sm:$0xf]
        %v1521 = vld [vmem:[#allocation2 + $0x168] sm:$0xff]
        %v1522 = vld [vmem:[#allocation2 + $0x170] sm:$0xf]
        %v1523 = vld [vmem:[#allocation2 + $0x174] sm:$0xff]
        %v1524 = vld [vmem:[#allocation2 + $0x17c] sm:$0xf]
        %v1525 = vld [vmem:[#allocation7 + $0x20] sm:$0xff]
        %v1526 = vld [vmem:[#allocation7 + $0x28] sm:$0xff]
        %v1527 = vld [vmem:[#allocation7 + $0x30] sm:$0xff]
        %v1528 = vld [vmem:[#allocation7 + $0x38] sm:$0xff]
        %v1533 = vunpack.c.l.b16 %v1525
        %v1534 = vunpack.c.h.b16 %v1525
        %v1535 = vunpack.c.l.b16 %v1526
        %v1536 = vunpack.c.h.b16 %v1526
        %v1537 = vunpack.c.l.b16 %v1527
        %v1538 = vunpack.c.h.b16 %v1527
        %v1539 = vunpack.c.l.b16 %v1528
        %v1540 = vunpack.c.h.b16 %v1528
        %v1541 = vpack.c.b16 %v1535, %v1533
        %v1542 = vpack.c.b16 %v1536, %v1534
        %v1543 = vpack.c.b16 %v1539, %v1537
        %v1544 = vpack.c.b16 %v1540, %v1538
        %v1613 = vunpack.c.l.b16 %v1461
        %v1614 = vunpack.c.h.b16 %v1461
        %v1615 = vunpack.c.l.b16 %v1462
        %v1616 = vunpack.c.l.b16 %v1463
        %v1617 = vunpack.c.h.b16 %v1463
        %v1618 = vunpack.c.l.b16 %v1464
        %v1619 = vunpack.c.l.b16 %v1465
        %v1620 = vunpack.c.h.b16 %v1465
        %v1621 = vunpack.c.l.b16 %v1466
        %v1622 = vunpack.c.l.b16 %v1467
        %v1623 = vunpack.c.h.b16 %v1467
        %v1624 = vunpack.c.l.b16 %v1468
        %v1625 = vunpack.c.l.b16 %v1469
        %v1626 = vunpack.c.h.b16 %v1469
        %v1627 = vunpack.c.l.b16 %v1470
        %v1628 = vunpack.c.l.b16 %v1471
        %v1629 = vunpack.c.h.b16 %v1471
        %v1630 = vunpack.c.l.b16 %v1472
        %v1631 = vunpack.c.l.b16 %v1473
        %v1632 = vunpack.c.h.b16 %v1473
        %v1633 = vunpack.c.l.b16 %v1474
        %v1634 = vunpack.c.l.b16 %v1475
        %v1635 = vunpack.c.h.b16 %v1475
        %v1636 = vunpack.c.l.b16 %v1476
        %v1637 = vunpack.c.l.b16 %v1477
        %v1638 = vunpack.c.h.b16 %v1477
        %v1639 = vunpack.c.l.b16 %v1478
        %v1640 = vunpack.c.l.b16 %v1479
        %v1641 = vunpack.c.h.b16 %v1479
        %v1642 = vunpack.c.l.b16 %v1480
        %v1643 = vunpack.c.l.b16 %v1481
        %v1644 = vunpack.c.h.b16 %v1481
        %v1645 = vunpack.c.l.b16 %v1482
        %v1646 = vunpack.c.l.b16 %v1483
        %v1647 = vunpack.c.h.b16 %v1483
        %v1648 = vunpack.c.l.b16 %v1484
        %v1649 = vunpack.c.l.b16 %v1485
        %v1650 = vunpack.c.h.b16 %v1485
        %v1651 = vunpack.c.l.b16 %v1486
        %v1652 = vunpack.c.l.b16 %v1487
        %v1653 = vunpack.c.h.b16 %v1487
        %v1654 = vunpack.c.l.b16 %v1488
        %v1655 = vunpack.c.l.b16 %v1489
        %v1656 = vunpack.c.h.b16 %v1489
        %v1657 = vunpack.c.l.b16 %v1490
        %v1658 = vunpack.c.l.b16 %v1491
        %v1659 = vunpack.c.h.b16 %v1491
        %v1660 = vunpack.c.l.b16 %v1492
        %v1661 = vunpack.c.l.b16 %v1493
        %v1662 = vunpack.c.h.b16 %v1493
        %v1663 = vunpack.c.l.b16 %v1494
        %v1664 = vunpack.c.l.b16 %v1495
        %v1665 = vunpack.c.h.b16 %v1495
        %v1666 = vunpack.c.l.b16 %v1496
        %v1667 = vunpack.c.l.b16 %v1497
        %v1668 = vunpack.c.h.b16 %v1497
        %v1669 = vunpack.c.l.b16 %v1498
        %v1670 = vunpack.c.l.b16 %v1499
        %v1671 = vunpack.c.h.b16 %v1499
        %v1672 = vunpack.c.l.b16 %v1500
        %v1673 = vunpack.c.l.b16 %v1501
        %v1674 = vunpack.c.h.b16 %v1501
        %v1675 = vunpack.c.l.b16 %v1502
        %v1676 = vunpack.c.l.b16 %v1503
        %v1677 = vunpack.c.h.b16 %v1503
        %v1678 = vunpack.c.l.b16 %v1504
        %v1679 = vunpack.c.l.b16 %v1505
        %v1680 = vunpack.c.h.b16 %v1505
        %v1681 = vunpack.c.l.b16 %v1506
        %v1682 = vunpack.c.l.b16 %v1507
        %v1683 = vunpack.c.h.b16 %v1507
        %v1684 = vunpack.c.l.b16 %v1508
        %v1685 = vunpack.c.l.b16 %v1509
        %v1686 = vunpack.c.h.b16 %v1509
        %v1687 = vunpack.c.l.b16 %v1510
        %v1688 = vunpack.c.l.b16 %v1511
        %v1689 = vunpack.c.h.b16 %v1511
        %v1690 = vunpack.c.l.b16 %v1512
        %v1691 = vunpack.c.l.b16 %v1513
        %v1692 = vunpack.c.h.b16 %v1513
        %v1693 = vunpack.c.l.b16 %v1514
        %v1694 = vunpack.c.l.b16 %v1515
        %v1695 = vunpack.c.h.b16 %v1515
        %v1696 = vunpack.c.l.b16 %v1516
        %v1697 = vunpack.c.l.b16 %v1517
        %v1698 = vunpack.c.h.b16 %v1517
        %v1699 = vunpack.c.l.b16 %v1518
        %v1700 = vunpack.c.l.b16 %v1519
        %v1701 = vunpack.c.h.b16 %v1519
        %v1702 = vunpack.c.l.b16 %v1520
        %v1703 = vunpack.c.l.b16 %v1521
        %v1704 = vunpack.c.h.b16 %v1521
        %v1705 = vunpack.c.l.b16 %v1522
        %v1706 = vunpack.c.l.b16 %v1523
        %v1707 = vunpack.c.h.b16 %v1523
        %v1708 = vunpack.c.l.b16 %v1524
        %v1709 = vpack.c.b16 %v1616, %v1613
        %v1710 = vpack.c.b16 %v1617, %v1614
        %v1711 = vpack.c.b16 %v1618, %v1615
        %v1712 = vpack.c.b16 %v1622, %v1619
        %v1713 = vpack.c.b16 %v1623, %v1620
        %v1714 = vpack.c.b16 %v1624, %v1621
        %v1715 = vpack.c.b16 %v1628, %v1625
        %v1716 = vpack.c.b16 %v1629, %v1626
        %v1717 = vpack.c.b16 %v1630, %v1627
        %v1718 = vpack.c.b16 %v1634, %v1631
        %v1719 = vpack.c.b16 %v1635, %v1632
        %v1720 = vpack.c.b16 %v1636, %v1633
        %v1721 = vpack.c.b16 %v1640, %v1637
        %v1722 = vpack.c.b16 %v1641, %v1638
        %v1723 = vpack.c.b16 %v1642, %v1639
        %v1724 = vpack.c.b16 %v1646, %v1643
        %v1725 = vpack.c.b16 %v1647, %v1644
        %v1726 = vpack.c.b16 %v1648, %v1645
        %v1727 = vpack.c.b16 %v1652, %v1649
        %v1728 = vpack.c.b16 %v1653, %v1650
        %v1729 = vpack.c.b16 %v1654, %v1651
        %v1730 = vpack.c.b16 %v1658, %v1655
        %v1731 = vpack.c.b16 %v1659, %v1656
        %v1732 = vpack.c.b16 %v1660, %v1657
        %v1733 = vpack.c.b16 %v1664, %v1661
        %v1734 = vpack.c.b16 %v1665, %v1662
        %v1735 = vpack.c.b16 %v1666, %v1663
        %v1736 = vpack.c.b16 %v1670, %v1667
        %v1737 = vpack.c.b16 %v1671, %v1668
        %v1738 = vpack.c.b16 %v1672, %v1669
        %v1739 = vpack.c.b16 %v1676, %v1673
        %v1740 = vpack.c.b16 %v1677, %v1674
        %v1741 = vpack.c.b16 %v1678, %v1675
        %v1742 = vpack.c.b16 %v1682, %v1679
        %v1743 = vpack.c.b16 %v1683, %v1680
        %v1744 = vpack.c.b16 %v1684, %v1681
        %v1745 = vpack.c.b16 %v1688, %v1685
        %v1746 = vpack.c.b16 %v1689, %v1686
        %v1747 = vpack.c.b16 %v1690, %v1687
        %v1748 = vpack.c.b16 %v1694, %v1691
        %v1749 = vpack.c.b16 %v1695, %v1692
        %v1750 = vpack.c.b16 %v1696, %v1693
        %v1751 = vpack.c.b16 %v1700, %v1697
        %v1752 = vpack.c.b16 %v1701, %v1698
        %v1753 = vpack.c.b16 %v1702, %v1699
        %v1754 = vpack.c.b16 %v1706, %v1703
        %v1755 = vpack.c.b16 %v1707, %v1704
        %v1756 = vpack.c.b16 %v1708, %v1705
        %1757 = vrot.lane.b32.xlu0 %v1709, 127
        %v1758 = vpop.permute.xlu0 %1757
        %1759 = vrot.lane.b32.xlu0 %v1710, 127
        %v1760 = vpop.permute.xlu0 %1759
        %1761 = vrot.lane.b32.xlu0 %v1711, 127
        %v1762 = vpop.permute.xlu0 %1761
        %1763 = vrot.lane.b32.xlu0 %v1712, 127
        %v1764 = vpop.permute.xlu0 %1763
        %1765 = vrot.lane.b32.xlu0 %v1713, 127
        %v1766 = vpop.permute.xlu0 %1765
        %1767 = vrot.lane.b32.xlu0 %v1714, 127
        %v1768 = vpop.permute.xlu0 %1767
        %1769 = vrot.lane.b32.xlu0 %v1715, 127
        %v1770 = vpop.permute.xlu0 %1769
        %1771 = vrot.lane.b32.xlu0 %v1716, 127
        %v1772 = vpop.permute.xlu0 %1771
        %1773 = vrot.lane.b32.xlu0 %v1717, 127
        %v1774 = vpop.permute.xlu0 %1773
        %1775 = vrot.lane.b32.xlu0 %v1718, 127
        %v1776 = vpop.permute.xlu0 %1775
        %1777 = vrot.lane.b32.xlu0 %v1719, 127
        %v1778 = vpop.permute.xlu0 %1777
        %1779 = vrot.lane.b32.xlu0 %v1720, 127
        %v1780 = vpop.permute.xlu0 %1779
        %1781 = vrot.lane.b32.xlu0 %v1721, 127
        %v1782 = vpop.permute.xlu0 %1781
        %1783 = vrot.lane.b32.xlu0 %v1722, 127
        %v1784 = vpop.permute.xlu0 %1783
        %1785 = vrot.lane.b32.xlu0 %v1723, 127
        %v1786 = vpop.permute.xlu0 %1785
        %1787 = vrot.lane.b32.xlu0 %v1724, 127
        %v1788 = vpop.permute.xlu0 %1787
        %1789 = vrot.lane.b32.xlu0 %v1725, 127
        %v1790 = vpop.permute.xlu0 %1789
        %1791 = vrot.lane.b32.xlu0 %v1726, 127
        %v1792 = vpop.permute.xlu0 %1791
        %1793 = vrot.lane.b32.xlu0 %v1727, 127
        %v1794 = vpop.permute.xlu0 %1793
        %1795 = vrot.lane.b32.xlu0 %v1728, 127
        %v1796 = vpop.permute.xlu0 %1795
        %1797 = vrot.lane.b32.xlu0 %v1729, 127
        %v1798 = vpop.permute.xlu0 %1797
        %1799 = vrot.lane.b32.xlu0 %v1730, 127
        %v1800 = vpop.permute.xlu0 %1799
        %1801 = vrot.lane.b32.xlu0 %v1731, 127
        %v1802 = vpop.permute.xlu0 %1801
        %1803 = vrot.lane.b32.xlu0 %v1732, 127
        %v1804 = vpop.permute.xlu0 %1803
        %1805 = vrot.lane.b32.xlu0 %v1733, 127
        %v1806 = vpop.permute.xlu0 %1805
        %1807 = vrot.lane.b32.xlu0 %v1734, 127
        %v1808 = vpop.permute.xlu0 %1807
        %1809 = vrot.lane.b32.xlu0 %v1735, 127
        %v1810 = vpop.permute.xlu0 %1809
        %1811 = vrot.lane.b32.xlu0 %v1736, 127
        %v1812 = vpop.permute.xlu0 %1811
        %1813 = vrot.lane.b32.xlu0 %v1737, 127
        %v1814 = vpop.permute.xlu0 %1813
        %1815 = vrot.lane.b32.xlu0 %v1738, 127
        %v1816 = vpop.permute.xlu0 %1815
        %1817 = vrot.lane.b32.xlu0 %v1739, 127
        %v1818 = vpop.permute.xlu0 %1817
        %1819 = vrot.lane.b32.xlu0 %v1740, 127
        %v1820 = vpop.permute.xlu0 %1819
        %1821 = vrot.lane.b32.xlu0 %v1741, 127
        %v1822 = vpop.permute.xlu0 %1821
        %1823 = vrot.lane.b32.xlu0 %v1742, 127
        %v1824 = vpop.permute.xlu0 %1823
        %1825 = vrot.lane.b32.xlu0 %v1743, 127
        %v1826 = vpop.permute.xlu0 %1825
        %1827 = vrot.lane.b32.xlu0 %v1744, 127
        %v1828 = vpop.permute.xlu0 %1827
        %1829 = vrot.lane.b32.xlu0 %v1745, 127
        %v1830 = vpop.permute.xlu0 %1829
        %1831 = vrot.lane.b32.xlu0 %v1746, 127
        %v1832 = vpop.permute.xlu0 %1831
        %1833 = vrot.lane.b32.xlu0 %v1747, 127
        %v1834 = vpop.permute.xlu0 %1833
        %1835 = vrot.lane.b32.xlu0 %v1748, 127
        %v1836 = vpop.permute.xlu0 %1835
        %1837 = vrot.lane.b32.xlu0 %v1749, 127
        %v1838 = vpop.permute.xlu0 %1837
        %1839 = vrot.lane.b32.xlu0 %v1750, 127
        %v1840 = vpop.permute.xlu0 %1839
        %1841 = vrot.lane.b32.xlu0 %v1751, 127
        %v1842 = vpop.permute.xlu0 %1841
        %1843 = vrot.lane.b32.xlu0 %v1752, 127
        %v1844 = vpop.permute.xlu0 %1843
        %1845 = vrot.lane.b32.xlu0 %v1753, 127
        %v1846 = vpop.permute.xlu0 %1845
        %1847 = vrot.lane.b32.xlu0 %v1754, 127
        %v1848 = vpop.permute.xlu0 %1847
        %1849 = vrot.lane.b32.xlu0 %v1755, 127
        %v1850 = vpop.permute.xlu0 %1849
        %1851 = vrot.lane.b32.xlu0 %v1756, 127
        %v1852 = vpop.permute.xlu0 %1851
        %vm1853 = vcmask 1039360
        %v1854 = vsel %vm1853, %v1758, %v1760
        %v1855 = vsel %vm1853, %v1760, %v1762
        %v1856 = vsel %vm1853, %v1764, %v1766
        %v1857 = vsel %vm1853, %v1766, %v1768
        %v1858 = vsel %vm1853, %v1770, %v1772
        %v1859 = vsel %vm1853, %v1772, %v1774
        %v1860 = vsel %vm1853, %v1776, %v1778
        %v1861 = vsel %vm1853, %v1778, %v1780
        %v1862 = vsel %vm1853, %v1782, %v1784
        %v1863 = vsel %vm1853, %v1784, %v1786
        %v1864 = vsel %vm1853, %v1788, %v1790
        %v1865 = vsel %vm1853, %v1790, %v1792
        %v1866 = vsel %vm1853, %v1794, %v1796
        %v1867 = vsel %vm1853, %v1796, %v1798
        %v1868 = vsel %vm1853, %v1800, %v1802
        %v1869 = vsel %vm1853, %v1802, %v1804
        %v1870 = vsel %vm1853, %v1806, %v1808
        %v1871 = vsel %vm1853, %v1808, %v1810
        %v1872 = vsel %vm1853, %v1812, %v1814
        %v1873 = vsel %vm1853, %v1814, %v1816
        %v1874 = vsel %vm1853, %v1818, %v1820
        %v1875 = vsel %vm1853, %v1820, %v1822
        %v1876 = vsel %vm1853, %v1824, %v1826
        %v1877 = vsel %vm1853, %v1826, %v1828
        %v1878 = vsel %vm1853, %v1830, %v1832
        %v1879 = vsel %vm1853, %v1832, %v1834
        %v1880 = vsel %vm1853, %v1836, %v1838
        %v1881 = vsel %vm1853, %v1838, %v1840
        %v1882 = vsel %vm1853, %v1842, %v1844
        %v1883 = vsel %vm1853, %v1844, %v1846
        %v1884 = vsel %vm1853, %v1848, %v1850
        %v1885 = vsel %vm1853, %v1850, %v1852
        %1934 = vmatpush.bf16.msra.mxu0 %v1868
        %1935 = vmatpush.bf16.msra.mxu0 %v1866
        %1936 = vmatpush.bf16.msra.mxu0 %v1864
        %1937 = vmatpush.bf16.msra.mxu0 %v1862
        %1938 = vmatpush.bf16.msra.mxu0 %v1860
        %1939 = vmatpush.bf16.msra.mxu0 %v1858
        %1940 = vmatpush.bf16.msra.mxu0 %v1856
        %1941 = vmatpush.bf16.msra.mxu0 %v1854
        %1942 = vmatmul.bf16.gmra.mxu0 %v1541
        %v1943 = vpop.f32.mrf.mxu0
        %v1944 = vadd.f32 0.0, %v1943
        %v1945 = vpop.f32.mrf.mxu0
        %v1946 = vadd.f32 0.0, %v1945
        %1947 = vmatmul.bf16.gmra.mxu0 %v1543
        %v1948 = vpop.f32.mrf.mxu0
        %v1949 = vadd.f32 0.0, %v1948
        %v1950 = vpop.f32.mrf.mxu0
        %v1951 = vadd.f32 0.0, %v1950
        %1952 = vdwg.mxu0
        %1953 = vmatpush.bf16.msra.mxu0 %v1884
        %1954 = vmatpush.bf16.msra.mxu0 %v1882
        %1955 = vmatpush.bf16.msra.mxu0 %v1880
        %1956 = vmatpush.bf16.msra.mxu0 %v1878
        %1957 = vmatpush.bf16.msra.mxu0 %v1876
        %1958 = vmatpush.bf16.msra.mxu0 %v1874
        %1959 = vmatpush.bf16.msra.mxu0 %v1872
        %1960 = vmatpush.bf16.msra.mxu0 %v1870
        %1961 = vmatmul.bf16.gmra.mxu0 %v1542
        %v1962 = vpop.f32.mrf.mxu0
        %v1963 = vadd.f32 %v1944, %v1962
        %v1964 = vpop.f32.mrf.mxu0
        %v1965 = vadd.f32 %v1946, %v1964
        %1966 = vmatmul.bf16.gmra.mxu0 %v1544
        %v1967 = vpop.f32.mrf.mxu0
        %v1968 = vadd.f32 %v1949, %v1967
        %v1969 = vpop.f32.mrf.mxu0
        %v1970 = vadd.f32 %v1951, %v1969
        %1971 = vdwg.mxu0
        %1972 = vmatpush.bf16.msra.mxu0 %v1869
        %1973 = vmatpush.bf16.msra.mxu0 %v1867
        %1974 = vmatpush.bf16.msra.mxu0 %v1865
        %1975 = vmatpush.bf16.msra.mxu0 %v1863
        %1976 = vmatpush.bf16.msra.mxu0 %v1861
        %1977 = vmatpush.bf16.msra.mxu0 %v1859
        %1978 = vmatpush.bf16.msra.mxu0 %v1857
        %1979 = vmatpush.bf16.msra.mxu0 %v1855
        %1980 = vmatmul.bf16.gmra.mxu0 %v1541
        %v1981 = vpop.f32.mrf.mxu0
        %v1982 = vadd.f32 0.0, %v1981
        %v1983 = vpop.f32.mrf.mxu0
        %v1984 = vadd.f32 0.0, %v1983
        %1985 = vmatmul.bf16.gmra.mxu0 %v1543
        %v1986 = vpop.f32.mrf.mxu0
        %v1987 = vadd.f32 0.0, %v1986
        %v1988 = vpop.f32.mrf.mxu0
        %v1989 = vadd.f32 0.0, %v1988
        %1990 = vdwg.mxu0
        %1991 = vmatpush.bf16.msra.mxu0 %v1885
        %1992 = vmatpush.bf16.msra.mxu0 %v1883
        %1993 = vmatpush.bf16.msra.mxu0 %v1881
        %1994 = vmatpush.bf16.msra.mxu0 %v1879
        %1995 = vmatpush.bf16.msra.mxu0 %v1877
        %1996 = vmatpush.bf16.msra.mxu0 %v1875
        %1997 = vmatpush.bf16.msra.mxu0 %v1873
        %1998 = vmatpush.bf16.msra.mxu0 %v1871
        %1999 = vmatmul.bf16.gmra.mxu0 %v1542
        %v2000 = vpop.f32.mrf.mxu0
        %v2001 = vadd.f32 %v1982, %v2000
        %v2002 = vpop.f32.mrf.mxu0
        %v2003 = vadd.f32 %v1984, %v2002
        %2004 = vmatmul.bf16.gmra.mxu0 %v1544
        %v2005 = vpop.f32.mrf.mxu0
        %v2006 = vadd.f32 %v1987, %v2005
        %v2007 = vpop.f32.mrf.mxu0
        %v2008 = vadd.f32 %v1989, %v2007
        %2009 = vdwg.mxu0
        %2010 = vmatpush.bf16.msra.mxu0 %v1804
        %2011 = vmatpush.bf16.msra.mxu0 %v1798
        %2012 = vmatpush.bf16.msra.mxu0 %v1792
        %2013 = vmatpush.bf16.msra.mxu0 %v1786
        %2014 = vmatpush.bf16.msra.mxu0 %v1780
        %2015 = vmatpush.bf16.msra.mxu0 %v1774
        %2016 = vmatpush.bf16.msra.mxu0 %v1768
        %2017 = vmatpush.bf16.msra.mxu0 %v1762
        %2018 = vmatmul.bf16.gmra.mxu0 %v1541
        %v2019 = vpop.f32.mrf.mxu0
        %v2020 = vadd.f32 0.0, %v2019
        %v2021 = vpop.f32.mrf.mxu0
        %v2022 = vadd.f32 0.0, %v2021
        %2023 = vmatmul.bf16.gmra.mxu0 %v1543
        %v2024 = vpop.f32.mrf.mxu0
        %v2025 = vadd.f32 0.0, %v2024
        %v2026 = vpop.f32.mrf.mxu0
        %v2027 = vadd.f32 0.0, %v2026
        %2028 = vdwg.mxu0
        %2029 = vmatpush.bf16.msra.mxu0 %v1852
        %2030 = vmatpush.bf16.msra.mxu0 %v1846
        %2031 = vmatpush.bf16.msra.mxu0 %v1840
        %2032 = vmatpush.bf16.msra.mxu0 %v1834
        %2033 = vmatpush.bf16.msra.mxu0 %v1828
        %2034 = vmatpush.bf16.msra.mxu0 %v1822
        %2035 = vmatpush.bf16.msra.mxu0 %v1816
        %2036 = vmatpush.bf16.msra.mxu0 %v1810
        %2037 = vmatmul.bf16.gmra.mxu0 %v1542
        %v2038 = vpop.f32.mrf.mxu0
        %v2039 = vadd.f32 %v2020, %v2038
        %v2040 = vpop.f32.mrf.mxu0
        %v2041 = vadd.f32 %v2022, %v2040
        %2042 = vmatmul.bf16.gmra.mxu0 %v1544
        %v2043 = vpop.f32.mrf.mxu0
        %v2044 = vadd.f32 %v2025, %v2043
        %v2045 = vpop.f32.mrf.mxu0
        %v2046 = vadd.f32 %v2027, %v2045
        %2047 = vdwg.mxu0
        %v2052 = vunpack.c.l.b16 %v1457
        %v2053 = vunpack.c.h.b16 %v1457
        %v2054 = vunpack.c.l.b16 %v1458
        %v2055 = vunpack.c.h.b16 %v1458
        %v2056 = vunpack.c.l.b16 %v1459
        %v2057 = vunpack.c.h.b16 %v1459
        %v2058 = vunpack.c.l.b16 %v1460
        %v2059 = vunpack.c.h.b16 %v1460
        %v2060 = vpack.c.b16 %v2054, %v2052
        %v2061 = vpack.c.b16 %v2055, %v2053
        %v2062 = vpack.c.b16 %v2058, %v2056
        %v2063 = vpack.c.b16 %v2059, %v2057
        %2116 = vmatpush.bf16.msra.mxu0 %v1730
        %2117 = vmatpush.bf16.msra.mxu0 %v1727
        %2118 = vmatpush.bf16.msra.mxu0 %v1724
        %2119 = vmatpush.bf16.msra.mxu0 %v1721
        %2120 = vmatpush.bf16.msra.mxu0 %v1718
        %2121 = vmatpush.bf16.msra.mxu0 %v1715
        %2122 = vmatpush.bf16.msra.mxu0 %v1712
        %2123 = vmatpush.bf16.msra.mxu0 %v1709
        %2124 = vmatmul.bf16.gmra.mxu0 %v2060
        %v2125 = vpop.f32.mrf.mxu0
        %v2126 = vadd.f32 %v1963, %v2125
        %v2127 = vpop.f32.mrf.mxu0
        %v2128 = vadd.f32 %v1965, %v2127
        %2129 = vmatmul.bf16.gmra.mxu0 %v2062
        %v2130 = vpop.f32.mrf.mxu0
        %v2131 = vadd.f32 %v1968, %v2130
        %v2132 = vpop.f32.mrf.mxu0
        %v2133 = vadd.f32 %v1970, %v2132
        %2134 = vdwg.mxu0
        %2135 = vmatpush.bf16.msra.mxu0 %v1754
        %2136 = vmatpush.bf16.msra.mxu0 %v1751
        %2137 = vmatpush.bf16.msra.mxu0 %v1748
        %2138 = vmatpush.bf16.msra.mxu0 %v1745
        %2139 = vmatpush.bf16.msra.mxu0 %v1742
        %2140 = vmatpush.bf16.msra.mxu0 %v1739
        %2141 = vmatpush.bf16.msra.mxu0 %v1736
        %2142 = vmatpush.bf16.msra.mxu0 %v1733
        %2143 = vmatmul.bf16.gmra.mxu0 %v2061
        %v2144 = vpop.f32.mrf.mxu0
        %v2145 = vadd.f32 %v2126, %v2144
        %v2146 = vpop.f32.mrf.mxu0
        %v2147 = vadd.f32 %v2128, %v2146
        %2148 = vmatmul.bf16.gmra.mxu0 %v2063
        %v2149 = vpop.f32.mrf.mxu0
        %v2150 = vadd.f32 %v2131, %v2149
        %v2151 = vpop.f32.mrf.mxu0
        %v2152 = vadd.f32 %v2133, %v2151
        %2153 = vdwg.mxu0
        %2154 = vmatpush.bf16.msra.mxu0 %v1731
        %2155 = vmatpush.bf16.msra.mxu0 %v1728
        %2156 = vmatpush.bf16.msra.mxu0 %v1725
        %2157 = vmatpush.bf16.msra.mxu0 %v1722
        %2158 = vmatpush.bf16.msra.mxu0 %v1719
        %2159 = vmatpush.bf16.msra.mxu0 %v1716
        %2160 = vmatpush.bf16.msra.mxu0 %v1713
        %2161 = vmatpush.bf16.msra.mxu0 %v1710
        %2162 = vmatmul.bf16.gmra.mxu0 %v2060
        %v2163 = vpop.f32.mrf.mxu0
        %v2164 = vadd.f32 %v2001, %v2163
        %v2165 = vpop.f32.mrf.mxu0
        %v2166 = vadd.f32 %v2003, %v2165
        %2167 = vmatmul.bf16.gmra.mxu0 %v2062
        %v2168 = vpop.f32.mrf.mxu0
        %v2169 = vadd.f32 %v2006, %v2168
        %v2170 = vpop.f32.mrf.mxu0
        %v2171 = vadd.f32 %v2008, %v2170
        %2172 = vdwg.mxu0
        %2173 = vmatpush.bf16.msra.mxu0 %v1755
        %2174 = vmatpush.bf16.msra.mxu0 %v1752
        %2175 = vmatpush.bf16.msra.mxu0 %v1749
        %2176 = vmatpush.bf16.msra.mxu0 %v1746
        %2177 = vmatpush.bf16.msra.mxu0 %v1743
        %2178 = vmatpush.bf16.msra.mxu0 %v1740
        %2179 = vmatpush.bf16.msra.mxu0 %v1737
        %2180 = vmatpush.bf16.msra.mxu0 %v1734
        %2181 = vmatmul.bf16.gmra.mxu0 %v2061
        %v2182 = vpop.f32.mrf.mxu0
        %v2183 = vadd.f32 %v2164, %v2182
        %v2184 = vpop.f32.mrf.mxu0
        %v2185 = vadd.f32 %v2166, %v2184
        %2186 = vmatmul.bf16.gmra.mxu0 %v2063
        %v2187 = vpop.f32.mrf.mxu0
        %v2188 = vadd.f32 %v2169, %v2187
        %v2189 = vpop.f32.mrf.mxu0
        %v2190 = vadd.f32 %v2171, %v2189
        %2191 = vdwg.mxu0
        %2192 = vmatpush.bf16.msra.mxu0 %v1732
        %2193 = vmatpush.bf16.msra.mxu0 %v1729
        %2194 = vmatpush.bf16.msra.mxu0 %v1726
        %2195 = vmatpush.bf16.msra.mxu0 %v1723
        %2196 = vmatpush.bf16.msra.mxu0 %v1720
        %2197 = vmatpush.bf16.msra.mxu0 %v1717
        %2198 = vmatpush.bf16.msra.mxu0 %v1714
        %2199 = vmatpush.bf16.msra.mxu0 %v1711
        %2200 = vmatmul.bf16.gmra.mxu0 %v2060
        %v2201 = vpop.f32.mrf.mxu0
        %v2202 = vadd.f32 %v2039, %v2201
        %v2203 = vpop.f32.mrf.mxu0
        %v2204 = vadd.f32 %v2041, %v2203
        %2205 = vmatmul.bf16.gmra.mxu0 %v2062
        %v2206 = vpop.f32.mrf.mxu0
        %v2207 = vadd.f32 %v2044, %v2206
        %v2208 = vpop.f32.mrf.mxu0
        %v2209 = vadd.f32 %v2046, %v2208
        %2210 = vdwg.mxu0
        %2211 = vmatpush.bf16.msra.mxu0 %v1756
        %2212 = vmatpush.bf16.msra.mxu0 %v1753
        %2213 = vmatpush.bf16.msra.mxu0 %v1750
        %2214 = vmatpush.bf16.msra.mxu0 %v1747
        %2215 = vmatpush.bf16.msra.mxu0 %v1744
        %2216 = vmatpush.bf16.msra.mxu0 %v1741
        %2217 = vmatpush.bf16.msra.mxu0 %v1738
        %2218 = vmatpush.bf16.msra.mxu0 %v1735
        %2219 = vmatmul.bf16.gmra.mxu0 %v2061
        %v2220 = vpop.f32.mrf.mxu0
        %v2221 = vadd.f32 %v2202, %v2220
        %v2222 = vpop.f32.mrf.mxu0
        %v2223 = vadd.f32 %v2204, %v2222
        %2224 = vmatmul.bf16.gmra.mxu0 %v2063
        %v2225 = vpop.f32.mrf.mxu0
        %v2226 = vadd.f32 %v2207, %v2225
        %v2227 = vpop.f32.mrf.mxu0
        %v2228 = vadd.f32 %v2209, %v2227
        %2229 = vdwg.mxu0
        %v2230 = vld [vmem:[#allocation7 + $0x40] sm:$0xff]
        %v2231 = vld [vmem:[#allocation7 + $0x48] sm:$0xff]
        %v2232 = vld [vmem:[#allocation7 + $0x50] sm:$0xff]
        %v2233 = vld [vmem:[#allocation7 + $0x58] sm:$0xff]
        %v2238 = vunpack.c.l.b16 %v2230
        %v2239 = vunpack.c.h.b16 %v2230
        %v2240 = vunpack.c.l.b16 %v2231
        %v2241 = vunpack.c.h.b16 %v2231
        %v2242 = vunpack.c.l.b16 %v2232
        %v2243 = vunpack.c.h.b16 %v2232
        %v2244 = vunpack.c.l.b16 %v2233
        %v2245 = vunpack.c.h.b16 %v2233
        %v2246 = vpack.c.b16 %v2240, %v2238
        %v2247 = vpack.c.b16 %v2241, %v2239
        %v2248 = vpack.c.b16 %v2244, %v2242
        %v2249 = vpack.c.b16 %v2245, %v2243
        %2254 = vrot.lane.b32.xlu0 %v1709, 126
        %v2255 = vpop.permute.xlu0 %2254
        %2256 = vrot.lane.b32.xlu0 %v1710, 126
        %v2257 = vpop.permute.xlu0 %2256
        %2258 = vrot.lane.b32.xlu0 %v1711, 126
        %v2259 = vpop.permute.xlu0 %2258
        %2260 = vrot.lane.b32.xlu0 %v1712, 126
        %v2261 = vpop.permute.xlu0 %2260
        %2262 = vrot.lane.b32.xlu0 %v1713, 126
        %v2263 = vpop.permute.xlu0 %2262
        %2264 = vrot.lane.b32.xlu0 %v1714, 126
        %v2265 = vpop.permute.xlu0 %2264
        %2266 = vrot.lane.b32.xlu0 %v1715, 126
        %v2267 = vpop.permute.xlu0 %2266
        %2268 = vrot.lane.b32.xlu0 %v1716, 126
        %v2269 = vpop.permute.xlu0 %2268
        %2270 = vrot.lane.b32.xlu0 %v1717, 126
        %v2271 = vpop.permute.xlu0 %2270
        %2272 = vrot.lane.b32.xlu0 %v1718, 126
        %v2273 = vpop.permute.xlu0 %2272
        %2274 = vrot.lane.b32.xlu0 %v1719, 126
        %v2275 = vpop.permute.xlu0 %2274
        %2276 = vrot.lane.b32.xlu0 %v1720, 126
        %v2277 = vpop.permute.xlu0 %2276
        %2278 = vrot.lane.b32.xlu0 %v1721, 126
        %v2279 = vpop.permute.xlu0 %2278
        %2280 = vrot.lane.b32.xlu0 %v1722, 126
        %v2281 = vpop.permute.xlu0 %2280
        %2282 = vrot.lane.b32.xlu0 %v1723, 126
        %v2283 = vpop.permute.xlu0 %2282
        %2284 = vrot.lane.b32.xlu0 %v1724, 126
        %v2285 = vpop.permute.xlu0 %2284
        %2286 = vrot.lane.b32.xlu0 %v1725, 126
        %v2287 = vpop.permute.xlu0 %2286
        %2288 = vrot.lane.b32.xlu0 %v1726, 126
        %v2289 = vpop.permute.xlu0 %2288
        %2290 = vrot.lane.b32.xlu0 %v1727, 126
        %v2291 = vpop.permute.xlu0 %2290
        %2292 = vrot.lane.b32.xlu0 %v1728, 126
        %v2293 = vpop.permute.xlu0 %2292
        %2294 = vrot.lane.b32.xlu0 %v1729, 126
        %v2295 = vpop.permute.xlu0 %2294
        %2296 = vrot.lane.b32.xlu0 %v1730, 126
        %v2297 = vpop.permute.xlu0 %2296
        %2298 = vrot.lane.b32.xlu0 %v1731, 126
        %v2299 = vpop.permute.xlu0 %2298
        %2300 = vrot.lane.b32.xlu0 %v1732, 126
        %v2301 = vpop.permute.xlu0 %2300
        %2302 = vrot.lane.b32.xlu0 %v1733, 126
        %v2303 = vpop.permute.xlu0 %2302
        %2304 = vrot.lane.b32.xlu0 %v1734, 126
        %v2305 = vpop.permute.xlu0 %2304
        %2306 = vrot.lane.b32.xlu0 %v1735, 126
        %v2307 = vpop.permute.xlu0 %2306
        %2308 = vrot.lane.b32.xlu0 %v1736, 126
        %v2309 = vpop.permute.xlu0 %2308
        %2310 = vrot.lane.b32.xlu0 %v1737, 126
        %v2311 = vpop.permute.xlu0 %2310
        %2312 = vrot.lane.b32.xlu0 %v1738, 126
        %v2313 = vpop.permute.xlu0 %2312
        %2314 = vrot.lane.b32.xlu0 %v1739, 126
        %v2315 = vpop.permute.xlu0 %2314
        %2316 = vrot.lane.b32.xlu0 %v1740, 126
        %v2317 = vpop.permute.xlu0 %2316
        %2318 = vrot.lane.b32.xlu0 %v1741, 126
        %v2319 = vpop.permute.xlu0 %2318
        %2320 = vrot.lane.b32.xlu0 %v1742, 126
        %v2321 = vpop.permute.xlu0 %2320
        %2322 = vrot.lane.b32.xlu0 %v1743, 126
        %v2323 = vpop.permute.xlu0 %2322
        %2324 = vrot.lane.b32.xlu0 %v1744, 126
        %v2325 = vpop.permute.xlu0 %2324
        %2326 = vrot.lane.b32.xlu0 %v1745, 126
        %v2327 = vpop.permute.xlu0 %2326
        %2328 = vrot.lane.b32.xlu0 %v1746, 126
        %v2329 = vpop.permute.xlu0 %2328
        %2330 = vrot.lane.b32.xlu0 %v1747, 126
        %v2331 = vpop.permute.xlu0 %2330
        %2332 = vrot.lane.b32.xlu0 %v1748, 126
        %v2333 = vpop.permute.xlu0 %2332
        %2334 = vrot.lane.b32.xlu0 %v1749, 126
        %v2335 = vpop.permute.xlu0 %2334
        %2336 = vrot.lane.b32.xlu0 %v1750, 126
        %v2337 = vpop.permute.xlu0 %2336
        %2338 = vrot.lane.b32.xlu0 %v1751, 126
        %v2339 = vpop.permute.xlu0 %2338
        %2340 = vrot.lane.b32.xlu0 %v1752, 126
        %v2341 = vpop.permute.xlu0 %2340
        %2342 = vrot.lane.b32.xlu0 %v1753, 126
        %v2343 = vpop.permute.xlu0 %2342
        %2344 = vrot.lane.b32.xlu0 %v1754, 126
        %v2345 = vpop.permute.xlu0 %2344
        %2346 = vrot.lane.b32.xlu0 %v1755, 126
        %v2347 = vpop.permute.xlu0 %2346
        %2348 = vrot.lane.b32.xlu0 %v1756, 126
        %v2349 = vpop.permute.xlu0 %2348
        %vm2350 = vcmask 1031168
        %v2351 = vsel %vm2350, %v2255, %v2257
        %v2352 = vsel %vm2350, %v2257, %v2259
        %v2353 = vsel %vm2350, %v2261, %v2263
        %v2354 = vsel %vm2350, %v2263, %v2265
        %v2355 = vsel %vm2350, %v2267, %v2269
        %v2356 = vsel %vm2350, %v2269, %v2271
        %v2357 = vsel %vm2350, %v2273, %v2275
        %v2358 = vsel %vm2350, %v2275, %v2277
        %v2359 = vsel %vm2350, %v2279, %v2281
        %v2360 = vsel %vm2350, %v2281, %v2283
        %v2361 = vsel %vm2350, %v2285, %v2287
        %v2362 = vsel %vm2350, %v2287, %v2289
        %v2363 = vsel %vm2350, %v2291, %v2293
        %v2364 = vsel %vm2350, %v2293, %v2295
        %v2365 = vsel %vm2350, %v2297, %v2299
        %v2366 = vsel %vm2350, %v2299, %v2301
        %v2367 = vsel %vm2350, %v2303, %v2305
        %v2368 = vsel %vm2350, %v2305, %v2307
        %v2369 = vsel %vm2350, %v2309, %v2311
        %v2370 = vsel %vm2350, %v2311, %v2313
        %v2371 = vsel %vm2350, %v2315, %v2317
        %v2372 = vsel %vm2350, %v2317, %v2319
        %v2373 = vsel %vm2350, %v2321, %v2323
        %v2374 = vsel %vm2350, %v2323, %v2325
        %v2375 = vsel %vm2350, %v2327, %v2329
        %v2376 = vsel %vm2350, %v2329, %v2331
        %v2377 = vsel %vm2350, %v2333, %v2335
        %v2378 = vsel %vm2350, %v2335, %v2337
        %v2379 = vsel %vm2350, %v2339, %v2341
        %v2380 = vsel %vm2350, %v2341, %v2343
        %v2381 = vsel %vm2350, %v2345, %v2347
        %v2382 = vsel %vm2350, %v2347, %v2349
        %2431 = vmatpush.bf16.msra.mxu0 %v2365
        %2432 = vmatpush.bf16.msra.mxu0 %v2363
        %2433 = vmatpush.bf16.msra.mxu0 %v2361
        %2434 = vmatpush.bf16.msra.mxu0 %v2359
        %2435 = vmatpush.bf16.msra.mxu0 %v2357
        %2436 = vmatpush.bf16.msra.mxu0 %v2355
        %2437 = vmatpush.bf16.msra.mxu0 %v2353
        %2438 = vmatpush.bf16.msra.mxu0 %v2351
        %2439 = vmatmul.bf16.gmra.mxu0 %v2246
        %v2440 = vpop.f32.mrf.mxu0
        %v2441 = vadd.f32 0.0, %v2440
        %v2442 = vpop.f32.mrf.mxu0
        %v2443 = vadd.f32 0.0, %v2442
        %2444 = vmatmul.bf16.gmra.mxu0 %v2248
        %v2445 = vpop.f32.mrf.mxu0
        %v2446 = vadd.f32 0.0, %v2445
        %v2447 = vpop.f32.mrf.mxu0
        %v2448 = vadd.f32 0.0, %v2447
        %2449 = vdwg.mxu0
        %2450 = vmatpush.bf16.msra.mxu0 %v2381
        %2451 = vmatpush.bf16.msra.mxu0 %v2379
        %2452 = vmatpush.bf16.msra.mxu0 %v2377
        %2453 = vmatpush.bf16.msra.mxu0 %v2375
        %2454 = vmatpush.bf16.msra.mxu0 %v2373
        %2455 = vmatpush.bf16.msra.mxu0 %v2371
        %2456 = vmatpush.bf16.msra.mxu0 %v2369
        %2457 = vmatpush.bf16.msra.mxu0 %v2367
        %2458 = vmatmul.bf16.gmra.mxu0 %v2247
        %v2459 = vpop.f32.mrf.mxu0
        %v2460 = vadd.f32 %v2441, %v2459
        %v2461 = vpop.f32.mrf.mxu0
        %v2462 = vadd.f32 %v2443, %v2461
        %2463 = vmatmul.bf16.gmra.mxu0 %v2249
        %v2464 = vpop.f32.mrf.mxu0
        %v2465 = vadd.f32 %v2446, %v2464
        %v2466 = vpop.f32.mrf.mxu0
        %v2467 = vadd.f32 %v2448, %v2466
        %2468 = vdwg.mxu0
        %2469 = vmatpush.bf16.msra.mxu0 %v2366
        %2470 = vmatpush.bf16.msra.mxu0 %v2364
        %2471 = vmatpush.bf16.msra.mxu0 %v2362
        %2472 = vmatpush.bf16.msra.mxu0 %v2360
        %2473 = vmatpush.bf16.msra.mxu0 %v2358
        %2474 = vmatpush.bf16.msra.mxu0 %v2356
        %2475 = vmatpush.bf16.msra.mxu0 %v2354
        %2476 = vmatpush.bf16.msra.mxu0 %v2352
        %2477 = vmatmul.bf16.gmra.mxu0 %v2246
        %v2478 = vpop.f32.mrf.mxu0
        %v2479 = vadd.f32 0.0, %v2478
        %v2480 = vpop.f32.mrf.mxu0
        %v2481 = vadd.f32 0.0, %v2480
        %2482 = vmatmul.bf16.gmra.mxu0 %v2248
        %v2483 = vpop.f32.mrf.mxu0
        %v2484 = vadd.f32 0.0, %v2483
        %v2485 = vpop.f32.mrf.mxu0
        %v2486 = vadd.f32 0.0, %v2485
        %2487 = vdwg.mxu0
        %2488 = vmatpush.bf16.msra.mxu0 %v2382
        %2489 = vmatpush.bf16.msra.mxu0 %v2380
        %2490 = vmatpush.bf16.msra.mxu0 %v2378
        %2491 = vmatpush.bf16.msra.mxu0 %v2376
        %2492 = vmatpush.bf16.msra.mxu0 %v2374
        %2493 = vmatpush.bf16.msra.mxu0 %v2372
        %2494 = vmatpush.bf16.msra.mxu0 %v2370
        %2495 = vmatpush.bf16.msra.mxu0 %v2368
        %2496 = vmatmul.bf16.gmra.mxu0 %v2247
        %v2497 = vpop.f32.mrf.mxu0
        %v2498 = vadd.f32 %v2479, %v2497
        %v2499 = vpop.f32.mrf.mxu0
        %v2500 = vadd.f32 %v2481, %v2499
        %2501 = vmatmul.bf16.gmra.mxu0 %v2249
        %v2502 = vpop.f32.mrf.mxu0
        %v2503 = vadd.f32 %v2484, %v2502
        %v2504 = vpop.f32.mrf.mxu0
        %v2505 = vadd.f32 %v2486, %v2504
        %2506 = vdwg.mxu0
        %2507 = vmatpush.bf16.msra.mxu0 %v2301
        %2508 = vmatpush.bf16.msra.mxu0 %v2295
        %2509 = vmatpush.bf16.msra.mxu0 %v2289
        %2510 = vmatpush.bf16.msra.mxu0 %v2283
        %2511 = vmatpush.bf16.msra.mxu0 %v2277
        %2512 = vmatpush.bf16.msra.mxu0 %v2271
        %2513 = vmatpush.bf16.msra.mxu0 %v2265
        %2514 = vmatpush.bf16.msra.mxu0 %v2259
        %2515 = vmatmul.bf16.gmra.mxu0 %v2246
        %v2516 = vpop.f32.mrf.mxu0
        %v2517 = vadd.f32 0.0, %v2516
        %v2518 = vpop.f32.mrf.mxu0
        %v2519 = vadd.f32 0.0, %v2518
        %2520 = vmatmul.bf16.gmra.mxu0 %v2248
        %v2521 = vpop.f32.mrf.mxu0
        %v2522 = vadd.f32 0.0, %v2521
        %v2523 = vpop.f32.mrf.mxu0
        %v2524 = vadd.f32 0.0, %v2523
        %2525 = vdwg.mxu0
        %2526 = vmatpush.bf16.msra.mxu0 %v2349
        %2527 = vmatpush.bf16.msra.mxu0 %v2343
        %2528 = vmatpush.bf16.msra.mxu0 %v2337
        %2529 = vmatpush.bf16.msra.mxu0 %v2331
        %2530 = vmatpush.bf16.msra.mxu0 %v2325
        %2531 = vmatpush.bf16.msra.mxu0 %v2319
        %2532 = vmatpush.bf16.msra.mxu0 %v2313
        %2533 = vmatpush.bf16.msra.mxu0 %v2307
        %2534 = vmatmul.bf16.gmra.mxu0 %v2247
        %v2535 = vpop.f32.mrf.mxu0
        %v2536 = vadd.f32 %v2517, %v2535
        %v2537 = vpop.f32.mrf.mxu0
        %v2538 = vadd.f32 %v2519, %v2537
        %2539 = vmatmul.bf16.gmra.mxu0 %v2249
        %v2540 = vpop.f32.mrf.mxu0
        %v2541 = vadd.f32 %v2522, %v2540
        %v2542 = vpop.f32.mrf.mxu0
        %v2543 = vadd.f32 %v2524, %v2542
        %2544 = vdwg.mxu0
        %v2545 = vadd.f32 %v2145, %v2460
        %v2546 = vadd.f32 %v2183, %v2498
        %v2547 = vadd.f32 %v2221, %v2536
        %v2548 = vadd.f32 %v2147, %v2462
        %v2549 = vadd.f32 %v2185, %v2500
        %v2550 = vadd.f32 %v2223, %v2538
        %v2551 = vadd.f32 %v2150, %v2465
        %v2552 = vadd.f32 %v2188, %v2503
        %v2553 = vadd.f32 %v2226, %v2541
        %v2554 = vadd.f32 %v2152, %v2467
        %v2555 = vadd.f32 %v2190, %v2505
        %v2556 = vadd.f32 %v2228, %v2543
        %v2557 = vld [vmem:[#allocation7 + $0x60] sm:$0xff]
        %v2558 = vld [vmem:[#allocation7 + $0x68] sm:$0xff]
        %v2559 = vld [vmem:[#allocation7 + $0x70] sm:$0xff]
        %v2560 = vld [vmem:[#allocation7 + $0x78] sm:$0xff]
        %v2565 = vunpack.c.l.b16 %v2557
        %v2566 = vunpack.c.h.b16 %v2557
        %v2567 = vunpack.c.l.b16 %v2558
        %v2568 = vunpack.c.h.b16 %v2558
        %v2569 = vunpack.c.l.b16 %v2559
        %v2570 = vunpack.c.h.b16 %v2559
        %v2571 = vunpack.c.l.b16 %v2560
        %v2572 = vunpack.c.h.b16 %v2560
        %v2573 = vpack.c.b16 %v2567, %v2565
        %v2574 = vpack.c.b16 %v2568, %v2566
        %v2575 = vpack.c.b16 %v2571, %v2569
        %v2576 = vpack.c.b16 %v2572, %v2570
        %2581 = vrot.lane.b32.xlu0 %v1709, 110
        %v2582 = vpop.permute.xlu0 %2581
        %2583 = vrot.lane.b32.xlu0 %v1710, 110
        %v2584 = vpop.permute.xlu0 %2583
        %2585 = vrot.lane.b32.xlu0 %v1711, 110
        %v2586 = vpop.permute.xlu0 %2585
        %2587 = vrot.lane.b32.xlu0 %v1712, 110
        %v2588 = vpop.permute.xlu0 %2587
        %2589 = vrot.lane.b32.xlu0 %v1713, 110
        %v2590 = vpop.permute.xlu0 %2589
        %2591 = vrot.lane.b32.xlu0 %v1714, 110
        %v2592 = vpop.permute.xlu0 %2591
        %2593 = vrot.lane.b32.xlu0 %v1715, 110
        %v2594 = vpop.permute.xlu0 %2593
        %2595 = vrot.lane.b32.xlu0 %v1716, 110
        %v2596 = vpop.permute.xlu0 %2595
        %2597 = vrot.lane.b32.xlu0 %v1717, 110
        %v2598 = vpop.permute.xlu0 %2597
        %2599 = vrot.lane.b32.xlu0 %v1718, 110
        %v2600 = vpop.permute.xlu0 %2599
        %2601 = vrot.lane.b32.xlu0 %v1719, 110
        %v2602 = vpop.permute.xlu0 %2601
        %2603 = vrot.lane.b32.xlu0 %v1720, 110
        %v2604 = vpop.permute.xlu0 %2603
        %2605 = vrot.lane.b32.xlu0 %v1721, 110
        %v2606 = vpop.permute.xlu0 %2605
        %2607 = vrot.lane.b32.xlu0 %v1722, 110
        %v2608 = vpop.permute.xlu0 %2607
        %2609 = vrot.lane.b32.xlu0 %v1723, 110
        %v2610 = vpop.permute.xlu0 %2609
        %2611 = vrot.lane.b32.xlu0 %v1724, 110
        %v2612 = vpop.permute.xlu0 %2611
        %2613 = vrot.lane.b32.xlu0 %v1725, 110
        %v2614 = vpop.permute.xlu0 %2613
        %2615 = vrot.lane.b32.xlu0 %v1726, 110
        %v2616 = vpop.permute.xlu0 %2615
        %2617 = vrot.lane.b32.xlu0 %v1727, 110
        %v2618 = vpop.permute.xlu0 %2617
        %2619 = vrot.lane.b32.xlu0 %v1728, 110
        %v2620 = vpop.permute.xlu0 %2619
        %2621 = vrot.lane.b32.xlu0 %v1729, 110
        %v2622 = vpop.permute.xlu0 %2621
        %2623 = vrot.lane.b32.xlu0 %v1730, 110
        %v2624 = vpop.permute.xlu0 %2623
        %2625 = vrot.lane.b32.xlu0 %v1731, 110
        %v2626 = vpop.permute.xlu0 %2625
        %2627 = vrot.lane.b32.xlu0 %v1732, 110
        %v2628 = vpop.permute.xlu0 %2627
        %2629 = vrot.lane.b32.xlu0 %v1733, 110
        %v2630 = vpop.permute.xlu0 %2629
        %2631 = vrot.lane.b32.xlu0 %v1734, 110
        %v2632 = vpop.permute.xlu0 %2631
        %2633 = vrot.lane.b32.xlu0 %v1735, 110
        %v2634 = vpop.permute.xlu0 %2633
        %2635 = vrot.lane.b32.xlu0 %v1736, 110
        %v2636 = vpop.permute.xlu0 %2635
        %2637 = vrot.lane.b32.xlu0 %v1737, 110
        %v2638 = vpop.permute.xlu0 %2637
        %2639 = vrot.lane.b32.xlu0 %v1738, 110
        %v2640 = vpop.permute.xlu0 %2639
        %2641 = vrot.lane.b32.xlu0 %v1739, 110
        %v2642 = vpop.permute.xlu0 %2641
        %2643 = vrot.lane.b32.xlu0 %v1740, 110
        %v2644 = vpop.permute.xlu0 %2643
        %2645 = vrot.lane.b32.xlu0 %v1741, 110
        %v2646 = vpop.permute.xlu0 %2645
        %2647 = vrot.lane.b32.xlu0 %v1742, 110
        %v2648 = vpop.permute.xlu0 %2647
        %2649 = vrot.lane.b32.xlu0 %v1743, 110
        %v2650 = vpop.permute.xlu0 %2649
        %2651 = vrot.lane.b32.xlu0 %v1744, 110
        %v2652 = vpop.permute.xlu0 %2651
        %2653 = vrot.lane.b32.xlu0 %v1745, 110
        %v2654 = vpop.permute.xlu0 %2653
        %2655 = vrot.lane.b32.xlu0 %v1746, 110
        %v2656 = vpop.permute.xlu0 %2655
        %2657 = vrot.lane.b32.xlu0 %v1747, 110
        %v2658 = vpop.permute.xlu0 %2657
        %2659 = vrot.lane.b32.xlu0 %v1748, 110
        %v2660 = vpop.permute.xlu0 %2659
        %2661 = vrot.lane.b32.xlu0 %v1749, 110
        %v2662 = vpop.permute.xlu0 %2661
        %2663 = vrot.lane.b32.xlu0 %v1750, 110
        %v2664 = vpop.permute.xlu0 %2663
        %2665 = vrot.lane.b32.xlu0 %v1751, 110
        %v2666 = vpop.permute.xlu0 %2665
        %2667 = vrot.lane.b32.xlu0 %v1752, 110
        %v2668 = vpop.permute.xlu0 %2667
        %2669 = vrot.lane.b32.xlu0 %v1753, 110
        %v2670 = vpop.permute.xlu0 %2669
        %2671 = vrot.lane.b32.xlu0 %v1754, 110
        %v2672 = vpop.permute.xlu0 %2671
        %2673 = vrot.lane.b32.xlu0 %v1755, 110
        %v2674 = vpop.permute.xlu0 %2673
        %2675 = vrot.lane.b32.xlu0 %v1756, 110
        %v2676 = vpop.permute.xlu0 %2675
        %vm2677 = vcmask 900096
        %v2678 = vsel %vm2677, %v2582, %v2584
        %v2679 = vsel %vm2677, %v2584, %v2586
        %v2680 = vsel %vm2677, %v2588, %v2590
        %v2681 = vsel %vm2677, %v2590, %v2592
        %v2682 = vsel %vm2677, %v2594, %v2596
        %v2683 = vsel %vm2677, %v2596, %v2598
        %v2684 = vsel %vm2677, %v2600, %v2602
        %v2685 = vsel %vm2677, %v2602, %v2604
        %v2686 = vsel %vm2677, %v2606, %v2608
        %v2687 = vsel %vm2677, %v2608, %v2610
        %v2688 = vsel %vm2677, %v2612, %v2614
        %v2689 = vsel %vm2677, %v2614, %v2616
        %v2690 = vsel %vm2677, %v2618, %v2620
        %v2691 = vsel %vm2677, %v2620, %v2622
        %v2692 = vsel %vm2677, %v2624, %v2626
        %v2693 = vsel %vm2677, %v2626, %v2628
        %v2694 = vsel %vm2677, %v2630, %v2632
        %v2695 = vsel %vm2677, %v2632, %v2634
        %v2696 = vsel %vm2677, %v2636, %v2638
        %v2697 = vsel %vm2677, %v2638, %v2640
        %v2698 = vsel %vm2677, %v2642, %v2644
        %v2699 = vsel %vm2677, %v2644, %v2646
        %v2700 = vsel %vm2677, %v2648, %v2650
        %v2701 = vsel %vm2677, %v2650, %v2652
        %v2702 = vsel %vm2677, %v2654, %v2656
        %v2703 = vsel %vm2677, %v2656, %v2658
        %v2704 = vsel %vm2677, %v2660, %v2662
        %v2705 = vsel %vm2677, %v2662, %v2664
        %v2706 = vsel %vm2677, %v2666, %v2668
        %v2707 = vsel %vm2677, %v2668, %v2670
        %v2708 = vsel %vm2677, %v2672, %v2674
        %v2709 = vsel %vm2677, %v2674, %v2676
        %2758 = vmatpush.bf16.msra.mxu0 %v2692
        %2759 = vmatpush.bf16.msra.mxu0 %v2690
        %2760 = vmatpush.bf16.msra.mxu0 %v2688
        %2761 = vmatpush.bf16.msra.mxu0 %v2686
        %2762 = vmatpush.bf16.msra.mxu0 %v2684
        %2763 = vmatpush.bf16.msra.mxu0 %v2682
        %2764 = vmatpush.bf16.msra.mxu0 %v2680
        %2765 = vmatpush.bf16.msra.mxu0 %v2678
        %2766 = vmatmul.bf16.gmra.mxu0 %v2573
        %v2767 = vpop.f32.mrf.mxu0
        %v2768 = vadd.f32 0.0, %v2767
        %v2769 = vpop.f32.mrf.mxu0
        %v2770 = vadd.f32 0.0, %v2769
        %2771 = vmatmul.bf16.gmra.mxu0 %v2575
        %v2772 = vpop.f32.mrf.mxu0
        %v2773 = vadd.f32 0.0, %v2772
        %v2774 = vpop.f32.mrf.mxu0
        %v2775 = vadd.f32 0.0, %v2774
        %2776 = vdwg.mxu0
        %2777 = vmatpush.bf16.msra.mxu0 %v2708
        %2778 = vmatpush.bf16.msra.mxu0 %v2706
        %2779 = vmatpush.bf16.msra.mxu0 %v2704
        %2780 = vmatpush.bf16.msra.mxu0 %v2702
        %2781 = vmatpush.bf16.msra.mxu0 %v2700
        %2782 = vmatpush.bf16.msra.mxu0 %v2698
        %2783 = vmatpush.bf16.msra.mxu0 %v2696
        %2784 = vmatpush.bf16.msra.mxu0 %v2694
        %2785 = vmatmul.bf16.gmra.mxu0 %v2574
        %v2786 = vpop.f32.mrf.mxu0
        %v2787 = vadd.f32 %v2768, %v2786
        %v2788 = vpop.f32.mrf.mxu0
        %v2789 = vadd.f32 %v2770, %v2788
        %2790 = vmatmul.bf16.gmra.mxu0 %v2576
        %v2791 = vpop.f32.mrf.mxu0
        %v2792 = vadd.f32 %v2773, %v2791
        %v2793 = vpop.f32.mrf.mxu0
        %v2794 = vadd.f32 %v2775, %v2793
        %2795 = vdwg.mxu0
        %2796 = vmatpush.bf16.msra.mxu0 %v2693
        %2797 = vmatpush.bf16.msra.mxu0 %v2691
        %2798 = vmatpush.bf16.msra.mxu0 %v2689
        %2799 = vmatpush.bf16.msra.mxu0 %v2687
        %2800 = vmatpush.bf16.msra.mxu0 %v2685
        %2801 = vmatpush.bf16.msra.mxu0 %v2683
        %2802 = vmatpush.bf16.msra.mxu0 %v2681
        %2803 = vmatpush.bf16.msra.mxu0 %v2679
        %2804 = vmatmul.bf16.gmra.mxu0 %v2573
        %v2805 = vpop.f32.mrf.mxu0
        %v2806 = vadd.f32 0.0, %v2805
        %v2807 = vpop.f32.mrf.mxu0
        %v2808 = vadd.f32 0.0, %v2807
        %2809 = vmatmul.bf16.gmra.mxu0 %v2575
        %v2810 = vpop.f32.mrf.mxu0
        %v2811 = vadd.f32 0.0, %v2810
        %v2812 = vpop.f32.mrf.mxu0
        %v2813 = vadd.f32 0.0, %v2812
        %2814 = vdwg.mxu0
        %2815 = vmatpush.bf16.msra.mxu0 %v2709
        %2816 = vmatpush.bf16.msra.mxu0 %v2707
        %2817 = vmatpush.bf16.msra.mxu0 %v2705
        %2818 = vmatpush.bf16.msra.mxu0 %v2703
        %2819 = vmatpush.bf16.msra.mxu0 %v2701
        %2820 = vmatpush.bf16.msra.mxu0 %v2699
        %2821 = vmatpush.bf16.msra.mxu0 %v2697
        %2822 = vmatpush.bf16.msra.mxu0 %v2695
        %2823 = vmatmul.bf16.gmra.mxu0 %v2574
        %v2824 = vpop.f32.mrf.mxu0
        %v2825 = vadd.f32 %v2806, %v2824
        %v2826 = vpop.f32.mrf.mxu0
        %v2827 = vadd.f32 %v2808, %v2826
        %2828 = vmatmul.bf16.gmra.mxu0 %v2576
        %v2829 = vpop.f32.mrf.mxu0
        %v2830 = vadd.f32 %v2811, %v2829
        %v2831 = vpop.f32.mrf.mxu0
        %v2832 = vadd.f32 %v2813, %v2831
        %2833 = vdwg.mxu0
        %2834 = vmatpush.bf16.msra.mxu0 %v2628
        %2835 = vmatpush.bf16.msra.mxu0 %v2622
        %2836 = vmatpush.bf16.msra.mxu0 %v2616
        %2837 = vmatpush.bf16.msra.mxu0 %v2610
        %2838 = vmatpush.bf16.msra.mxu0 %v2604
        %2839 = vmatpush.bf16.msra.mxu0 %v2598
        %2840 = vmatpush.bf16.msra.mxu0 %v2592
        %2841 = vmatpush.bf16.msra.mxu0 %v2586
        %2842 = vmatmul.bf16.gmra.mxu0 %v2573
        %v2843 = vpop.f32.mrf.mxu0
        %v2844 = vadd.f32 0.0, %v2843
        %v2845 = vpop.f32.mrf.mxu0
        %v2846 = vadd.f32 0.0, %v2845
        %2847 = vmatmul.bf16.gmra.mxu0 %v2575
        %v2848 = vpop.f32.mrf.mxu0
        %v2849 = vadd.f32 0.0, %v2848
        %v2850 = vpop.f32.mrf.mxu0
        %v2851 = vadd.f32 0.0, %v2850
        %2852 = vdwg.mxu0
        %2853 = vmatpush.bf16.msra.mxu0 %v2676
        %2854 = vmatpush.bf16.msra.mxu0 %v2670
        %2855 = vmatpush.bf16.msra.mxu0 %v2664
        %2856 = vmatpush.bf16.msra.mxu0 %v2658
        %2857 = vmatpush.bf16.msra.mxu0 %v2652
        %2858 = vmatpush.bf16.msra.mxu0 %v2646
        %2859 = vmatpush.bf16.msra.mxu0 %v2640
        %2860 = vmatpush.bf16.msra.mxu0 %v2634
        %2861 = vmatmul.bf16.gmra.mxu0 %v2574
        %v2862 = vpop.f32.mrf.mxu0
        %v2863 = vadd.f32 %v2844, %v2862
        %v2864 = vpop.f32.mrf.mxu0
        %v2865 = vadd.f32 %v2846, %v2864
        %2866 = vmatmul.bf16.gmra.mxu0 %v2576
        %v2867 = vpop.f32.mrf.mxu0
        %v2868 = vadd.f32 %v2849, %v2867
        %v2869 = vpop.f32.mrf.mxu0
        %v2870 = vadd.f32 %v2851, %v2869
        %2871 = vdwg.mxu0
        %v2872 = vadd.f32 %v2545, %v2787
        %v2873 = vadd.f32 %v2546, %v2825
        %v2874 = vadd.f32 %v2547, %v2863
        %v2875 = vadd.f32 %v2548, %v2789
        %v2876 = vadd.f32 %v2549, %v2827
        %v2877 = vadd.f32 %v2550, %v2865
        %v2878 = vadd.f32 %v2551, %v2792
        %v2879 = vadd.f32 %v2552, %v2830
        %v2880 = vadd.f32 %v2553, %v2868
        %v2881 = vadd.f32 %v2554, %v2794
        %v2882 = vadd.f32 %v2555, %v2832
        %v2883 = vadd.f32 %v2556, %v2870
        %v2884 = vld [vmem:[#allocation7 + $0x80] sm:$0xff]
        %v2885 = vld [vmem:[#allocation7 + $0x88] sm:$0xff]
        %v2886 = vld [vmem:[#allocation7 + $0x90] sm:$0xff]
        %v2887 = vld [vmem:[#allocation7 + $0x98] sm:$0xff]
        %v2892 = vunpack.c.l.b16 %v2884
        %v2893 = vunpack.c.h.b16 %v2884
        %v2894 = vunpack.c.l.b16 %v2885
        %v2895 = vunpack.c.h.b16 %v2885
        %v2896 = vunpack.c.l.b16 %v2886
        %v2897 = vunpack.c.h.b16 %v2886
        %v2898 = vunpack.c.l.b16 %v2887
        %v2899 = vunpack.c.h.b16 %v2887
        %v2900 = vpack.c.b16 %v2894, %v2892
        %v2901 = vpack.c.b16 %v2895, %v2893
        %v2902 = vpack.c.b16 %v2898, %v2896
        %v2903 = vpack.c.b16 %v2899, %v2897
        %2908 = vrot.lane.b32.xlu0 %v1709, 109
        %v2909 = vpop.permute.xlu0 %2908
        %2910 = vrot.lane.b32.xlu0 %v1710, 109
        %v2911 = vpop.permute.xlu0 %2910
        %2912 = vrot.lane.b32.xlu0 %v1711, 109
        %v2913 = vpop.permute.xlu0 %2912
        %2914 = vrot.lane.b32.xlu0 %v1712, 109
        %v2915 = vpop.permute.xlu0 %2914
        %2916 = vrot.lane.b32.xlu0 %v1713, 109
        %v2917 = vpop.permute.xlu0 %2916
        %2918 = vrot.lane.b32.xlu0 %v1714, 109
        %v2919 = vpop.permute.xlu0 %2918
        %2920 = vrot.lane.b32.xlu0 %v1715, 109
        %v2921 = vpop.permute.xlu0 %2920
        %2922 = vrot.lane.b32.xlu0 %v1716, 109
        %v2923 = vpop.permute.xlu0 %2922
        %2924 = vrot.lane.b32.xlu0 %v1717, 109
        %v2925 = vpop.permute.xlu0 %2924
        %2926 = vrot.lane.b32.xlu0 %v1718, 109
        %v2927 = vpop.permute.xlu0 %2926
        %2928 = vrot.lane.b32.xlu0 %v1719, 109
        %v2929 = vpop.permute.xlu0 %2928
        %2930 = vrot.lane.b32.xlu0 %v1720, 109
        %v2931 = vpop.permute.xlu0 %2930
        %2932 = vrot.lane.b32.xlu0 %v1721, 109
        %v2933 = vpop.permute.xlu0 %2932
        %2934 = vrot.lane.b32.xlu0 %v1722, 109
        %v2935 = vpop.permute.xlu0 %2934
        %2936 = vrot.lane.b32.xlu0 %v1723, 109
        %v2937 = vpop.permute.xlu0 %2936
        %2938 = vrot.lane.b32.xlu0 %v1724, 109
        %v2939 = vpop.permute.xlu0 %2938
        %2940 = vrot.lane.b32.xlu0 %v1725, 109
        %v2941 = vpop.permute.xlu0 %2940
        %2942 = vrot.lane.b32.xlu0 %v1726, 109
        %v2943 = vpop.permute.xlu0 %2942
        %2944 = vrot.lane.b32.xlu0 %v1727, 109
        %v2945 = vpop.permute.xlu0 %2944
        %2946 = vrot.lane.b32.xlu0 %v1728, 109
        %v2947 = vpop.permute.xlu0 %2946
        %2948 = vrot.lane.b32.xlu0 %v1729, 109
        %v2949 = vpop.permute.xlu0 %2948
        %2950 = vrot.lane.b32.xlu0 %v1730, 109
        %v2951 = vpop.permute.xlu0 %2950
        %2952 = vrot.lane.b32.xlu0 %v1731, 109
        %v2953 = vpop.permute.xlu0 %2952
        %2954 = vrot.lane.b32.xlu0 %v1732, 109
        %v2955 = vpop.permute.xlu0 %2954
        %2956 = vrot.lane.b32.xlu0 %v1733, 109
        %v2957 = vpop.permute.xlu0 %2956
        %2958 = vrot.lane.b32.xlu0 %v1734, 109
        %v2959 = vpop.permute.xlu0 %2958
        %2960 = vrot.lane.b32.xlu0 %v1735, 109
        %v2961 = vpop.permute.xlu0 %2960
        %2962 = vrot.lane.b32.xlu0 %v1736, 109
        %v2963 = vpop.permute.xlu0 %2962
        %2964 = vrot.lane.b32.xlu0 %v1737, 109
        %v2965 = vpop.permute.xlu0 %2964
        %2966 = vrot.lane.b32.xlu0 %v1738, 109
        %v2967 = vpop.permute.xlu0 %2966
        %2968 = vrot.lane.b32.xlu0 %v1739, 109
        %v2969 = vpop.permute.xlu0 %2968
        %2970 = vrot.lane.b32.xlu0 %v1740, 109
        %v2971 = vpop.permute.xlu0 %2970
        %2972 = vrot.lane.b32.xlu0 %v1741, 109
        %v2973 = vpop.permute.xlu0 %2972
        %2974 = vrot.lane.b32.xlu0 %v1742, 109
        %v2975 = vpop.permute.xlu0 %2974
        %2976 = vrot.lane.b32.xlu0 %v1743, 109
        %v2977 = vpop.permute.xlu0 %2976
        %2978 = vrot.lane.b32.xlu0 %v1744, 109
        %v2979 = vpop.permute.xlu0 %2978
        %2980 = vrot.lane.b32.xlu0 %v1745, 109
        %v2981 = vpop.permute.xlu0 %2980
        %2982 = vrot.lane.b32.xlu0 %v1746, 109
        %v2983 = vpop.permute.xlu0 %2982
        %2984 = vrot.lane.b32.xlu0 %v1747, 109
        %v2985 = vpop.permute.xlu0 %2984
        %2986 = vrot.lane.b32.xlu0 %v1748, 109
        %v2987 = vpop.permute.xlu0 %2986
        %2988 = vrot.lane.b32.xlu0 %v1749, 109
        %v2989 = vpop.permute.xlu0 %2988
        %2990 = vrot.lane.b32.xlu0 %v1750, 109
        %v2991 = vpop.permute.xlu0 %2990
        %2992 = vrot.lane.b32.xlu0 %v1751, 109
        %v2993 = vpop.permute.xlu0 %2992
        %2994 = vrot.lane.b32.xlu0 %v1752, 109
        %v2995 = vpop.permute.xlu0 %2994
        %2996 = vrot.lane.b32.xlu0 %v1753, 109
        %v2997 = vpop.permute.xlu0 %2996
        %2998 = vrot.lane.b32.xlu0 %v1754, 109
        %v2999 = vpop.permute.xlu0 %2998
        %3000 = vrot.lane.b32.xlu0 %v1755, 109
        %v3001 = vpop.permute.xlu0 %3000
        %3002 = vrot.lane.b32.xlu0 %v1756, 109
        %v3003 = vpop.permute.xlu0 %3002
        %vm3004 = vcmask 891904
        %v3005 = vsel %vm3004, %v2909, %v2911
        %v3006 = vsel %vm3004, %v2911, %v2913
        %v3007 = vsel %vm3004, %v2915, %v2917
        %v3008 = vsel %vm3004, %v2917, %v2919
        %v3009 = vsel %vm3004, %v2921, %v2923
        %v3010 = vsel %vm3004, %v2923, %v2925
        %v3011 = vsel %vm3004, %v2927, %v2929
        %v3012 = vsel %vm3004, %v2929, %v2931
        %v3013 = vsel %vm3004, %v2933, %v2935
        %v3014 = vsel %vm3004, %v2935, %v2937
        %v3015 = vsel %vm3004, %v2939, %v2941
        %v3016 = vsel %vm3004, %v2941, %v2943
        %v3017 = vsel %vm3004, %v2945, %v2947
        %v3018 = vsel %vm3004, %v2947, %v2949
        %v3019 = vsel %vm3004, %v2951, %v2953
        %v3020 = vsel %vm3004, %v2953, %v2955
        %v3021 = vsel %vm3004, %v2957, %v2959
        %v3022 = vsel %vm3004, %v2959, %v2961
        %v3023 = vsel %vm3004, %v2963, %v2965
        %v3024 = vsel %vm3004, %v2965, %v2967
        %v3025 = vsel %vm3004, %v2969, %v2971
        %v3026 = vsel %vm3004, %v2971, %v2973
        %v3027 = vsel %vm3004, %v2975, %v2977
        %v3028 = vsel %vm3004, %v2977, %v2979
        %v3029 = vsel %vm3004, %v2981, %v2983
        %v3030 = vsel %vm3004, %v2983, %v2985
        %v3031 = vsel %vm3004, %v2987, %v2989
        %v3032 = vsel %vm3004, %v2989, %v2991
        %v3033 = vsel %vm3004, %v2993, %v2995
        %v3034 = vsel %vm3004, %v2995, %v2997
        %v3035 = vsel %vm3004, %v2999, %v3001
        %v3036 = vsel %vm3004, %v3001, %v3003
        %3085 = vmatpush.bf16.msra.mxu0 %v3019
        %3086 = vmatpush.bf16.msra.mxu0 %v3017
        %3087 = vmatpush.bf16.msra.mxu0 %v3015
        %3088 = vmatpush.bf16.msra.mxu0 %v3013
        %3089 = vmatpush.bf16.msra.mxu0 %v3011
        %3090 = vmatpush.bf16.msra.mxu0 %v3009
        %3091 = vmatpush.bf16.msra.mxu0 %v3007
        %3092 = vmatpush.bf16.msra.mxu0 %v3005
        %3093 = vmatmul.bf16.gmra.mxu0 %v2900
        %v3094 = vpop.f32.mrf.mxu0
        %v3095 = vadd.f32 0.0, %v3094
        %v3096 = vpop.f32.mrf.mxu0
        %v3097 = vadd.f32 0.0, %v3096
        %3098 = vmatmul.bf16.gmra.mxu0 %v2902
        %v3099 = vpop.f32.mrf.mxu0
        %v3100 = vadd.f32 0.0, %v3099
        %v3101 = vpop.f32.mrf.mxu0
        %v3102 = vadd.f32 0.0, %v3101
        %3103 = vdwg.mxu0
        %3104 = vmatpush.bf16.msra.mxu0 %v3035
        %3105 = vmatpush.bf16.msra.mxu0 %v3033
        %3106 = vmatpush.bf16.msra.mxu0 %v3031
        %3107 = vmatpush.bf16.msra.mxu0 %v3029
        %3108 = vmatpush.bf16.msra.mxu0 %v3027
        %3109 = vmatpush.bf16.msra.mxu0 %v3025
        %3110 = vmatpush.bf16.msra.mxu0 %v3023
        %3111 = vmatpush.bf16.msra.mxu0 %v3021
        %3112 = vmatmul.bf16.gmra.mxu0 %v2901
        %v3113 = vpop.f32.mrf.mxu0
        %v3114 = vadd.f32 %v3095, %v3113
        %v3115 = vpop.f32.mrf.mxu0
        %v3116 = vadd.f32 %v3097, %v3115
        %3117 = vmatmul.bf16.gmra.mxu0 %v2903
        %v3118 = vpop.f32.mrf.mxu0
        %v3119 = vadd.f32 %v3100, %v3118
        %v3120 = vpop.f32.mrf.mxu0
        %v3121 = vadd.f32 %v3102, %v3120
        %3122 = vdwg.mxu0
        %3123 = vmatpush.bf16.msra.mxu0 %v3020
        %3124 = vmatpush.bf16.msra.mxu0 %v3018
        %3125 = vmatpush.bf16.msra.mxu0 %v3016
        %3126 = vmatpush.bf16.msra.mxu0 %v3014
        %3127 = vmatpush.bf16.msra.mxu0 %v3012
        %3128 = vmatpush.bf16.msra.mxu0 %v3010
        %3129 = vmatpush.bf16.msra.mxu0 %v3008
        %3130 = vmatpush.bf16.msra.mxu0 %v3006
        %3131 = vmatmul.bf16.gmra.mxu0 %v2900
        %v3132 = vpop.f32.mrf.mxu0
        %v3133 = vadd.f32 0.0, %v3132
        %v3134 = vpop.f32.mrf.mxu0
        %v3135 = vadd.f32 0.0, %v3134
        %3136 = vmatmul.bf16.gmra.mxu0 %v2902
        %v3137 = vpop.f32.mrf.mxu0
        %v3138 = vadd.f32 0.0, %v3137
        %v3139 = vpop.f32.mrf.mxu0
        %v3140 = vadd.f32 0.0, %v3139
        %3141 = vdwg.mxu0
        %3142 = vmatpush.bf16.msra.mxu0 %v3036
        %3143 = vmatpush.bf16.msra.mxu0 %v3034
        %3144 = vmatpush.bf16.msra.mxu0 %v3032
        %3145 = vmatpush.bf16.msra.mxu0 %v3030
        %3146 = vmatpush.bf16.msra.mxu0 %v3028
        %3147 = vmatpush.bf16.msra.mxu0 %v3026
        %3148 = vmatpush.bf16.msra.mxu0 %v3024
        %3149 = vmatpush.bf16.msra.mxu0 %v3022
        %3150 = vmatmul.bf16.gmra.mxu0 %v2901
        %v3151 = vpop.f32.mrf.mxu0
        %v3152 = vadd.f32 %v3133, %v3151
        %v3153 = vpop.f32.mrf.mxu0
        %v3154 = vadd.f32 %v3135, %v3153
        %3155 = vmatmul.bf16.gmra.mxu0 %v2903
        %v3156 = vpop.f32.mrf.mxu0
        %v3157 = vadd.f32 %v3138, %v3156
        %v3158 = vpop.f32.mrf.mxu0
        %v3159 = vadd.f32 %v3140, %v3158
        %3160 = vdwg.mxu0
        %3161 = vmatpush.bf16.msra.mxu0 %v2955
        %3162 = vmatpush.bf16.msra.mxu0 %v2949
        %3163 = vmatpush.bf16.msra.mxu0 %v2943
        %3164 = vmatpush.bf16.msra.mxu0 %v2937
        %3165 = vmatpush.bf16.msra.mxu0 %v2931
        %3166 = vmatpush.bf16.msra.mxu0 %v2925
        %3167 = vmatpush.bf16.msra.mxu0 %v2919
        %3168 = vmatpush.bf16.msra.mxu0 %v2913
        %3169 = vmatmul.bf16.gmra.mxu0 %v2900
        %v3170 = vpop.f32.mrf.mxu0
        %v3171 = vadd.f32 0.0, %v3170
        %v3172 = vpop.f32.mrf.mxu0
        %v3173 = vadd.f32 0.0, %v3172
        %3174 = vmatmul.bf16.gmra.mxu0 %v2902
        %v3175 = vpop.f32.mrf.mxu0
        %v3176 = vadd.f32 0.0, %v3175
        %v3177 = vpop.f32.mrf.mxu0
        %v3178 = vadd.f32 0.0, %v3177
        %3179 = vdwg.mxu0
        %3180 = vmatpush.bf16.msra.mxu0 %v3003
        %3181 = vmatpush.bf16.msra.mxu0 %v2997
        %3182 = vmatpush.bf16.msra.mxu0 %v2991
        %3183 = vmatpush.bf16.msra.mxu0 %v2985
        %3184 = vmatpush.bf16.msra.mxu0 %v2979
        %3185 = vmatpush.bf16.msra.mxu0 %v2973
        %3186 = vmatpush.bf16.msra.mxu0 %v2967
        %3187 = vmatpush.bf16.msra.mxu0 %v2961
        %3188 = vmatmul.bf16.gmra.mxu0 %v2901
        %v3189 = vpop.f32.mrf.mxu0
        %v3190 = vadd.f32 %v3171, %v3189
        %v3191 = vpop.f32.mrf.mxu0
        %v3192 = vadd.f32 %v3173, %v3191
        %3193 = vmatmul.bf16.gmra.mxu0 %v2903
        %v3194 = vpop.f32.mrf.mxu0
        %v3195 = vadd.f32 %v3176, %v3194
        %v3196 = vpop.f32.mrf.mxu0
        %v3197 = vadd.f32 %v3178, %v3196
        %3198 = vdwg.mxu0
        %v3199 = vadd.f32 %v2872, %v3114
        %v3200 = vadd.f32 %v2873, %v3152
        %v3201 = vadd.f32 %v2874, %v3190
        %v3202 = vadd.f32 %v2875, %v3116
        %v3203 = vadd.f32 %v2876, %v3154
        %v3204 = vadd.f32 %v2877, %v3192
        %v3205 = vadd.f32 %v2878, %v3119
        %v3206 = vadd.f32 %v2879, %v3157
        %v3207 = vadd.f32 %v2880, %v3195
        %v3208 = vadd.f32 %v2881, %v3121
        %v3209 = vadd.f32 %v2882, %v3159
        %v3210 = vadd.f32 %v2883, %v3197
        %v3211 = vld [vmem:[#allocation7 + $0xa0] sm:$0xff]
        %v3212 = vld [vmem:[#allocation7 + $0xa8] sm:$0xff]
        %v3213 = vld [vmem:[#allocation7 + $0xb0] sm:$0xff]
        %v3214 = vld [vmem:[#allocation7 + $0xb8] sm:$0xff]
        %v3219 = vunpack.c.l.b16 %v3211
        %v3220 = vunpack.c.h.b16 %v3211
        %v3221 = vunpack.c.l.b16 %v3212
        %v3222 = vunpack.c.h.b16 %v3212
        %v3223 = vunpack.c.l.b16 %v3213
        %v3224 = vunpack.c.h.b16 %v3213
        %v3225 = vunpack.c.l.b16 %v3214
        %v3226 = vunpack.c.h.b16 %v3214
        %v3227 = vpack.c.b16 %v3221, %v3219
        %v3228 = vpack.c.b16 %v3222, %v3220
        %v3229 = vpack.c.b16 %v3225, %v3223
        %v3230 = vpack.c.b16 %v3226, %v3224
        %3235 = vrot.lane.b32.xlu0 %v1709, 108
        %v3236 = vpop.permute.xlu0 %3235
        %3237 = vrot.lane.b32.xlu0 %v1710, 108
        %v3238 = vpop.permute.xlu0 %3237
        %3239 = vrot.lane.b32.xlu0 %v1711, 108
        %v3240 = vpop.permute.xlu0 %3239
        %3241 = vrot.lane.b32.xlu0 %v1712, 108
        %v3242 = vpop.permute.xlu0 %3241
        %3243 = vrot.lane.b32.xlu0 %v1713, 108
        %v3244 = vpop.permute.xlu0 %3243
        %3245 = vrot.lane.b32.xlu0 %v1714, 108
        %v3246 = vpop.permute.xlu0 %3245
        %3247 = vrot.lane.b32.xlu0 %v1715, 108
        %v3248 = vpop.permute.xlu0 %3247
        %3249 = vrot.lane.b32.xlu0 %v1716, 108
        %v3250 = vpop.permute.xlu0 %3249
        %3251 = vrot.lane.b32.xlu0 %v1717, 108
        %v3252 = vpop.permute.xlu0 %3251
        %3253 = vrot.lane.b32.xlu0 %v1718, 108
        %v3254 = vpop.permute.xlu0 %3253
        %3255 = vrot.lane.b32.xlu0 %v1719, 108
        %v3256 = vpop.permute.xlu0 %3255
        %3257 = vrot.lane.b32.xlu0 %v1720, 108
        %v3258 = vpop.permute.xlu0 %3257
        %3259 = vrot.lane.b32.xlu0 %v1721, 108
        %v3260 = vpop.permute.xlu0 %3259
        %3261 = vrot.lane.b32.xlu0 %v1722, 108
        %v3262 = vpop.permute.xlu0 %3261
        %3263 = vrot.lane.b32.xlu0 %v1723, 108
        %v3264 = vpop.permute.xlu0 %3263
        %3265 = vrot.lane.b32.xlu0 %v1724, 108
        %v3266 = vpop.permute.xlu0 %3265
        %3267 = vrot.lane.b32.xlu0 %v1725, 108
        %v3268 = vpop.permute.xlu0 %3267
        %3269 = vrot.lane.b32.xlu0 %v1726, 108
        %v3270 = vpop.permute.xlu0 %3269
        %3271 = vrot.lane.b32.xlu0 %v1727, 108
        %v3272 = vpop.permute.xlu0 %3271
        %3273 = vrot.lane.b32.xlu0 %v1728, 108
        %v3274 = vpop.permute.xlu0 %3273
        %3275 = vrot.lane.b32.xlu0 %v1729, 108
        %v3276 = vpop.permute.xlu0 %3275
        %3277 = vrot.lane.b32.xlu0 %v1730, 108
        %v3278 = vpop.permute.xlu0 %3277
        %3279 = vrot.lane.b32.xlu0 %v1731, 108
        %v3280 = vpop.permute.xlu0 %3279
        %3281 = vrot.lane.b32.xlu0 %v1732, 108
        %v3282 = vpop.permute.xlu0 %3281
        %3283 = vrot.lane.b32.xlu0 %v1733, 108
        %v3284 = vpop.permute.xlu0 %3283
        %3285 = vrot.lane.b32.xlu0 %v1734, 108
        %v3286 = vpop.permute.xlu0 %3285
        %3287 = vrot.lane.b32.xlu0 %v1735, 108
        %v3288 = vpop.permute.xlu0 %3287
        %3289 = vrot.lane.b32.xlu0 %v1736, 108
        %v3290 = vpop.permute.xlu0 %3289
        %3291 = vrot.lane.b32.xlu0 %v1737, 108
        %v3292 = vpop.permute.xlu0 %3291
        %3293 = vrot.lane.b32.xlu0 %v1738, 108
        %v3294 = vpop.permute.xlu0 %3293
        %3295 = vrot.lane.b32.xlu0 %v1739, 108
        %v3296 = vpop.permute.xlu0 %3295
        %3297 = vrot.lane.b32.xlu0 %v1740, 108
        %v3298 = vpop.permute.xlu0 %3297
        %3299 = vrot.lane.b32.xlu0 %v1741, 108
        %v3300 = vpop.permute.xlu0 %3299
        %3301 = vrot.lane.b32.xlu0 %v1742, 108
        %v3302 = vpop.permute.xlu0 %3301
        %3303 = vrot.lane.b32.xlu0 %v1743, 108
        %v3304 = vpop.permute.xlu0 %3303
        %3305 = vrot.lane.b32.xlu0 %v1744, 108
        %v3306 = vpop.permute.xlu0 %3305
        %3307 = vrot.lane.b32.xlu0 %v1745, 108
        %v3308 = vpop.permute.xlu0 %3307
        %3309 = vrot.lane.b32.xlu0 %v1746, 108
        %v3310 = vpop.permute.xlu0 %3309
        %3311 = vrot.lane.b32.xlu0 %v1747, 108
        %v3312 = vpop.permute.xlu0 %3311
        %3313 = vrot.lane.b32.xlu0 %v1748, 108
        %v3314 = vpop.permute.xlu0 %3313
        %3315 = vrot.lane.b32.xlu0 %v1749, 108
        %v3316 = vpop.permute.xlu0 %3315
        %3317 = vrot.lane.b32.xlu0 %v1750, 108
        %v3318 = vpop.permute.xlu0 %3317
        %3319 = vrot.lane.b32.xlu0 %v1751, 108
        %v3320 = vpop.permute.xlu0 %3319
        %3321 = vrot.lane.b32.xlu0 %v1752, 108
        %v3322 = vpop.permute.xlu0 %3321
        %3323 = vrot.lane.b32.xlu0 %v1753, 108
        %v3324 = vpop.permute.xlu0 %3323
        %3325 = vrot.lane.b32.xlu0 %v1754, 108
        %v3326 = vpop.permute.xlu0 %3325
        %3327 = vrot.lane.b32.xlu0 %v1755, 108
        %v3328 = vpop.permute.xlu0 %3327
        %3329 = vrot.lane.b32.xlu0 %v1756, 108
        %v3330 = vpop.permute.xlu0 %3329
        %vm3331 = vcmask 883712
        %v3332 = vsel %vm3331, %v3236, %v3238
        %v3333 = vsel %vm3331, %v3238, %v3240
        %v3334 = vsel %vm3331, %v3242, %v3244
        %v3335 = vsel %vm3331, %v3244, %v3246
        %v3336 = vsel %vm3331, %v3248, %v3250
        %v3337 = vsel %vm3331, %v3250, %v3252
        %v3338 = vsel %vm3331, %v3254, %v3256
        %v3339 = vsel %vm3331, %v3256, %v3258
        %v3340 = vsel %vm3331, %v3260, %v3262
        %v3341 = vsel %vm3331, %v3262, %v3264
        %v3342 = vsel %vm3331, %v3266, %v3268
        %v3343 = vsel %vm3331, %v3268, %v3270
        %v3344 = vsel %vm3331, %v3272, %v3274
        %v3345 = vsel %vm3331, %v3274, %v3276
        %v3346 = vsel %vm3331, %v3278, %v3280
        %v3347 = vsel %vm3331, %v3280, %v3282
        %v3348 = vsel %vm3331, %v3284, %v3286
        %v3349 = vsel %vm3331, %v3286, %v3288
        %v3350 = vsel %vm3331, %v3290, %v3292
        %v3351 = vsel %vm3331, %v3292, %v3294
        %v3352 = vsel %vm3331, %v3296, %v3298
        %v3353 = vsel %vm3331, %v3298, %v3300
        %v3354 = vsel %vm3331, %v3302, %v3304
        %v3355 = vsel %vm3331, %v3304, %v3306
        %v3356 = vsel %vm3331, %v3308, %v3310
        %v3357 = vsel %vm3331, %v3310, %v3312
        %v3358 = vsel %vm3331, %v3314, %v3316
        %v3359 = vsel %vm3331, %v3316, %v3318
        %v3360 = vsel %vm3331, %v3320, %v3322
        %v3361 = vsel %vm3331, %v3322, %v3324
        %v3362 = vsel %vm3331, %v3326, %v3328
        %v3363 = vsel %vm3331, %v3328, %v3330
        %3412 = vmatpush.bf16.msra.mxu0 %v3346
        %3413 = vmatpush.bf16.msra.mxu0 %v3344
        %3414 = vmatpush.bf16.msra.mxu0 %v3342
        %3415 = vmatpush.bf16.msra.mxu0 %v3340
        %3416 = vmatpush.bf16.msra.mxu0 %v3338
        %3417 = vmatpush.bf16.msra.mxu0 %v3336
        %3418 = vmatpush.bf16.msra.mxu0 %v3334
        %3419 = vmatpush.bf16.msra.mxu0 %v3332
        %3420 = vmatmul.bf16.gmra.mxu0 %v3227
        %v3421 = vpop.f32.mrf.mxu0
        %v3422 = vadd.f32 0.0, %v3421
        %v3423 = vpop.f32.mrf.mxu0
        %v3424 = vadd.f32 0.0, %v3423
        %3425 = vmatmul.bf16.gmra.mxu0 %v3229
        %v3426 = vpop.f32.mrf.mxu0
        %v3427 = vadd.f32 0.0, %v3426
        %v3428 = vpop.f32.mrf.mxu0
        %v3429 = vadd.f32 0.0, %v3428
        %3430 = vdwg.mxu0
        %3431 = vmatpush.bf16.msra.mxu0 %v3362
        %3432 = vmatpush.bf16.msra.mxu0 %v3360
        %3433 = vmatpush.bf16.msra.mxu0 %v3358
        %3434 = vmatpush.bf16.msra.mxu0 %v3356
        %3435 = vmatpush.bf16.msra.mxu0 %v3354
        %3436 = vmatpush.bf16.msra.mxu0 %v3352
        %3437 = vmatpush.bf16.msra.mxu0 %v3350
        %3438 = vmatpush.bf16.msra.mxu0 %v3348
        %3439 = vmatmul.bf16.gmra.mxu0 %v3228
        %v3440 = vpop.f32.mrf.mxu0
        %v3441 = vadd.f32 %v3422, %v3440
        %v3442 = vpop.f32.mrf.mxu0
        %v3443 = vadd.f32 %v3424, %v3442
        %3444 = vmatmul.bf16.gmra.mxu0 %v3230
        %v3445 = vpop.f32.mrf.mxu0
        %v3446 = vadd.f32 %v3427, %v3445
        %v3447 = vpop.f32.mrf.mxu0
        %v3448 = vadd.f32 %v3429, %v3447
        %3449 = vdwg.mxu0
        %3450 = vmatpush.bf16.msra.mxu0 %v3347
        %3451 = vmatpush.bf16.msra.mxu0 %v3345
        %3452 = vmatpush.bf16.msra.mxu0 %v3343
        %3453 = vmatpush.bf16.msra.mxu0 %v3341
        %3454 = vmatpush.bf16.msra.mxu0 %v3339
        %3455 = vmatpush.bf16.msra.mxu0 %v3337
        %3456 = vmatpush.bf16.msra.mxu0 %v3335
        %3457 = vmatpush.bf16.msra.mxu0 %v3333
        %3458 = vmatmul.bf16.gmra.mxu0 %v3227
        %v3459 = vpop.f32.mrf.mxu0
        %v3460 = vadd.f32 0.0, %v3459
        %v3461 = vpop.f32.mrf.mxu0
        %v3462 = vadd.f32 0.0, %v3461
        %3463 = vmatmul.bf16.gmra.mxu0 %v3229
        %v3464 = vpop.f32.mrf.mxu0
        %v3465 = vadd.f32 0.0, %v3464
        %v3466 = vpop.f32.mrf.mxu0
        %v3467 = vadd.f32 0.0, %v3466
        %3468 = vdwg.mxu0
        %3469 = vmatpush.bf16.msra.mxu0 %v3363
        %3470 = vmatpush.bf16.msra.mxu0 %v3361
        %3471 = vmatpush.bf16.msra.mxu0 %v3359
        %3472 = vmatpush.bf16.msra.mxu0 %v3357
        %3473 = vmatpush.bf16.msra.mxu0 %v3355
        %3474 = vmatpush.bf16.msra.mxu0 %v3353
        %3475 = vmatpush.bf16.msra.mxu0 %v3351
        %3476 = vmatpush.bf16.msra.mxu0 %v3349
        %3477 = vmatmul.bf16.gmra.mxu0 %v3228
        %v3478 = vpop.f32.mrf.mxu0
        %v3479 = vadd.f32 %v3460, %v3478
        %v3480 = vpop.f32.mrf.mxu0
        %v3481 = vadd.f32 %v3462, %v3480
        %3482 = vmatmul.bf16.gmra.mxu0 %v3230
        %v3483 = vpop.f32.mrf.mxu0
        %v3484 = vadd.f32 %v3465, %v3483
        %v3485 = vpop.f32.mrf.mxu0
        %v3486 = vadd.f32 %v3467, %v3485
        %3487 = vdwg.mxu0
        %3488 = vmatpush.bf16.msra.mxu0 %v3282
        %3489 = vmatpush.bf16.msra.mxu0 %v3276
        %3490 = vmatpush.bf16.msra.mxu0 %v3270
        %3491 = vmatpush.bf16.msra.mxu0 %v3264
        %3492 = vmatpush.bf16.msra.mxu0 %v3258
        %3493 = vmatpush.bf16.msra.mxu0 %v3252
        %3494 = vmatpush.bf16.msra.mxu0 %v3246
        %3495 = vmatpush.bf16.msra.mxu0 %v3240
        %3496 = vmatmul.bf16.gmra.mxu0 %v3227
        %v3497 = vpop.f32.mrf.mxu0
        %v3498 = vadd.f32 0.0, %v3497
        %v3499 = vpop.f32.mrf.mxu0
        %v3500 = vadd.f32 0.0, %v3499
        %3501 = vmatmul.bf16.gmra.mxu0 %v3229
        %v3502 = vpop.f32.mrf.mxu0
        %v3503 = vadd.f32 0.0, %v3502
        %v3504 = vpop.f32.mrf.mxu0
        %v3505 = vadd.f32 0.0, %v3504
        %3506 = vdwg.mxu0
        %3507 = vmatpush.bf16.msra.mxu0 %v3330
        %3508 = vmatpush.bf16.msra.mxu0 %v3324
        %3509 = vmatpush.bf16.msra.mxu0 %v3318
        %3510 = vmatpush.bf16.msra.mxu0 %v3312
        %3511 = vmatpush.bf16.msra.mxu0 %v3306
        %3512 = vmatpush.bf16.msra.mxu0 %v3300
        %3513 = vmatpush.bf16.msra.mxu0 %v3294
        %3514 = vmatpush.bf16.msra.mxu0 %v3288
        %3515 = vmatmul.bf16.gmra.mxu0 %v3228
        %v3516 = vpop.f32.mrf.mxu0
        %v3517 = vadd.f32 %v3498, %v3516
        %v3518 = vpop.f32.mrf.mxu0
        %v3519 = vadd.f32 %v3500, %v3518
        %3520 = vmatmul.bf16.gmra.mxu0 %v3230
        %v3521 = vpop.f32.mrf.mxu0
        %v3522 = vadd.f32 %v3503, %v3521
        %v3523 = vpop.f32.mrf.mxu0
        %v3524 = vadd.f32 %v3505, %v3523
        %3525 = vdwg.mxu0
        %v3526 = vadd.f32 %v3199, %v3441
        %v3527 = vadd.f32 %v3200, %v3479
        %v3528 = vadd.f32 %v3201, %v3517
        %v3529 = vadd.f32 %v3202, %v3443
        %v3530 = vadd.f32 %v3203, %v3481
        %v3531 = vadd.f32 %v3204, %v3519
        %v3532 = vadd.f32 %v3205, %v3446
        %v3533 = vadd.f32 %v3206, %v3484
        %v3534 = vadd.f32 %v3207, %v3522
        %v3535 = vadd.f32 %v3208, %v3448
        %v3536 = vadd.f32 %v3209, %v3486
        %v3537 = vadd.f32 %v3210, %v3524
        %v3538 = vld [vmem:[#allocation7 + $0xc0] sm:$0xff]
        %v3539 = vld [vmem:[#allocation7 + $0xc8] sm:$0xff]
        %v3540 = vld [vmem:[#allocation7 + $0xd0] sm:$0xff]
        %v3541 = vld [vmem:[#allocation7 + $0xd8] sm:$0xff]
        %v3546 = vunpack.c.l.b16 %v3538
        %v3547 = vunpack.c.h.b16 %v3538
        %v3548 = vunpack.c.l.b16 %v3539
        %v3549 = vunpack.c.h.b16 %v3539
        %v3550 = vunpack.c.l.b16 %v3540
        %v3551 = vunpack.c.h.b16 %v3540
        %v3552 = vunpack.c.l.b16 %v3541
        %v3553 = vunpack.c.h.b16 %v3541
        %v3554 = vpack.c.b16 %v3548, %v3546
        %v3555 = vpack.c.b16 %v3549, %v3547
        %v3556 = vpack.c.b16 %v3552, %v3550
        %v3557 = vpack.c.b16 %v3553, %v3551
        %3562 = vrot.lane.b32.xlu0 %v1709, 92
        %v3563 = vpop.permute.xlu0 %3562
        %3564 = vrot.lane.b32.xlu0 %v1710, 92
        %v3565 = vpop.permute.xlu0 %3564
        %3566 = vrot.lane.b32.xlu0 %v1711, 92
        %v3567 = vpop.permute.xlu0 %3566
        %3568 = vrot.lane.b32.xlu0 %v1712, 92
        %v3569 = vpop.permute.xlu0 %3568
        %3570 = vrot.lane.b32.xlu0 %v1713, 92
        %v3571 = vpop.permute.xlu0 %3570
        %3572 = vrot.lane.b32.xlu0 %v1714, 92
        %v3573 = vpop.permute.xlu0 %3572
        %3574 = vrot.lane.b32.xlu0 %v1715, 92
        %v3575 = vpop.permute.xlu0 %3574
        %3576 = vrot.lane.b32.xlu0 %v1716, 92
        %v3577 = vpop.permute.xlu0 %3576
        %3578 = vrot.lane.b32.xlu0 %v1717, 92
        %v3579 = vpop.permute.xlu0 %3578
        %3580 = vrot.lane.b32.xlu0 %v1718, 92
        %v3581 = vpop.permute.xlu0 %3580
        %3582 = vrot.lane.b32.xlu0 %v1719, 92
        %v3583 = vpop.permute.xlu0 %3582
        %3584 = vrot.lane.b32.xlu0 %v1720, 92
        %v3585 = vpop.permute.xlu0 %3584
        %3586 = vrot.lane.b32.xlu0 %v1721, 92
        %v3587 = vpop.permute.xlu0 %3586
        %3588 = vrot.lane.b32.xlu0 %v1722, 92
        %v3589 = vpop.permute.xlu0 %3588
        %3590 = vrot.lane.b32.xlu0 %v1723, 92
        %v3591 = vpop.permute.xlu0 %3590
        %3592 = vrot.lane.b32.xlu0 %v1724, 92
        %v3593 = vpop.permute.xlu0 %3592
        %3594 = vrot.lane.b32.xlu0 %v1725, 92
        %v3595 = vpop.permute.xlu0 %3594
        %3596 = vrot.lane.b32.xlu0 %v1726, 92
        %v3597 = vpop.permute.xlu0 %3596
        %3598 = vrot.lane.b32.xlu0 %v1727, 92
        %v3599 = vpop.permute.xlu0 %3598
        %3600 = vrot.lane.b32.xlu0 %v1728, 92
        %v3601 = vpop.permute.xlu0 %3600
        %3602 = vrot.lane.b32.xlu0 %v1729, 92
        %v3603 = vpop.permute.xlu0 %3602
        %3604 = vrot.lane.b32.xlu0 %v1730, 92
        %v3605 = vpop.permute.xlu0 %3604
        %3606 = vrot.lane.b32.xlu0 %v1731, 92
        %v3607 = vpop.permute.xlu0 %3606
        %3608 = vrot.lane.b32.xlu0 %v1732, 92
        %v3609 = vpop.permute.xlu0 %3608
        %3610 = vrot.lane.b32.xlu0 %v1733, 92
        %v3611 = vpop.permute.xlu0 %3610
        %3612 = vrot.lane.b32.xlu0 %v1734, 92
        %v3613 = vpop.permute.xlu0 %3612
        %3614 = vrot.lane.b32.xlu0 %v1735, 92
        %v3615 = vpop.permute.xlu0 %3614
        %3616 = vrot.lane.b32.xlu0 %v1736, 92
        %v3617 = vpop.permute.xlu0 %3616
        %3618 = vrot.lane.b32.xlu0 %v1737, 92
        %v3619 = vpop.permute.xlu0 %3618
        %3620 = vrot.lane.b32.xlu0 %v1738, 92
        %v3621 = vpop.permute.xlu0 %3620
        %3622 = vrot.lane.b32.xlu0 %v1739, 92
        %v3623 = vpop.permute.xlu0 %3622
        %3624 = vrot.lane.b32.xlu0 %v1740, 92
        %v3625 = vpop.permute.xlu0 %3624
        %3626 = vrot.lane.b32.xlu0 %v1741, 92
        %v3627 = vpop.permute.xlu0 %3626
        %3628 = vrot.lane.b32.xlu0 %v1742, 92
        %v3629 = vpop.permute.xlu0 %3628
        %3630 = vrot.lane.b32.xlu0 %v1743, 92
        %v3631 = vpop.permute.xlu0 %3630
        %3632 = vrot.lane.b32.xlu0 %v1744, 92
        %v3633 = vpop.permute.xlu0 %3632
        %3634 = vrot.lane.b32.xlu0 %v1745, 92
        %v3635 = vpop.permute.xlu0 %3634
        %3636 = vrot.lane.b32.xlu0 %v1746, 92
        %v3637 = vpop.permute.xlu0 %3636
        %3638 = vrot.lane.b32.xlu0 %v1747, 92
        %v3639 = vpop.permute.xlu0 %3638
        %3640 = vrot.lane.b32.xlu0 %v1748, 92
        %v3641 = vpop.permute.xlu0 %3640
        %3642 = vrot.lane.b32.xlu0 %v1749, 92
        %v3643 = vpop.permute.xlu0 %3642
        %3644 = vrot.lane.b32.xlu0 %v1750, 92
        %v3645 = vpop.permute.xlu0 %3644
        %3646 = vrot.lane.b32.xlu0 %v1751, 92
        %v3647 = vpop.permute.xlu0 %3646
        %3648 = vrot.lane.b32.xlu0 %v1752, 92
        %v3649 = vpop.permute.xlu0 %3648
        %3650 = vrot.lane.b32.xlu0 %v1753, 92
        %v3651 = vpop.permute.xlu0 %3650
        %3652 = vrot.lane.b32.xlu0 %v1754, 92
        %v3653 = vpop.permute.xlu0 %3652
        %3654 = vrot.lane.b32.xlu0 %v1755, 92
        %v3655 = vpop.permute.xlu0 %3654
        %3656 = vrot.lane.b32.xlu0 %v1756, 92
        %v3657 = vpop.permute.xlu0 %3656
        %vm3658 = vcmask 752640
        %v3659 = vsel %vm3658, %v3563, %v3565
        %v3660 = vsel %vm3658, %v3565, %v3567
        %v3661 = vsel %vm3658, %v3569, %v3571
        %v3662 = vsel %vm3658, %v3571, %v3573
        %v3663 = vsel %vm3658, %v3575, %v3577
        %v3664 = vsel %vm3658, %v3577, %v3579
        %v3665 = vsel %vm3658, %v3581, %v3583
        %v3666 = vsel %vm3658, %v3583, %v3585
        %v3667 = vsel %vm3658, %v3587, %v3589
        %v3668 = vsel %vm3658, %v3589, %v3591
        %v3669 = vsel %vm3658, %v3593, %v3595
        %v3670 = vsel %vm3658, %v3595, %v3597
        %v3671 = vsel %vm3658, %v3599, %v3601
        %v3672 = vsel %vm3658, %v3601, %v3603
        %v3673 = vsel %vm3658, %v3605, %v3607
        %v3674 = vsel %vm3658, %v3607, %v3609
        %v3675 = vsel %vm3658, %v3611, %v3613
        %v3676 = vsel %vm3658, %v3613, %v3615
        %v3677 = vsel %vm3658, %v3617, %v3619
        %v3678 = vsel %vm3658, %v3619, %v3621
        %v3679 = vsel %vm3658, %v3623, %v3625
        %v3680 = vsel %vm3658, %v3625, %v3627
        %v3681 = vsel %vm3658, %v3629, %v3631
        %v3682 = vsel %vm3658, %v3631, %v3633
        %v3683 = vsel %vm3658, %v3635, %v3637
        %v3684 = vsel %vm3658, %v3637, %v3639
        %v3685 = vsel %vm3658, %v3641, %v3643
        %v3686 = vsel %vm3658, %v3643, %v3645
        %v3687 = vsel %vm3658, %v3647, %v3649
        %v3688 = vsel %vm3658, %v3649, %v3651
        %v3689 = vsel %vm3658, %v3653, %v3655
        %v3690 = vsel %vm3658, %v3655, %v3657
        %3739 = vmatpush.bf16.msra.mxu0 %v3673
        %3740 = vmatpush.bf16.msra.mxu0 %v3671
        %3741 = vmatpush.bf16.msra.mxu0 %v3669
        %3742 = vmatpush.bf16.msra.mxu0 %v3667
        %3743 = vmatpush.bf16.msra.mxu0 %v3665
        %3744 = vmatpush.bf16.msra.mxu0 %v3663
        %3745 = vmatpush.bf16.msra.mxu0 %v3661
        %3746 = vmatpush.bf16.msra.mxu0 %v3659
        %3747 = vmatmul.bf16.gmra.mxu0 %v3554
        %v3748 = vpop.f32.mrf.mxu0
        %v3749 = vadd.f32 0.0, %v3748
        %v3750 = vpop.f32.mrf.mxu0
        %v3751 = vadd.f32 0.0, %v3750
        %3752 = vmatmul.bf16.gmra.mxu0 %v3556
        %v3753 = vpop.f32.mrf.mxu0
        %v3754 = vadd.f32 0.0, %v3753
        %v3755 = vpop.f32.mrf.mxu0
        %v3756 = vadd.f32 0.0, %v3755
        %3757 = vdwg.mxu0
        %3758 = vmatpush.bf16.msra.mxu0 %v3689
        %3759 = vmatpush.bf16.msra.mxu0 %v3687
        %3760 = vmatpush.bf16.msra.mxu0 %v3685
        %3761 = vmatpush.bf16.msra.mxu0 %v3683
        %3762 = vmatpush.bf16.msra.mxu0 %v3681
        %3763 = vmatpush.bf16.msra.mxu0 %v3679
        %3764 = vmatpush.bf16.msra.mxu0 %v3677
        %3765 = vmatpush.bf16.msra.mxu0 %v3675
        %3766 = vmatmul.bf16.gmra.mxu0 %v3555
        %v3767 = vpop.f32.mrf.mxu0
        %v3768 = vadd.f32 %v3749, %v3767
        %v3769 = vpop.f32.mrf.mxu0
        %v3770 = vadd.f32 %v3751, %v3769
        %3771 = vmatmul.bf16.gmra.mxu0 %v3557
        %v3772 = vpop.f32.mrf.mxu0
        %v3773 = vadd.f32 %v3754, %v3772
        %v3774 = vpop.f32.mrf.mxu0
        %v3775 = vadd.f32 %v3756, %v3774
        %3776 = vdwg.mxu0
        %3777 = vmatpush.bf16.msra.mxu0 %v3674
        %3778 = vmatpush.bf16.msra.mxu0 %v3672
        %3779 = vmatpush.bf16.msra.mxu0 %v3670
        %3780 = vmatpush.bf16.msra.mxu0 %v3668
        %3781 = vmatpush.bf16.msra.mxu0 %v3666
        %3782 = vmatpush.bf16.msra.mxu0 %v3664
        %3783 = vmatpush.bf16.msra.mxu0 %v3662
        %3784 = vmatpush.bf16.msra.mxu0 %v3660
        %3785 = vmatmul.bf16.gmra.mxu0 %v3554
        %v3786 = vpop.f32.mrf.mxu0
        %v3787 = vadd.f32 0.0, %v3786
        %v3788 = vpop.f32.mrf.mxu0
        %v3789 = vadd.f32 0.0, %v3788
        %3790 = vmatmul.bf16.gmra.mxu0 %v3556
        %v3791 = vpop.f32.mrf.mxu0
        %v3792 = vadd.f32 0.0, %v3791
        %v3793 = vpop.f32.mrf.mxu0
        %v3794 = vadd.f32 0.0, %v3793
        %3795 = vdwg.mxu0
        %3796 = vmatpush.bf16.msra.mxu0 %v3690
        %3797 = vmatpush.bf16.msra.mxu0 %v3688
        %3798 = vmatpush.bf16.msra.mxu0 %v3686
        %3799 = vmatpush.bf16.msra.mxu0 %v3684
        %3800 = vmatpush.bf16.msra.mxu0 %v3682
        %3801 = vmatpush.bf16.msra.mxu0 %v3680
        %3802 = vmatpush.bf16.msra.mxu0 %v3678
        %3803 = vmatpush.bf16.msra.mxu0 %v3676
        %3804 = vmatmul.bf16.gmra.mxu0 %v3555
        %v3805 = vpop.f32.mrf.mxu0
        %v3806 = vadd.f32 %v3787, %v3805
        %v3807 = vpop.f32.mrf.mxu0
        %v3808 = vadd.f32 %v3789, %v3807
        %3809 = vmatmul.bf16.gmra.mxu0 %v3557
        %v3810 = vpop.f32.mrf.mxu0
        %v3811 = vadd.f32 %v3792, %v3810
        %v3812 = vpop.f32.mrf.mxu0
        %v3813 = vadd.f32 %v3794, %v3812
        %3814 = vdwg.mxu0
        %3815 = vmatpush.bf16.msra.mxu0 %v3609
        %3816 = vmatpush.bf16.msra.mxu0 %v3603
        %3817 = vmatpush.bf16.msra.mxu0 %v3597
        %3818 = vmatpush.bf16.msra.mxu0 %v3591
        %3819 = vmatpush.bf16.msra.mxu0 %v3585
        %3820 = vmatpush.bf16.msra.mxu0 %v3579
        %3821 = vmatpush.bf16.msra.mxu0 %v3573
        %3822 = vmatpush.bf16.msra.mxu0 %v3567
        %3823 = vmatmul.bf16.gmra.mxu0 %v3554
        %v3824 = vpop.f32.mrf.mxu0
        %v3825 = vadd.f32 0.0, %v3824
        %v3826 = vpop.f32.mrf.mxu0
        %v3827 = vadd.f32 0.0, %v3826
        %3828 = vmatmul.bf16.gmra.mxu0 %v3556
        %v3829 = vpop.f32.mrf.mxu0
        %v3830 = vadd.f32 0.0, %v3829
        %v3831 = vpop.f32.mrf.mxu0
        %v3832 = vadd.f32 0.0, %v3831
        %3833 = vdwg.mxu0
        %3834 = vmatpush.bf16.msra.mxu0 %v3657
        %3835 = vmatpush.bf16.msra.mxu0 %v3651
        %3836 = vmatpush.bf16.msra.mxu0 %v3645
        %3837 = vmatpush.bf16.msra.mxu0 %v3639
        %3838 = vmatpush.bf16.msra.mxu0 %v3633
        %3839 = vmatpush.bf16.msra.mxu0 %v3627
        %3840 = vmatpush.bf16.msra.mxu0 %v3621
        %3841 = vmatpush.bf16.msra.mxu0 %v3615
        %3842 = vmatmul.bf16.gmra.mxu0 %v3555
        %v3843 = vpop.f32.mrf.mxu0
        %v3844 = vadd.f32 %v3825, %v3843
        %v3845 = vpop.f32.mrf.mxu0
        %v3846 = vadd.f32 %v3827, %v3845
        %3847 = vmatmul.bf16.gmra.mxu0 %v3557
        %v3848 = vpop.f32.mrf.mxu0
        %v3849 = vadd.f32 %v3830, %v3848
        %v3850 = vpop.f32.mrf.mxu0
        %v3851 = vadd.f32 %v3832, %v3850
        %3852 = vdwg.mxu0
        %v3853 = vadd.f32 %v3526, %v3768
        %v3854 = vadd.f32 %v3527, %v3806
        %v3855 = vadd.f32 %v3528, %v3844
        %v3856 = vadd.f32 %v3529, %v3770
        %v3857 = vadd.f32 %v3530, %v3808
        %v3858 = vadd.f32 %v3531, %v3846
        %v3859 = vadd.f32 %v3532, %v3773
        %v3860 = vadd.f32 %v3533, %v3811
        %v3861 = vadd.f32 %v3534, %v3849
        %v3862 = vadd.f32 %v3535, %v3775
        %v3863 = vadd.f32 %v3536, %v3813
        %v3864 = vadd.f32 %v3537, %v3851
        %v3865 = vld [vmem:[#allocation7 + $0xe0] sm:$0xff]
        %v3866 = vld [vmem:[#allocation7 + $0xe8] sm:$0xff]
        %v3867 = vld [vmem:[#allocation7 + $0xf0] sm:$0xff]
        %v3868 = vld [vmem:[#allocation7 + $0xf8] sm:$0xff]
        %v3873 = vunpack.c.l.b16 %v3865
        %v3874 = vunpack.c.h.b16 %v3865
        %v3875 = vunpack.c.l.b16 %v3866
        %v3876 = vunpack.c.h.b16 %v3866
        %v3877 = vunpack.c.l.b16 %v3867
        %v3878 = vunpack.c.h.b16 %v3867
        %v3879 = vunpack.c.l.b16 %v3868
        %v3880 = vunpack.c.h.b16 %v3868
        %v3881 = vpack.c.b16 %v3875, %v3873
        %v3882 = vpack.c.b16 %v3876, %v3874
        %v3883 = vpack.c.b16 %v3879, %v3877
        %v3884 = vpack.c.b16 %v3880, %v3878
        %3889 = vrot.lane.b32.xlu0 %v1709, 91
        %v3890 = vpop.permute.xlu0 %3889
        %3891 = vrot.lane.b32.xlu0 %v1710, 91
        %v3892 = vpop.permute.xlu0 %3891
        %3893 = vrot.lane.b32.xlu0 %v1711, 91
        %v3894 = vpop.permute.xlu0 %3893
        %3895 = vrot.lane.b32.xlu0 %v1712, 91
        %v3896 = vpop.permute.xlu0 %3895
        %3897 = vrot.lane.b32.xlu0 %v1713, 91
        %v3898 = vpop.permute.xlu0 %3897
        %3899 = vrot.lane.b32.xlu0 %v1714, 91
        %v3900 = vpop.permute.xlu0 %3899
        %3901 = vrot.lane.b32.xlu0 %v1715, 91
        %v3902 = vpop.permute.xlu0 %3901
        %3903 = vrot.lane.b32.xlu0 %v1716, 91
        %v3904 = vpop.permute.xlu0 %3903
        %3905 = vrot.lane.b32.xlu0 %v1717, 91
        %v3906 = vpop.permute.xlu0 %3905
        %3907 = vrot.lane.b32.xlu0 %v1718, 91
        %v3908 = vpop.permute.xlu0 %3907
        %3909 = vrot.lane.b32.xlu0 %v1719, 91
        %v3910 = vpop.permute.xlu0 %3909
        %3911 = vrot.lane.b32.xlu0 %v1720, 91
        %v3912 = vpop.permute.xlu0 %3911
        %3913 = vrot.lane.b32.xlu0 %v1721, 91
        %v3914 = vpop.permute.xlu0 %3913
        %3915 = vrot.lane.b32.xlu0 %v1722, 91
        %v3916 = vpop.permute.xlu0 %3915
        %3917 = vrot.lane.b32.xlu0 %v1723, 91
        %v3918 = vpop.permute.xlu0 %3917
        %3919 = vrot.lane.b32.xlu0 %v1724, 91
        %v3920 = vpop.permute.xlu0 %3919
        %3921 = vrot.lane.b32.xlu0 %v1725, 91
        %v3922 = vpop.permute.xlu0 %3921
        %3923 = vrot.lane.b32.xlu0 %v1726, 91
        %v3924 = vpop.permute.xlu0 %3923
        %3925 = vrot.lane.b32.xlu0 %v1727, 91
        %v3926 = vpop.permute.xlu0 %3925
        %3927 = vrot.lane.b32.xlu0 %v1728, 91
        %v3928 = vpop.permute.xlu0 %3927
        %3929 = vrot.lane.b32.xlu0 %v1729, 91
        %v3930 = vpop.permute.xlu0 %3929
        %3931 = vrot.lane.b32.xlu0 %v1730, 91
        %v3932 = vpop.permute.xlu0 %3931
        %3933 = vrot.lane.b32.xlu0 %v1731, 91
        %v3934 = vpop.permute.xlu0 %3933
        %3935 = vrot.lane.b32.xlu0 %v1732, 91
        %v3936 = vpop.permute.xlu0 %3935
        %3937 = vrot.lane.b32.xlu0 %v1733, 91
        %v3938 = vpop.permute.xlu0 %3937
        %3939 = vrot.lane.b32.xlu0 %v1734, 91
        %v3940 = vpop.permute.xlu0 %3939
        %3941 = vrot.lane.b32.xlu0 %v1735, 91
        %v3942 = vpop.permute.xlu0 %3941
        %3943 = vrot.lane.b32.xlu0 %v1736, 91
        %v3944 = vpop.permute.xlu0 %3943
        %3945 = vrot.lane.b32.xlu0 %v1737, 91
        %v3946 = vpop.permute.xlu0 %3945
        %3947 = vrot.lane.b32.xlu0 %v1738, 91
        %v3948 = vpop.permute.xlu0 %3947
        %3949 = vrot.lane.b32.xlu0 %v1739, 91
        %v3950 = vpop.permute.xlu0 %3949
        %3951 = vrot.lane.b32.xlu0 %v1740, 91
        %v3952 = vpop.permute.xlu0 %3951
        %3953 = vrot.lane.b32.xlu0 %v1741, 91
        %v3954 = vpop.permute.xlu0 %3953
        %3955 = vrot.lane.b32.xlu0 %v1742, 91
        %v3956 = vpop.permute.xlu0 %3955
        %3957 = vrot.lane.b32.xlu0 %v1743, 91
        %v3958 = vpop.permute.xlu0 %3957
        %3959 = vrot.lane.b32.xlu0 %v1744, 91
        %v3960 = vpop.permute.xlu0 %3959
        %3961 = vrot.lane.b32.xlu0 %v1745, 91
        %v3962 = vpop.permute.xlu0 %3961
        %3963 = vrot.lane.b32.xlu0 %v1746, 91
        %v3964 = vpop.permute.xlu0 %3963
        %3965 = vrot.lane.b32.xlu0 %v1747, 91
        %v3966 = vpop.permute.xlu0 %3965
        %3967 = vrot.lane.b32.xlu0 %v1748, 91
        %v3968 = vpop.permute.xlu0 %3967
        %3969 = vrot.lane.b32.xlu0 %v1749, 91
        %v3970 = vpop.permute.xlu0 %3969
        %3971 = vrot.lane.b32.xlu0 %v1750, 91
        %v3972 = vpop.permute.xlu0 %3971
        %3973 = vrot.lane.b32.xlu0 %v1751, 91
        %v3974 = vpop.permute.xlu0 %3973
        %3975 = vrot.lane.b32.xlu0 %v1752, 91
        %v3976 = vpop.permute.xlu0 %3975
        %3977 = vrot.lane.b32.xlu0 %v1753, 91
        %v3978 = vpop.permute.xlu0 %3977
        %3979 = vrot.lane.b32.xlu0 %v1754, 91
        %v3980 = vpop.permute.xlu0 %3979
        %3981 = vrot.lane.b32.xlu0 %v1755, 91
        %v3982 = vpop.permute.xlu0 %3981
        %3983 = vrot.lane.b32.xlu0 %v1756, 91
        %v3984 = vpop.permute.xlu0 %3983
        %vm3985 = vcmask 744448
        %v3986 = vsel %vm3985, %v3890, %v3892
        %v3987 = vsel %vm3985, %v3892, %v3894
        %v3988 = vsel %vm3985, %v3896, %v3898
        %v3989 = vsel %vm3985, %v3898, %v3900
        %v3990 = vsel %vm3985, %v3902, %v3904
        %v3991 = vsel %vm3985, %v3904, %v3906
        %v3992 = vsel %vm3985, %v3908, %v3910
        %v3993 = vsel %vm3985, %v3910, %v3912
        %v3994 = vsel %vm3985, %v3914, %v3916
        %v3995 = vsel %vm3985, %v3916, %v3918
        %v3996 = vsel %vm3985, %v3920, %v3922
        %v3997 = vsel %vm3985, %v3922, %v3924
        %v3998 = vsel %vm3985, %v3926, %v3928
        %v3999 = vsel %vm3985, %v3928, %v3930
        %v4000 = vsel %vm3985, %v3932, %v3934
        %v4001 = vsel %vm3985, %v3934, %v3936
        %v4002 = vsel %vm3985, %v3938, %v3940
        %v4003 = vsel %vm3985, %v3940, %v3942
        %v4004 = vsel %vm3985, %v3944, %v3946
        %v4005 = vsel %vm3985, %v3946, %v3948
        %v4006 = vsel %vm3985, %v3950, %v3952
        %v4007 = vsel %vm3985, %v3952, %v3954
        %v4008 = vsel %vm3985, %v3956, %v3958
        %v4009 = vsel %vm3985, %v3958, %v3960
        %v4010 = vsel %vm3985, %v3962, %v3964
        %v4011 = vsel %vm3985, %v3964, %v3966
        %v4012 = vsel %vm3985, %v3968, %v3970
        %v4013 = vsel %vm3985, %v3970, %v3972
        %v4014 = vsel %vm3985, %v3974, %v3976
        %v4015 = vsel %vm3985, %v3976, %v3978
        %v4016 = vsel %vm3985, %v3980, %v3982
        %v4017 = vsel %vm3985, %v3982, %v3984
        %4066 = vmatpush.bf16.msra.mxu0 %v4000
        %4067 = vmatpush.bf16.msra.mxu0 %v3998
        %4068 = vmatpush.bf16.msra.mxu0 %v3996
        %4069 = vmatpush.bf16.msra.mxu0 %v3994
        %4070 = vmatpush.bf16.msra.mxu0 %v3992
        %4071 = vmatpush.bf16.msra.mxu0 %v3990
        %4072 = vmatpush.bf16.msra.mxu0 %v3988
        %4073 = vmatpush.bf16.msra.mxu0 %v3986
        %4074 = vmatmul.bf16.gmra.mxu0 %v3881
        %v4075 = vpop.f32.mrf.mxu0
        %v4076 = vadd.f32 0.0, %v4075
        %v4077 = vpop.f32.mrf.mxu0
        %v4078 = vadd.f32 0.0, %v4077
        %4079 = vmatmul.bf16.gmra.mxu0 %v3883
        %v4080 = vpop.f32.mrf.mxu0
        %v4081 = vadd.f32 0.0, %v4080
        %v4082 = vpop.f32.mrf.mxu0
        %v4083 = vadd.f32 0.0, %v4082
        %4084 = vdwg.mxu0
        %4085 = vmatpush.bf16.msra.mxu0 %v4016
        %4086 = vmatpush.bf16.msra.mxu0 %v4014
        %4087 = vmatpush.bf16.msra.mxu0 %v4012
        %4088 = vmatpush.bf16.msra.mxu0 %v4010
        %4089 = vmatpush.bf16.msra.mxu0 %v4008
        %4090 = vmatpush.bf16.msra.mxu0 %v4006
        %4091 = vmatpush.bf16.msra.mxu0 %v4004
        %4092 = vmatpush.bf16.msra.mxu0 %v4002
        %4093 = vmatmul.bf16.gmra.mxu0 %v3882
        %v4094 = vpop.f32.mrf.mxu0
        %v4095 = vadd.f32 %v4076, %v4094
        %v4096 = vpop.f32.mrf.mxu0
        %v4097 = vadd.f32 %v4078, %v4096
        %4098 = vmatmul.bf16.gmra.mxu0 %v3884
        %v4099 = vpop.f32.mrf.mxu0
        %v4100 = vadd.f32 %v4081, %v4099
        %v4101 = vpop.f32.mrf.mxu0
        %v4102 = vadd.f32 %v4083, %v4101
        %4103 = vdwg.mxu0
        %4104 = vmatpush.bf16.msra.mxu0 %v4001
        %4105 = vmatpush.bf16.msra.mxu0 %v3999
        %4106 = vmatpush.bf16.msra.mxu0 %v3997
        %4107 = vmatpush.bf16.msra.mxu0 %v3995
        %4108 = vmatpush.bf16.msra.mxu0 %v3993
        %4109 = vmatpush.bf16.msra.mxu0 %v3991
        %4110 = vmatpush.bf16.msra.mxu0 %v3989
        %4111 = vmatpush.bf16.msra.mxu0 %v3987
        %4112 = vmatmul.bf16.gmra.mxu0 %v3881
        %v4113 = vpop.f32.mrf.mxu0
        %v4114 = vadd.f32 0.0, %v4113
        %v4115 = vpop.f32.mrf.mxu0
        %v4116 = vadd.f32 0.0, %v4115
        %4117 = vmatmul.bf16.gmra.mxu0 %v3883
        %v4118 = vpop.f32.mrf.mxu0
        %v4119 = vadd.f32 0.0, %v4118
        %v4120 = vpop.f32.mrf.mxu0
        %v4121 = vadd.f32 0.0, %v4120
        %4122 = vdwg.mxu0
        %4123 = vmatpush.bf16.msra.mxu0 %v4017
        %4124 = vmatpush.bf16.msra.mxu0 %v4015
        %4125 = vmatpush.bf16.msra.mxu0 %v4013
        %4126 = vmatpush.bf16.msra.mxu0 %v4011
        %4127 = vmatpush.bf16.msra.mxu0 %v4009
        %4128 = vmatpush.bf16.msra.mxu0 %v4007
        %4129 = vmatpush.bf16.msra.mxu0 %v4005
        %4130 = vmatpush.bf16.msra.mxu0 %v4003
        %4131 = vmatmul.bf16.gmra.mxu0 %v3882
        %v4132 = vpop.f32.mrf.mxu0
        %v4133 = vadd.f32 %v4114, %v4132
        %v4134 = vpop.f32.mrf.mxu0
        %v4135 = vadd.f32 %v4116, %v4134
        %4136 = vmatmul.bf16.gmra.mxu0 %v3884
        %v4137 = vpop.f32.mrf.mxu0
        %v4138 = vadd.f32 %v4119, %v4137
        %v4139 = vpop.f32.mrf.mxu0
        %v4140 = vadd.f32 %v4121, %v4139
        %4141 = vdwg.mxu0
        %4142 = vmatpush.bf16.msra.mxu0 %v3936
        %4143 = vmatpush.bf16.msra.mxu0 %v3930
        %4144 = vmatpush.bf16.msra.mxu0 %v3924
        %4145 = vmatpush.bf16.msra.mxu0 %v3918
        %4146 = vmatpush.bf16.msra.mxu0 %v3912
        %4147 = vmatpush.bf16.msra.mxu0 %v3906
        %4148 = vmatpush.bf16.msra.mxu0 %v3900
        %4149 = vmatpush.bf16.msra.mxu0 %v3894
        %4150 = vmatmul.bf16.gmra.mxu0 %v3881
        %v4151 = vpop.f32.mrf.mxu0
        %v4152 = vadd.f32 0.0, %v4151
        %v4153 = vpop.f32.mrf.mxu0
        %v4154 = vadd.f32 0.0, %v4153
        %4155 = vmatmul.bf16.gmra.mxu0 %v3883
        %v4156 = vpop.f32.mrf.mxu0
        %v4157 = vadd.f32 0.0, %v4156
        %v4158 = vpop.f32.mrf.mxu0
        %v4159 = vadd.f32 0.0, %v4158
        %4160 = vdwg.mxu0
        %4161 = vmatpush.bf16.msra.mxu0 %v3984
        %4162 = vmatpush.bf16.msra.mxu0 %v3978
        %4163 = vmatpush.bf16.msra.mxu0 %v3972
        %4164 = vmatpush.bf16.msra.mxu0 %v3966
        %4165 = vmatpush.bf16.msra.mxu0 %v3960
        %4166 = vmatpush.bf16.msra.mxu0 %v3954
        %4167 = vmatpush.bf16.msra.mxu0 %v3948
        %4168 = vmatpush.bf16.msra.mxu0 %v3942
        %4169 = vmatmul.bf16.gmra.mxu0 %v3882
        %v4170 = vpop.f32.mrf.mxu0
        %v4171 = vadd.f32 %v4152, %v4170
        %v4172 = vpop.f32.mrf.mxu0
        %v4173 = vadd.f32 %v4154, %v4172
        %4174 = vmatmul.bf16.gmra.mxu0 %v3884
        %v4175 = vpop.f32.mrf.mxu0
        %v4176 = vadd.f32 %v4157, %v4175
        %v4177 = vpop.f32.mrf.mxu0
        %v4178 = vadd.f32 %v4159, %v4177
        %4179 = vdwg.mxu0
        %v4180 = vadd.f32 %v3853, %v4095
        %v4181 = vadd.f32 %v3854, %v4133
        %v4182 = vadd.f32 %v3855, %v4171
        %v4183 = vadd.f32 %v3856, %v4097
        %v4184 = vadd.f32 %v3857, %v4135
        %v4185 = vadd.f32 %v3858, %v4173
        %v4186 = vadd.f32 %v3859, %v4100
        %v4187 = vadd.f32 %v3860, %v4138
        %v4188 = vadd.f32 %v3861, %v4176
        %v4189 = vadd.f32 %v3862, %v4102
        %v4190 = vadd.f32 %v3863, %v4140
        %v4191 = vadd.f32 %v3864, %v4178
        %v4192 = vld [vmem:[#allocation7 + $0x100] sm:$0xff]
        %v4193 = vld [vmem:[#allocation7 + $0x108] sm:$0xff]
        %v4194 = vld [vmem:[#allocation7 + $0x110] sm:$0xff]
        %v4195 = vld [vmem:[#allocation7 + $0x118] sm:$0xff]
        %v4200 = vunpack.c.l.b16 %v4192
        %v4201 = vunpack.c.h.b16 %v4192
        %v4202 = vunpack.c.l.b16 %v4193
        %v4203 = vunpack.c.h.b16 %v4193
        %v4204 = vunpack.c.l.b16 %v4194
        %v4205 = vunpack.c.h.b16 %v4194
        %v4206 = vunpack.c.l.b16 %v4195
        %v4207 = vunpack.c.h.b16 %v4195
        %v4208 = vpack.c.b16 %v4202, %v4200
        %v4209 = vpack.c.b16 %v4203, %v4201
        %v4210 = vpack.c.b16 %v4206, %v4204
        %v4211 = vpack.c.b16 %v4207, %v4205
        %4216 = vrot.lane.b32.xlu0 %v1709, 90
        %v4217 = vpop.permute.xlu0 %4216
        %4218 = vrot.lane.b32.xlu0 %v1710, 90
        %v4219 = vpop.permute.xlu0 %4218
        %4220 = vrot.lane.b32.xlu0 %v1711, 90
        %v4221 = vpop.permute.xlu0 %4220
        %4222 = vrot.lane.b32.xlu0 %v1712, 90
        %v4223 = vpop.permute.xlu0 %4222
        %4224 = vrot.lane.b32.xlu0 %v1713, 90
        %v4225 = vpop.permute.xlu0 %4224
        %4226 = vrot.lane.b32.xlu0 %v1714, 90
        %v4227 = vpop.permute.xlu0 %4226
        %4228 = vrot.lane.b32.xlu0 %v1715, 90
        %v4229 = vpop.permute.xlu0 %4228
        %4230 = vrot.lane.b32.xlu0 %v1716, 90
        %v4231 = vpop.permute.xlu0 %4230
        %4232 = vrot.lane.b32.xlu0 %v1717, 90
        %v4233 = vpop.permute.xlu0 %4232
        %4234 = vrot.lane.b32.xlu0 %v1718, 90
        %v4235 = vpop.permute.xlu0 %4234
        %4236 = vrot.lane.b32.xlu0 %v1719, 90
        %v4237 = vpop.permute.xlu0 %4236
        %4238 = vrot.lane.b32.xlu0 %v1720, 90
        %v4239 = vpop.permute.xlu0 %4238
        %4240 = vrot.lane.b32.xlu0 %v1721, 90
        %v4241 = vpop.permute.xlu0 %4240
        %4242 = vrot.lane.b32.xlu0 %v1722, 90
        %v4243 = vpop.permute.xlu0 %4242
        %4244 = vrot.lane.b32.xlu0 %v1723, 90
        %v4245 = vpop.permute.xlu0 %4244
        %4246 = vrot.lane.b32.xlu0 %v1724, 90
        %v4247 = vpop.permute.xlu0 %4246
        %4248 = vrot.lane.b32.xlu0 %v1725, 90
        %v4249 = vpop.permute.xlu0 %4248
        %4250 = vrot.lane.b32.xlu0 %v1726, 90
        %v4251 = vpop.permute.xlu0 %4250
        %4252 = vrot.lane.b32.xlu0 %v1727, 90
        %v4253 = vpop.permute.xlu0 %4252
        %4254 = vrot.lane.b32.xlu0 %v1728, 90
        %v4255 = vpop.permute.xlu0 %4254
        %4256 = vrot.lane.b32.xlu0 %v1729, 90
        %v4257 = vpop.permute.xlu0 %4256
        %4258 = vrot.lane.b32.xlu0 %v1730, 90
        %v4259 = vpop.permute.xlu0 %4258
        %4260 = vrot.lane.b32.xlu0 %v1731, 90
        %v4261 = vpop.permute.xlu0 %4260
        %4262 = vrot.lane.b32.xlu0 %v1732, 90
        %v4263 = vpop.permute.xlu0 %4262
        %4264 = vrot.lane.b32.xlu0 %v1733, 90
        %v4265 = vpop.permute.xlu0 %4264
        %4266 = vrot.lane.b32.xlu0 %v1734, 90
        %v4267 = vpop.permute.xlu0 %4266
        %4268 = vrot.lane.b32.xlu0 %v1735, 90
        %v4269 = vpop.permute.xlu0 %4268
        %4270 = vrot.lane.b32.xlu0 %v1736, 90
        %v4271 = vpop.permute.xlu0 %4270
        %4272 = vrot.lane.b32.xlu0 %v1737, 90
        %v4273 = vpop.permute.xlu0 %4272
        %4274 = vrot.lane.b32.xlu0 %v1738, 90
        %v4275 = vpop.permute.xlu0 %4274
        %4276 = vrot.lane.b32.xlu0 %v1739, 90
        %v4277 = vpop.permute.xlu0 %4276
        %4278 = vrot.lane.b32.xlu0 %v1740, 90
        %v4279 = vpop.permute.xlu0 %4278
        %4280 = vrot.lane.b32.xlu0 %v1741, 90
        %v4281 = vpop.permute.xlu0 %4280
        %4282 = vrot.lane.b32.xlu0 %v1742, 90
        %v4283 = vpop.permute.xlu0 %4282
        %4284 = vrot.lane.b32.xlu0 %v1743, 90
        %v4285 = vpop.permute.xlu0 %4284
        %4286 = vrot.lane.b32.xlu0 %v1744, 90
        %v4287 = vpop.permute.xlu0 %4286
        %4288 = vrot.lane.b32.xlu0 %v1745, 90
        %v4289 = vpop.permute.xlu0 %4288
        %4290 = vrot.lane.b32.xlu0 %v1746, 90
        %v4291 = vpop.permute.xlu0 %4290
        %4292 = vrot.lane.b32.xlu0 %v1747, 90
        %v4293 = vpop.permute.xlu0 %4292
        %4294 = vrot.lane.b32.xlu0 %v1748, 90
        %v4295 = vpop.permute.xlu0 %4294
        %4296 = vrot.lane.b32.xlu0 %v1749, 90
        %v4297 = vpop.permute.xlu0 %4296
        %4298 = vrot.lane.b32.xlu0 %v1750, 90
        %v4299 = vpop.permute.xlu0 %4298
        %4300 = vrot.lane.b32.xlu0 %v1751, 90
        %v4301 = vpop.permute.xlu0 %4300
        %4302 = vrot.lane.b32.xlu0 %v1752, 90
        %v4303 = vpop.permute.xlu0 %4302
        %4304 = vrot.lane.b32.xlu0 %v1753, 90
        %v4305 = vpop.permute.xlu0 %4304
        %4306 = vrot.lane.b32.xlu0 %v1754, 90
        %v4307 = vpop.permute.xlu0 %4306
        %4308 = vrot.lane.b32.xlu0 %v1755, 90
        %v4309 = vpop.permute.xlu0 %4308
        %4310 = vrot.lane.b32.xlu0 %v1756, 90
        %v4311 = vpop.permute.xlu0 %4310
        %vm4312 = vcmask 736256
        %v4313 = vsel %vm4312, %v4217, %v4219
        %v4314 = vsel %vm4312, %v4219, %v4221
        %v4315 = vsel %vm4312, %v4223, %v4225
        %v4316 = vsel %vm4312, %v4225, %v4227
        %v4317 = vsel %vm4312, %v4229, %v4231
        %v4318 = vsel %vm4312, %v4231, %v4233
        %v4319 = vsel %vm4312, %v4235, %v4237
        %v4320 = vsel %vm4312, %v4237, %v4239
        %v4321 = vsel %vm4312, %v4241, %v4243
        %v4322 = vsel %vm4312, %v4243, %v4245
        %v4323 = vsel %vm4312, %v4247, %v4249
        %v4324 = vsel %vm4312, %v4249, %v4251
        %v4325 = vsel %vm4312, %v4253, %v4255
        %v4326 = vsel %vm4312, %v4255, %v4257
        %v4327 = vsel %vm4312, %v4259, %v4261
        %v4328 = vsel %vm4312, %v4261, %v4263
        %v4329 = vsel %vm4312, %v4265, %v4267
        %v4330 = vsel %vm4312, %v4267, %v4269
        %v4331 = vsel %vm4312, %v4271, %v4273
        %v4332 = vsel %vm4312, %v4273, %v4275
        %v4333 = vsel %vm4312, %v4277, %v4279
        %v4334 = vsel %vm4312, %v4279, %v4281
        %v4335 = vsel %vm4312, %v4283, %v4285
        %v4336 = vsel %vm4312, %v4285, %v4287
        %v4337 = vsel %vm4312, %v4289, %v4291
        %v4338 = vsel %vm4312, %v4291, %v4293
        %v4339 = vsel %vm4312, %v4295, %v4297
        %v4340 = vsel %vm4312, %v4297, %v4299
        %v4341 = vsel %vm4312, %v4301, %v4303
        %v4342 = vsel %vm4312, %v4303, %v4305
        %v4343 = vsel %vm4312, %v4307, %v4309
        %v4344 = vsel %vm4312, %v4309, %v4311
        %4393 = vmatpush.bf16.msra.mxu0 %v4327
        %4394 = vmatpush.bf16.msra.mxu0 %v4325
        %4395 = vmatpush.bf16.msra.mxu0 %v4323
        %4396 = vmatpush.bf16.msra.mxu0 %v4321
        %4397 = vmatpush.bf16.msra.mxu0 %v4319
        %4398 = vmatpush.bf16.msra.mxu0 %v4317
        %4399 = vmatpush.bf16.msra.mxu0 %v4315
        %4400 = vmatpush.bf16.msra.mxu0 %v4313
        %4401 = vmatmul.bf16.gmra.mxu0 %v4208
        %v4402 = vpop.f32.mrf.mxu0
        %v4403 = vadd.f32 0.0, %v4402
        %v4404 = vpop.f32.mrf.mxu0
        %v4405 = vadd.f32 0.0, %v4404
        %4406 = vmatmul.bf16.gmra.mxu0 %v4210
        %v4407 = vpop.f32.mrf.mxu0
        %v4408 = vadd.f32 0.0, %v4407
        %v4409 = vpop.f32.mrf.mxu0
        %v4410 = vadd.f32 0.0, %v4409
        %4411 = vdwg.mxu0
        %4412 = vmatpush.bf16.msra.mxu0 %v4343
        %4413 = vmatpush.bf16.msra.mxu0 %v4341
        %4414 = vmatpush.bf16.msra.mxu0 %v4339
        %4415 = vmatpush.bf16.msra.mxu0 %v4337
        %4416 = vmatpush.bf16.msra.mxu0 %v4335
        %4417 = vmatpush.bf16.msra.mxu0 %v4333
        %4418 = vmatpush.bf16.msra.mxu0 %v4331
        %4419 = vmatpush.bf16.msra.mxu0 %v4329
        %4420 = vmatmul.bf16.gmra.mxu0 %v4209
        %v4421 = vpop.f32.mrf.mxu0
        %v4422 = vadd.f32 %v4403, %v4421
        %v4423 = vpop.f32.mrf.mxu0
        %v4424 = vadd.f32 %v4405, %v4423
        %4425 = vmatmul.bf16.gmra.mxu0 %v4211
        %v4426 = vpop.f32.mrf.mxu0
        %v4427 = vadd.f32 %v4408, %v4426
        %v4428 = vpop.f32.mrf.mxu0
        %v4429 = vadd.f32 %v4410, %v4428
        %4430 = vdwg.mxu0
        %4431 = vmatpush.bf16.msra.mxu0 %v4328
        %4432 = vmatpush.bf16.msra.mxu0 %v4326
        %4433 = vmatpush.bf16.msra.mxu0 %v4324
        %4434 = vmatpush.bf16.msra.mxu0 %v4322
        %4435 = vmatpush.bf16.msra.mxu0 %v4320
        %4436 = vmatpush.bf16.msra.mxu0 %v4318
        %4437 = vmatpush.bf16.msra.mxu0 %v4316
        %4438 = vmatpush.bf16.msra.mxu0 %v4314
        %4439 = vmatmul.bf16.gmra.mxu0 %v4208
        %v4440 = vpop.f32.mrf.mxu0
        %v4441 = vadd.f32 0.0, %v4440
        %v4442 = vpop.f32.mrf.mxu0
        %v4443 = vadd.f32 0.0, %v4442
        %4444 = vmatmul.bf16.gmra.mxu0 %v4210
        %v4445 = vpop.f32.mrf.mxu0
        %v4446 = vadd.f32 0.0, %v4445
        %v4447 = vpop.f32.mrf.mxu0
        %v4448 = vadd.f32 0.0, %v4447
        %4449 = vdwg.mxu0
        %4450 = vmatpush.bf16.msra.mxu0 %v4344
        %4451 = vmatpush.bf16.msra.mxu0 %v4342
        %4452 = vmatpush.bf16.msra.mxu0 %v4340
        %4453 = vmatpush.bf16.msra.mxu0 %v4338
        %4454 = vmatpush.bf16.msra.mxu0 %v4336
        %4455 = vmatpush.bf16.msra.mxu0 %v4334
        %4456 = vmatpush.bf16.msra.mxu0 %v4332
        %4457 = vmatpush.bf16.msra.mxu0 %v4330
        %4458 = vmatmul.bf16.gmra.mxu0 %v4209
        %v4459 = vpop.f32.mrf.mxu0
        %v4460 = vadd.f32 %v4441, %v4459
        %v4461 = vpop.f32.mrf.mxu0
        %v4462 = vadd.f32 %v4443, %v4461
        %4463 = vmatmul.bf16.gmra.mxu0 %v4211
        %v4464 = vpop.f32.mrf.mxu0
        %v4465 = vadd.f32 %v4446, %v4464
        %v4466 = vpop.f32.mrf.mxu0
        %v4467 = vadd.f32 %v4448, %v4466
        %4468 = vdwg.mxu0
        %4469 = vmatpush.bf16.msra.mxu0 %v4263
        %4470 = vmatpush.bf16.msra.mxu0 %v4257
        %4471 = vmatpush.bf16.msra.mxu0 %v4251
        %4472 = vmatpush.bf16.msra.mxu0 %v4245
        %4473 = vmatpush.bf16.msra.mxu0 %v4239
        %4474 = vmatpush.bf16.msra.mxu0 %v4233
        %4475 = vmatpush.bf16.msra.mxu0 %v4227
        %4476 = vmatpush.bf16.msra.mxu0 %v4221
        %4477 = vmatmul.bf16.gmra.mxu0 %v4208
        %v4478 = vpop.f32.mrf.mxu0
        %v4479 = vadd.f32 0.0, %v4478
        %v4480 = vpop.f32.mrf.mxu0
        %v4481 = vadd.f32 0.0, %v4480
        %4482 = vmatmul.bf16.gmra.mxu0 %v4210
        %v4483 = vpop.f32.mrf.mxu0
        %v4484 = vadd.f32 0.0, %v4483
        %v4485 = vpop.f32.mrf.mxu0
        %v4486 = vadd.f32 0.0, %v4485
        %4487 = vdwg.mxu0
        %4488 = vmatpush.bf16.msra.mxu0 %v4311
        %4489 = vmatpush.bf16.msra.mxu0 %v4305
        %4490 = vmatpush.bf16.msra.mxu0 %v4299
        %4491 = vmatpush.bf16.msra.mxu0 %v4293
        %4492 = vmatpush.bf16.msra.mxu0 %v4287
        %4493 = vmatpush.bf16.msra.mxu0 %v4281
        %4494 = vmatpush.bf16.msra.mxu0 %v4275
        %4495 = vmatpush.bf16.msra.mxu0 %v4269
        %4496 = vmatmul.bf16.gmra.mxu0 %v4209
        %v4497 = vpop.f32.mrf.mxu0
        %v4498 = vadd.f32 %v4479, %v4497
        %v4499 = vpop.f32.mrf.mxu0
        %v4500 = vadd.f32 %v4481, %v4499
        %4501 = vmatmul.bf16.gmra.mxu0 %v4211
        %v4502 = vpop.f32.mrf.mxu0
        %v4503 = vadd.f32 %v4484, %v4502
        %v4504 = vpop.f32.mrf.mxu0
        %v4505 = vadd.f32 %v4486, %v4504
        %4506 = vdwg.mxu0
        %v4507 = vadd.f32 %v4180, %v4422
        %v4508 = vadd.f32 %v4181, %v4460
        %v4509 = vadd.f32 %v4182, %v4498
        %v4510 = vadd.f32 %v4183, %v4424
        %v4511 = vadd.f32 %v4184, %v4462
        %v4512 = vadd.f32 %v4185, %v4500
        %v4513 = vadd.f32 %v4186, %v4427
        %v4514 = vadd.f32 %v4187, %v4465
        %v4515 = vadd.f32 %v4188, %v4503
        %v4516 = vadd.f32 %v4189, %v4429
        %v4517 = vadd.f32 %v4190, %v4467
        %v4518 = vadd.f32 %v4191, %v4505
        %v4519 = vld [vmem:[%s5] sm:$0xff]
        %v4520 = vld [vmem:[%s5 + $0x8] sm:$0xff]
        %v4521 = vld [vmem:[%s5 + $0x10] sm:$0xff]
        %v4522 = vld [vmem:[%s5 + $0x18] sm:$0xff]
        %4524 = vset.pattern.permute.xlu0 0
        %4525 = vperm.xlu0 %4524, %v4519
        %v4526 = vpop.permute.xlu0 %4525
        %4529 = vset.pattern.permute.xlu0 0
        %4530 = vperm.xlu0 %4529, %v4520
        %v4531 = vpop.permute.xlu0 %4530
        %4534 = vset.pattern.permute.xlu0 0
        %4535 = vperm.xlu0 %4534, %v4521
        %v4536 = vpop.permute.xlu0 %4535
        %4539 = vset.pattern.permute.xlu0 0
        %4540 = vperm.xlu0 %4539, %v4522
        %v4541 = vpop.permute.xlu0 %4540
        %v4543 = vadd.f32 %v4507, %v4526
        %v4544 = vadd.f32 %v4508, %v4526
        %v4545 = vadd.f32 %v4509, %v4526
        %v4546 = vadd.f32 %v4510, %v4531
        %v4547 = vadd.f32 %v4511, %v4531
        %v4548 = vadd.f32 %v4512, %v4531
        %v4549 = vadd.f32 %v4513, %v4536
        %v4550 = vadd.f32 %v4514, %v4536
        %v4551 = vadd.f32 %v4515, %v4536
        %v4552 = vadd.f32 %v4516, %v4541
        %v4553 = vadd.f32 %v4517, %v4541
        %v4554 = vadd.f32 %v4518, %v4541
        %v4555 = vmax.f32 %v4543, 0.0
        %v4556 = vmax.f32 %v4544, 0.0
        %v4557 = vmax.f32 %v4545, 0.0
        %v4558 = vmax.f32 %v4546, 0.0
        %v4559 = vmax.f32 %v4547, 0.0
        %v4560 = vmax.f32 %v4548, 0.0
        %v4561 = vmax.f32 %v4549, 0.0
        %v4562 = vmax.f32 %v4550, 0.0
        %v4563 = vmax.f32 %v4551, 0.0
        %v4564 = vmax.f32 %v4552, 0.0
        %v4565 = vmax.f32 %v4553, 0.0
        %v4566 = vmax.f32 %v4554, 0.0
        %v4567 = vld [vmem:[#allocation9] sm:$0x7]
        %v4569 = vperm.slane %v4567, 0
        %v4570 = vperm.slane %v4567, 1
        %v4571 = vperm.slane %v4567, 2
        %v4575 = vmul.f32 %v4555, %v4569
        %v4576 = vmul.f32 %v4556, %v4570
        %v4577 = vmul.f32 %v4557, %v4571
        %v4578 = vmul.f32 %v4558, %v4569
        %v4579 = vmul.f32 %v4559, %v4570
        %v4580 = vmul.f32 %v4560, %v4571
        %v4581 = vmul.f32 %v4561, %v4569
        %v4582 = vmul.f32 %v4562, %v4570
        %v4583 = vmul.f32 %v4563, %v4571
        %v4584 = vmul.f32 %v4564, %v4569
        %v4585 = vmul.f32 %v4565, %v4570
        %v4586 = vmul.f32 %v4566, %v4571
        %vm4587 = vcmask 150528
        %4588 = vst.msk [vmem:[#allocation3] sm:$0xf] %vm4587, 0
        %4589 = vst.msk [vmem:[#allocation3 + $0xc] sm:$0xf] %vm4587, 0
        %4590 = vst.msk [vmem:[#allocation3 + $0x18] sm:$0xf] %vm4587, 0
        %4591 = vst.msk [vmem:[#allocation3 + $0x24] sm:$0xf] %vm4587, 0
        %vm4592 = vcmask 585112
        %4593 = vst.msk [vmem:[#allocation3 + $0x8] sm:$0xf] %vm4592, 0
        %4594 = vst.msk [vmem:[#allocation3 + $0x14] sm:$0xf] %vm4592, 0
        %4595 = vst.msk [vmem:[#allocation3 + $0x20] sm:$0xf] %vm4592, 0
        %4596 = vst.msk [vmem:[#allocation3 + $0x2c] sm:$0xf] %vm4592, 0
        %v4597 = vpack.c.bf16 %v4576, %v4575
        %v4598 = vpack.c.bf16 %v4577, %v4577
        %v4599 = vpack.c.bf16 %v4579, %v4578
        %v4600 = vpack.c.bf16 %v4580, %v4580
        %v4601 = vpack.c.bf16 %v4582, %v4581
        %v4602 = vpack.c.bf16 %v4583, %v4583
        %v4603 = vpack.c.bf16 %v4585, %v4584
        %v4604 = vpack.c.bf16 %v4586, %v4586
        %4613 = vrot.lane.b32.xlu0 %v4597, 19
        %v4614 = vpop.permute.xlu0 %4613
        %4615 = vrot.lane.b32.xlu0 %v4598, 19
        %v4616 = vpop.permute.xlu0 %4615
        %4617 = vrot.lane.b32.xlu0 %v4599, 19
        %v4618 = vpop.permute.xlu0 %4617
        %4619 = vrot.lane.b32.xlu0 %v4600, 19
        %v4620 = vpop.permute.xlu0 %4619
        %4621 = vrot.lane.b32.xlu0 %v4601, 19
        %v4622 = vpop.permute.xlu0 %4621
        %4623 = vrot.lane.b32.xlu0 %v4602, 19
        %v4624 = vpop.permute.xlu0 %4623
        %4625 = vrot.lane.b32.xlu0 %v4603, 19
        %v4626 = vpop.permute.xlu0 %4625
        %4627 = vrot.lane.b32.xlu0 %v4604, 19
        %v4628 = vpop.permute.xlu0 %4627
        %v4629 = vrot.slane %v4614, 4
        %v4630 = vrot.slane %v4618, 4
        %v4631 = vrot.slane %v4622, 4
        %v4632 = vrot.slane %v4626, 4
        %vm4633 = vcmask 154624
        %v4634 = vsel %vm4633, %v4629, %v4614
        %v4635 = vsel %vm4633, %v4629, %v4616
        %v4636 = vsel %vm4633, %v4630, %v4618
        %v4637 = vsel %vm4633, %v4630, %v4620
        %v4638 = vsel %vm4633, %v4631, %v4622
        %v4639 = vsel %vm4633, %v4631, %v4624
        %v4640 = vsel %vm4633, %v4632, %v4626
        %v4641 = vsel %vm4633, %v4632, %v4628
        %vm4650 = vcmask 1043608
        %vm4651 = vcmask 1047556
        %vm4652 = vmor %vm4651, %vm4650
        %4653 = vst.msk [vmem:[#allocation3] sm:$0xff] %vm4652, %v4634
        %vm4654 = vcmask 412672
        %4655 = vst.msk [vmem:[#allocation3 + $0x8] sm:$0xf] %vm4654, %v4635
        %4656 = vst.msk [vmem:[#allocation3 + $0xc] sm:$0xff] %vm4652, %v4636
        %4657 = vst.msk [vmem:[#allocation3 + $0x14] sm:$0xf] %vm4654, %v4637
        %4658 = vst.msk [vmem:[#allocation3 + $0x18] sm:$0xff] %vm4652, %v4638
        %4659 = vst.msk [vmem:[#allocation3 + $0x20] sm:$0xf] %vm4654, %v4639
        %4660 = vst.msk [vmem:[#allocation3 + $0x24] sm:$0xff] %vm4652, %v4640
        %4661 = vst.msk [vmem:[#allocation3 + $0x2c] sm:$0xf] %vm4654, %v4641
        %v4662 = vld [vmem:[%s6] sm:$0xf]
        %v4663 = vld [vmem:[%s6 + $0x4] sm:$0xf]
        %v4664 = vld [vmem:[%s6 + $0x8] sm:$0xf]
        %v4665 = vld [vmem:[%s6 + $0xc] sm:$0xf]
        %v4666 = vld [vmem:[#allocation3] sm:$0xff]
        %v4667 = vld [vmem:[#allocation3 + $0x8] sm:$0xf]
        %v4668 = vld [vmem:[#allocation3 + $0xc] sm:$0xff]
        %v4669 = vld [vmem:[#allocation3 + $0x14] sm:$0xf]
        %v4670 = vld [vmem:[#allocation3 + $0x18] sm:$0xff]
        %v4671 = vld [vmem:[#allocation3 + $0x20] sm:$0xf]
        %v4672 = vld [vmem:[#allocation3 + $0x24] sm:$0xff]
        %v4673 = vld [vmem:[#allocation3 + $0x2c] sm:$0xf]
        %v4674 = vld [vmem:[%s6 + $0x10] sm:$0xf]
        %v4675 = vld [vmem:[%s6 + $0x14] sm:$0xf]
        %v4676 = vld [vmem:[%s6 + $0x18] sm:$0xf]
        %v4677 = vld [vmem:[%s6 + $0x1c] sm:$0xf]
        %v4682 = vunpack.c.l.b16 %v4674
        %v4683 = vunpack.c.l.b16 %v4675
        %v4684 = vunpack.c.l.b16 %v4676
        %v4685 = vunpack.c.l.b16 %v4677
        %v4686 = vpack.c.b16 %v4683, %v4682
        %v4687 = vpack.c.b16 %v4685, %v4684
        %v4696 = vunpack.c.l.b16 %v4666
        %v4697 = vunpack.c.h.b16 %v4666
        %v4698 = vunpack.c.l.b16 %v4667
        %v4699 = vunpack.c.l.b16 %v4668
        %v4700 = vunpack.c.h.b16 %v4668
        %v4701 = vunpack.c.l.b16 %v4669
        %v4702 = vunpack.c.l.b16 %v4670
        %v4703 = vunpack.c.h.b16 %v4670
        %v4704 = vunpack.c.l.b16 %v4671
        %v4705 = vunpack.c.l.b16 %v4672
        %v4706 = vunpack.c.h.b16 %v4672
        %v4707 = vunpack.c.l.b16 %v4673
        %v4708 = vpack.c.b16 %v4699, %v4696
        %v4709 = vpack.c.b16 %v4700, %v4697
        %v4710 = vpack.c.b16 %v4701, %v4698
        %v4711 = vpack.c.b16 %v4705, %v4702
        %v4712 = vpack.c.b16 %v4706, %v4703
        %v4713 = vpack.c.b16 %v4707, %v4704
        %4714 = vrot.lane.b32.xlu0 %v4708, 127
        %v4715 = vpop.permute.xlu0 %4714
        %4716 = vrot.lane.b32.xlu0 %v4709, 127
        %v4717 = vpop.permute.xlu0 %4716
        %4718 = vrot.lane.b32.xlu0 %v4710, 127
        %v4719 = vpop.permute.xlu0 %4718
        %4720 = vrot.lane.b32.xlu0 %v4711, 127
        %v4721 = vpop.permute.xlu0 %4720
        %4722 = vrot.lane.b32.xlu0 %v4712, 127
        %v4723 = vpop.permute.xlu0 %4722
        %4724 = vrot.lane.b32.xlu0 %v4713, 127
        %v4725 = vpop.permute.xlu0 %4724
        %v4726 = vsel %vm1853, %v4715, %v4717
        %v4727 = vsel %vm1853, %v4717, %v4719
        %v4728 = vsel %vm1853, %v4721, %v4723
        %v4729 = vsel %vm1853, %v4723, %v4725
        %vm4736 = vcmask 261120
        %v4738 = vsel %vm4736, %v4686, 0
        %v4741 = vsel %vm4736, %v4687, 0
        %4743 = vmatpush.bf16.msra.mxu0 0
        %4744 = vmatpush.bf16.msra.mxu0 0
        %4745 = vmatpush.bf16.msra.mxu0 0
        %4746 = vmatpush.bf16.msra.mxu0 0
        %4747 = vmatpush.bf16.msra.mxu0 0
        %4748 = vmatpush.bf16.msra.mxu0 0
        %4749 = vmatpush.bf16.msra.mxu0 %v4728
        %4750 = vmatpush.bf16.msra.mxu0 %v4726
        %4751 = vmatmul.bf16.gmra.mxu0 %v4738
        %v4752 = vpop.f32.mrf.mxu0
        %v4753 = vadd.f32 0.0, %v4752
        %v4754 = vpop.f32.mrf.mxu0
        %v4755 = vadd.f32 0.0, %v4754
        %4756 = vmatmul.bf16.gmra.mxu0 %v4741
        %v4757 = vpop.f32.mrf.mxu0
        %v4758 = vadd.f32 0.0, %v4757
        %v4759 = vpop.f32.mrf.mxu0
        %v4760 = vadd.f32 0.0, %v4759
        %4761 = vdwg.mxu0
        %4762 = vmatpush.bf16.msra.mxu0 0
        %4763 = vmatpush.bf16.msra.mxu0 0
        %4764 = vmatpush.bf16.msra.mxu0 0
        %4765 = vmatpush.bf16.msra.mxu0 0
        %4766 = vmatpush.bf16.msra.mxu0 0
        %4767 = vmatpush.bf16.msra.mxu0 0
        %4768 = vmatpush.bf16.msra.mxu0 %v4729
        %4769 = vmatpush.bf16.msra.mxu0 %v4727
        %4770 = vmatmul.bf16.gmra.mxu0 %v4738
        %v4771 = vpop.f32.mrf.mxu0
        %v4772 = vadd.f32 0.0, %v4771
        %v4773 = vpop.f32.mrf.mxu0
        %v4774 = vadd.f32 0.0, %v4773
        %4775 = vmatmul.bf16.gmra.mxu0 %v4741
        %v4776 = vpop.f32.mrf.mxu0
        %v4777 = vadd.f32 0.0, %v4776
        %v4778 = vpop.f32.mrf.mxu0
        %v4779 = vadd.f32 0.0, %v4778
        %4780 = vdwg.mxu0
        %4781 = vmatpush.bf16.msra.mxu0 0
        %4782 = vmatpush.bf16.msra.mxu0 0
        %4783 = vmatpush.bf16.msra.mxu0 0
        %4784 = vmatpush.bf16.msra.mxu0 0
        %4785 = vmatpush.bf16.msra.mxu0 0
        %4786 = vmatpush.bf16.msra.mxu0 0
        %4787 = vmatpush.bf16.msra.mxu0 %v4725
        %4788 = vmatpush.bf16.msra.mxu0 %v4719
        %4789 = vmatmul.bf16.gmra.mxu0 %v4738
        %v4790 = vpop.f32.mrf.mxu0
        %v4791 = vadd.f32 0.0, %v4790
        %v4792 = vpop.f32.mrf.mxu0
        %v4793 = vadd.f32 0.0, %v4792
        %4794 = vmatmul.bf16.gmra.mxu0 %v4741
        %v4795 = vpop.f32.mrf.mxu0
        %v4796 = vadd.f32 0.0, %v4795
        %v4797 = vpop.f32.mrf.mxu0
        %v4798 = vadd.f32 0.0, %v4797
        %4799 = vdwg.mxu0
        %v4804 = vunpack.c.l.b16 %v4662
        %v4805 = vunpack.c.l.b16 %v4663
        %v4806 = vunpack.c.l.b16 %v4664
        %v4807 = vunpack.c.l.b16 %v4665
        %v4808 = vpack.c.b16 %v4805, %v4804
        %v4809 = vpack.c.b16 %v4807, %v4806
        %v4817 = vsel %vm4736, %v4808, 0
        %v4820 = vsel %vm4736, %v4809, 0
        %4822 = vmatpush.bf16.msra.mxu0 0
        %4823 = vmatpush.bf16.msra.mxu0 0
        %4824 = vmatpush.bf16.msra.mxu0 0
        %4825 = vmatpush.bf16.msra.mxu0 0
        %4826 = vmatpush.bf16.msra.mxu0 0
        %4827 = vmatpush.bf16.msra.mxu0 0
        %4828 = vmatpush.bf16.msra.mxu0 %v4711
        %4829 = vmatpush.bf16.msra.mxu0 %v4708
        %4830 = vmatmul.bf16.gmra.mxu0 %v4817
        %v4831 = vpop.f32.mrf.mxu0
        %v4832 = vadd.f32 %v4753, %v4831
        %v4833 = vpop.f32.mrf.mxu0
        %v4834 = vadd.f32 %v4755, %v4833
        %4835 = vmatmul.bf16.gmra.mxu0 %v4820
        %v4836 = vpop.f32.mrf.mxu0
        %v4837 = vadd.f32 %v4758, %v4836
        %v4838 = vpop.f32.mrf.mxu0
        %v4839 = vadd.f32 %v4760, %v4838
        %4840 = vdwg.mxu0
        %4841 = vmatpush.bf16.msra.mxu0 0
        %4842 = vmatpush.bf16.msra.mxu0 0
        %4843 = vmatpush.bf16.msra.mxu0 0
        %4844 = vmatpush.bf16.msra.mxu0 0
        %4845 = vmatpush.bf16.msra.mxu0 0
        %4846 = vmatpush.bf16.msra.mxu0 0
        %4847 = vmatpush.bf16.msra.mxu0 %v4712
        %4848 = vmatpush.bf16.msra.mxu0 %v4709
        %4849 = vmatmul.bf16.gmra.mxu0 %v4817
        %v4850 = vpop.f32.mrf.mxu0
        %v4851 = vadd.f32 %v4772, %v4850
        %v4852 = vpop.f32.mrf.mxu0
        %v4853 = vadd.f32 %v4774, %v4852
        %4854 = vmatmul.bf16.gmra.mxu0 %v4820
        %v4855 = vpop.f32.mrf.mxu0
        %v4856 = vadd.f32 %v4777, %v4855
        %v4857 = vpop.f32.mrf.mxu0
        %v4858 = vadd.f32 %v4779, %v4857
        %4859 = vdwg.mxu0
        %4860 = vmatpush.bf16.msra.mxu0 0
        %4861 = vmatpush.bf16.msra.mxu0 0
        %4862 = vmatpush.bf16.msra.mxu0 0
        %4863 = vmatpush.bf16.msra.mxu0 0
        %4864 = vmatpush.bf16.msra.mxu0 0
        %4865 = vmatpush.bf16.msra.mxu0 0
        %4866 = vmatpush.bf16.msra.mxu0 %v4713
        %4867 = vmatpush.bf16.msra.mxu0 %v4710
        %4868 = vmatmul.bf16.gmra.mxu0 %v4817
        %v4869 = vpop.f32.mrf.mxu0
        %v4870 = vadd.f32 %v4791, %v4869
        %v4871 = vpop.f32.mrf.mxu0
        %v4872 = vadd.f32 %v4793, %v4871
        %4873 = vmatmul.bf16.gmra.mxu0 %v4820
        %v4874 = vpop.f32.mrf.mxu0
        %v4875 = vadd.f32 %v4796, %v4874
        %v4876 = vpop.f32.mrf.mxu0
        %v4877 = vadd.f32 %v4798, %v4876
        %4878 = vdwg.mxu0
        %v4879 = vld [vmem:[%s6 + $0x20] sm:$0xf]
        %v4880 = vld [vmem:[%s6 + $0x24] sm:$0xf]
        %v4881 = vld [vmem:[%s6 + $0x28] sm:$0xf]
        %v4882 = vld [vmem:[%s6 + $0x2c] sm:$0xf]
        %v4887 = vunpack.c.l.b16 %v4879
        %v4888 = vunpack.c.l.b16 %v4880
        %v4889 = vunpack.c.l.b16 %v4881
        %v4890 = vunpack.c.l.b16 %v4882
        %v4891 = vpack.c.b16 %v4888, %v4887
        %v4892 = vpack.c.b16 %v4890, %v4889
        %4893 = vrot.lane.b32.xlu0 %v4708, 126
        %v4894 = vpop.permute.xlu0 %4893
        %4895 = vrot.lane.b32.xlu0 %v4709, 126
        %v4896 = vpop.permute.xlu0 %4895
        %4897 = vrot.lane.b32.xlu0 %v4710, 126
        %v4898 = vpop.permute.xlu0 %4897
        %4899 = vrot.lane.b32.xlu0 %v4711, 126
        %v4900 = vpop.permute.xlu0 %4899
        %4901 = vrot.lane.b32.xlu0 %v4712, 126
        %v4902 = vpop.permute.xlu0 %4901
        %4903 = vrot.lane.b32.xlu0 %v4713, 126
        %v4904 = vpop.permute.xlu0 %4903
        %v4905 = vsel %vm2350, %v4894, %v4896
        %v4906 = vsel %vm2350, %v4896, %v4898
        %v4907 = vsel %vm2350, %v4900, %v4902
        %v4908 = vsel %vm2350, %v4902, %v4904
        %v4916 = vsel %vm4736, %v4891, 0
        %v4919 = vsel %vm4736, %v4892, 0
        %4921 = vmatpush.bf16.msra.mxu0 0
        %4922 = vmatpush.bf16.msra.mxu0 0
        %4923 = vmatpush.bf16.msra.mxu0 0
        %4924 = vmatpush.bf16.msra.mxu0 0
        %4925 = vmatpush.bf16.msra.mxu0 0
        %4926 = vmatpush.bf16.msra.mxu0 0
        %4927 = vmatpush.bf16.msra.mxu0 %v4907
        %4928 = vmatpush.bf16.msra.mxu0 %v4905
        %4929 = vmatmul.bf16.gmra.mxu0 %v4916
        %v4930 = vpop.f32.mrf.mxu0
        %v4931 = vadd.f32 0.0, %v4930
        %v4932 = vpop.f32.mrf.mxu0
        %v4933 = vadd.f32 0.0, %v4932
        %4934 = vmatmul.bf16.gmra.mxu0 %v4919
        %v4935 = vpop.f32.mrf.mxu0
        %v4936 = vadd.f32 0.0, %v4935
        %v4937 = vpop.f32.mrf.mxu0
        %v4938 = vadd.f32 0.0, %v4937
        %4939 = vdwg.mxu0
        %4940 = vmatpush.bf16.msra.mxu0 0
        %4941 = vmatpush.bf16.msra.mxu0 0
        %4942 = vmatpush.bf16.msra.mxu0 0
        %4943 = vmatpush.bf16.msra.mxu0 0
        %4944 = vmatpush.bf16.msra.mxu0 0
        %4945 = vmatpush.bf16.msra.mxu0 0
        %4946 = vmatpush.bf16.msra.mxu0 %v4908
        %4947 = vmatpush.bf16.msra.mxu0 %v4906
        %4948 = vmatmul.bf16.gmra.mxu0 %v4916
        %v4949 = vpop.f32.mrf.mxu0
        %v4950 = vadd.f32 0.0, %v4949
        %v4951 = vpop.f32.mrf.mxu0
        %v4952 = vadd.f32 0.0, %v4951
        %4953 = vmatmul.bf16.gmra.mxu0 %v4919
        %v4954 = vpop.f32.mrf.mxu0
        %v4955 = vadd.f32 0.0, %v4954
        %v4956 = vpop.f32.mrf.mxu0
        %v4957 = vadd.f32 0.0, %v4956
        %4958 = vdwg.mxu0
        %4959 = vmatpush.bf16.msra.mxu0 0
        %4960 = vmatpush.bf16.msra.mxu0 0
        %4961 = vmatpush.bf16.msra.mxu0 0
        %4962 = vmatpush.bf16.msra.mxu0 0
        %4963 = vmatpush.bf16.msra.mxu0 0
        %4964 = vmatpush.bf16.msra.mxu0 0
        %4965 = vmatpush.bf16.msra.mxu0 %v4904
        %4966 = vmatpush.bf16.msra.mxu0 %v4898
        %4967 = vmatmul.bf16.gmra.mxu0 %v4916
        %v4968 = vpop.f32.mrf.mxu0
        %v4969 = vadd.f32 0.0, %v4968
        %v4970 = vpop.f32.mrf.mxu0
        %v4971 = vadd.f32 0.0, %v4970
        %4972 = vmatmul.bf16.gmra.mxu0 %v4919
        %v4973 = vpop.f32.mrf.mxu0
        %v4974 = vadd.f32 0.0, %v4973
        %v4975 = vpop.f32.mrf.mxu0
        %v4976 = vadd.f32 0.0, %v4975
        %4977 = vdwg.mxu0
        %v4978 = vadd.f32 %v4832, %v4931
        %v4979 = vadd.f32 %v4851, %v4950
        %v4980 = vadd.f32 %v4870, %v4969
        %v4981 = vadd.f32 %v4834, %v4933
        %v4982 = vadd.f32 %v4853, %v4952
        %v4983 = vadd.f32 %v4872, %v4971
        %v4984 = vadd.f32 %v4837, %v4936
        %v4985 = vadd.f32 %v4856, %v4955
        %v4986 = vadd.f32 %v4875, %v4974
        %v4987 = vadd.f32 %v4839, %v4938
        %v4988 = vadd.f32 %v4858, %v4957
        %v4989 = vadd.f32 %v4877, %v4976
        %v4990 = vld [vmem:[%s6 + $0x30] sm:$0xf]
        %v4991 = vld [vmem:[%s6 + $0x34] sm:$0xf]
        %v4992 = vld [vmem:[%s6 + $0x38] sm:$0xf]
        %v4993 = vld [vmem:[%s6 + $0x3c] sm:$0xf]
        %v4998 = vunpack.c.l.b16 %v4990
        %v4999 = vunpack.c.l.b16 %v4991
        %v5000 = vunpack.c.l.b16 %v4992
        %v5001 = vunpack.c.l.b16 %v4993
        %v5002 = vpack.c.b16 %v4999, %v4998
        %v5003 = vpack.c.b16 %v5001, %v5000
        %5004 = vrot.lane.b32.xlu0 %v4708, 110
        %v5005 = vpop.permute.xlu0 %5004
        %5006 = vrot.lane.b32.xlu0 %v4709, 110
        %v5007 = vpop.permute.xlu0 %5006
        %5008 = vrot.lane.b32.xlu0 %v4710, 110
        %v5009 = vpop.permute.xlu0 %5008
        %5010 = vrot.lane.b32.xlu0 %v4711, 110
        %v5011 = vpop.permute.xlu0 %5010
        %5012 = vrot.lane.b32.xlu0 %v4712, 110
        %v5013 = vpop.permute.xlu0 %5012
        %5014 = vrot.lane.b32.xlu0 %v4713, 110
        %v5015 = vpop.permute.xlu0 %5014
        %v5016 = vsel %vm2677, %v5005, %v5007
        %v5017 = vsel %vm2677, %v5007, %v5009
        %v5018 = vsel %vm2677, %v5011, %v5013
        %v5019 = vsel %vm2677, %v5013, %v5015
        %v5027 = vsel %vm4736, %v5002, 0
        %v5030 = vsel %vm4736, %v5003, 0
        %5032 = vmatpush.bf16.msra.mxu0 0
        %5033 = vmatpush.bf16.msra.mxu0 0
        %5034 = vmatpush.bf16.msra.mxu0 0
        %5035 = vmatpush.bf16.msra.mxu0 0
        %5036 = vmatpush.bf16.msra.mxu0 0
        %5037 = vmatpush.bf16.msra.mxu0 0
        %5038 = vmatpush.bf16.msra.mxu0 %v5018
        %5039 = vmatpush.bf16.msra.mxu0 %v5016
        %5040 = vmatmul.bf16.gmra.mxu0 %v5027
        %v5041 = vpop.f32.mrf.mxu0
        %v5042 = vadd.f32 0.0, %v5041
        %v5043 = vpop.f32.mrf.mxu0
        %v5044 = vadd.f32 0.0, %v5043
        %5045 = vmatmul.bf16.gmra.mxu0 %v5030
        %v5046 = vpop.f32.mrf.mxu0
        %v5047 = vadd.f32 0.0, %v5046
        %v5048 = vpop.f32.mrf.mxu0
        %v5049 = vadd.f32 0.0, %v5048
        %5050 = vdwg.mxu0
        %5051 = vmatpush.bf16.msra.mxu0 0
        %5052 = vmatpush.bf16.msra.mxu0 0
        %5053 = vmatpush.bf16.msra.mxu0 0
        %5054 = vmatpush.bf16.msra.mxu0 0
        %5055 = vmatpush.bf16.msra.mxu0 0
        %5056 = vmatpush.bf16.msra.mxu0 0
        %5057 = vmatpush.bf16.msra.mxu0 %v5019
        %5058 = vmatpush.bf16.msra.mxu0 %v5017
        %5059 = vmatmul.bf16.gmra.mxu0 %v5027
        %v5060 = vpop.f32.mrf.mxu0
        %v5061 = vadd.f32 0.0, %v5060
        %v5062 = vpop.f32.mrf.mxu0
        %v5063 = vadd.f32 0.0, %v5062
        %5064 = vmatmul.bf16.gmra.mxu0 %v5030
        %v5065 = vpop.f32.mrf.mxu0
        %v5066 = vadd.f32 0.0, %v5065
        %v5067 = vpop.f32.mrf.mxu0
        %v5068 = vadd.f32 0.0, %v5067
        %5069 = vdwg.mxu0
        %5070 = vmatpush.bf16.msra.mxu0 0
        %5071 = vmatpush.bf16.msra.mxu0 0
        %5072 = vmatpush.bf16.msra.mxu0 0
        %5073 = vmatpush.bf16.msra.mxu0 0
        %5074 = vmatpush.bf16.msra.mxu0 0
        %5075 = vmatpush.bf16.msra.mxu0 0
        %5076 = vmatpush.bf16.msra.mxu0 %v5015
        %5077 = vmatpush.bf16.msra.mxu0 %v5009
        %5078 = vmatmul.bf16.gmra.mxu0 %v5027
        %v5079 = vpop.f32.mrf.mxu0
        %v5080 = vadd.f32 0.0, %v5079
        %v5081 = vpop.f32.mrf.mxu0
        %v5082 = vadd.f32 0.0, %v5081
        %5083 = vmatmul.bf16.gmra.mxu0 %v5030
        %v5084 = vpop.f32.mrf.mxu0
        %v5085 = vadd.f32 0.0, %v5084
        %v5086 = vpop.f32.mrf.mxu0
        %v5087 = vadd.f32 0.0, %v5086
        %5088 = vdwg.mxu0
        %v5089 = vadd.f32 %v4978, %v5042
        %v5090 = vadd.f32 %v4979, %v5061
        %v5091 = vadd.f32 %v4980, %v5080
        %v5092 = vadd.f32 %v4981, %v5044
        %v5093 = vadd.f32 %v4982, %v5063
        %v5094 = vadd.f32 %v4983, %v5082
        %v5095 = vadd.f32 %v4984, %v5047
        %v5096 = vadd.f32 %v4985, %v5066
        %v5097 = vadd.f32 %v4986, %v5085
        %v5098 = vadd.f32 %v4987, %v5049
        %v5099 = vadd.f32 %v4988, %v5068
        %v5100 = vadd.f32 %v4989, %v5087
        %v5101 = vld [vmem:[%s6 + $0x40] sm:$0xf]
        %v5102 = vld [vmem:[%s6 + $0x44] sm:$0xf]
        %v5103 = vld [vmem:[%s6 + $0x48] sm:$0xf]
        %v5104 = vld [vmem:[%s6 + $0x4c] sm:$0xf]
        %v5109 = vunpack.c.l.b16 %v5101
        %v5110 = vunpack.c.l.b16 %v5102
        %v5111 = vunpack.c.l.b16 %v5103
        %v5112 = vunpack.c.l.b16 %v5104
        %v5113 = vpack.c.b16 %v5110, %v5109
        %v5114 = vpack.c.b16 %v5112, %v5111
        %5115 = vrot.lane.b32.xlu0 %v4708, 109
        %v5116 = vpop.permute.xlu0 %5115
        %5117 = vrot.lane.b32.xlu0 %v4709, 109
        %v5118 = vpop.permute.xlu0 %5117
        %5119 = vrot.lane.b32.xlu0 %v4710, 109
        %v5120 = vpop.permute.xlu0 %5119
        %5121 = vrot.lane.b32.xlu0 %v4711, 109
        %v5122 = vpop.permute.xlu0 %5121
        %5123 = vrot.lane.b32.xlu0 %v4712, 109
        %v5124 = vpop.permute.xlu0 %5123
        %5125 = vrot.lane.b32.xlu0 %v4713, 109
        %v5126 = vpop.permute.xlu0 %5125
        %v5127 = vsel %vm3004, %v5116, %v5118
        %v5128 = vsel %vm3004, %v5118, %v5120
        %v5129 = vsel %vm3004, %v5122, %v5124
        %v5130 = vsel %vm3004, %v5124, %v5126
        %v5138 = vsel %vm4736, %v5113, 0
        %v5141 = vsel %vm4736, %v5114, 0
        %5143 = vmatpush.bf16.msra.mxu0 0
        %5144 = vmatpush.bf16.msra.mxu0 0
        %5145 = vmatpush.bf16.msra.mxu0 0
        %5146 = vmatpush.bf16.msra.mxu0 0
        %5147 = vmatpush.bf16.msra.mxu0 0
        %5148 = vmatpush.bf16.msra.mxu0 0
        %5149 = vmatpush.bf16.msra.mxu0 %v5129
        %5150 = vmatpush.bf16.msra.mxu0 %v5127
        %5151 = vmatmul.bf16.gmra.mxu0 %v5138
        %v5152 = vpop.f32.mrf.mxu0
        %v5153 = vadd.f32 0.0, %v5152
        %v5154 = vpop.f32.mrf.mxu0
        %v5155 = vadd.f32 0.0, %v5154
        %5156 = vmatmul.bf16.gmra.mxu0 %v5141
        %v5157 = vpop.f32.mrf.mxu0
        %v5158 = vadd.f32 0.0, %v5157
        %v5159 = vpop.f32.mrf.mxu0
        %v5160 = vadd.f32 0.0, %v5159
        %5161 = vdwg.mxu0
        %5162 = vmatpush.bf16.msra.mxu0 0
        %5163 = vmatpush.bf16.msra.mxu0 0
        %5164 = vmatpush.bf16.msra.mxu0 0
        %5165 = vmatpush.bf16.msra.mxu0 0
        %5166 = vmatpush.bf16.msra.mxu0 0
        %5167 = vmatpush.bf16.msra.mxu0 0
        %5168 = vmatpush.bf16.msra.mxu0 %v5130
        %5169 = vmatpush.bf16.msra.mxu0 %v5128
        %5170 = vmatmul.bf16.gmra.mxu0 %v5138
        %v5171 = vpop.f32.mrf.mxu0
        %v5172 = vadd.f32 0.0, %v5171
        %v5173 = vpop.f32.mrf.mxu0
        %v5174 = vadd.f32 0.0, %v5173
        %5175 = vmatmul.bf16.gmra.mxu0 %v5141
        %v5176 = vpop.f32.mrf.mxu0
        %v5177 = vadd.f32 0.0, %v5176
        %v5178 = vpop.f32.mrf.mxu0
        %v5179 = vadd.f32 0.0, %v5178
        %5180 = vdwg.mxu0
        %5181 = vmatpush.bf16.msra.mxu0 0
        %5182 = vmatpush.bf16.msra.mxu0 0
        %5183 = vmatpush.bf16.msra.mxu0 0
        %5184 = vmatpush.bf16.msra.mxu0 0
        %5185 = vmatpush.bf16.msra.mxu0 0
        %5186 = vmatpush.bf16.msra.mxu0 0
        %5187 = vmatpush.bf16.msra.mxu0 %v5126
        %5188 = vmatpush.bf16.msra.mxu0 %v5120
        %5189 = vmatmul.bf16.gmra.mxu0 %v5138
        %v5190 = vpop.f32.mrf.mxu0
        %v5191 = vadd.f32 0.0, %v5190
        %v5192 = vpop.f32.mrf.mxu0
        %v5193 = vadd.f32 0.0, %v5192
        %5194 = vmatmul.bf16.gmra.mxu0 %v5141
        %v5195 = vpop.f32.mrf.mxu0
        %v5196 = vadd.f32 0.0, %v5195
        %v5197 = vpop.f32.mrf.mxu0
        %v5198 = vadd.f32 0.0, %v5197
        %5199 = vdwg.mxu0
        %v5200 = vadd.f32 %v5089, %v5153
        %v5201 = vadd.f32 %v5090, %v5172
        %v5202 = vadd.f32 %v5091, %v5191
        %v5203 = vadd.f32 %v5092, %v5155
        %v5204 = vadd.f32 %v5093, %v5174
        %v5205 = vadd.f32 %v5094, %v5193
        %v5206 = vadd.f32 %v5095, %v5158
        %v5207 = vadd.f32 %v5096, %v5177
        %v5208 = vadd.f32 %v5097, %v5196
        %v5209 = vadd.f32 %v5098, %v5160
        %v5210 = vadd.f32 %v5099, %v5179
        %v5211 = vadd.f32 %v5100, %v5198
        %v5212 = vld [vmem:[%s6 + $0x50] sm:$0xf]
        %v5213 = vld [vmem:[%s6 + $0x54] sm:$0xf]
        %v5214 = vld [vmem:[%s6 + $0x58] sm:$0xf]
        %v5215 = vld [vmem:[%s6 + $0x5c] sm:$0xf]
        %v5220 = vunpack.c.l.b16 %v5212
        %v5221 = vunpack.c.l.b16 %v5213
        %v5222 = vunpack.c.l.b16 %v5214
        %v5223 = vunpack.c.l.b16 %v5215
        %v5224 = vpack.c.b16 %v5221, %v5220
        %v5225 = vpack.c.b16 %v5223, %v5222
        %5226 = vrot.lane.b32.xlu0 %v4708, 108
        %v5227 = vpop.permute.xlu0 %5226
        %5228 = vrot.lane.b32.xlu0 %v4709, 108
        %v5229 = vpop.permute.xlu0 %5228
        %5230 = vrot.lane.b32.xlu0 %v4710, 108
        %v5231 = vpop.permute.xlu0 %5230
        %5232 = vrot.lane.b32.xlu0 %v4711, 108
        %v5233 = vpop.permute.xlu0 %5232
        %5234 = vrot.lane.b32.xlu0 %v4712, 108
        %v5235 = vpop.permute.xlu0 %5234
        %5236 = vrot.lane.b32.xlu0 %v4713, 108
        %v5237 = vpop.permute.xlu0 %5236
        %v5238 = vsel %vm3331, %v5227, %v5229
        %v5239 = vsel %vm3331, %v5229, %v5231
        %v5240 = vsel %vm3331, %v5233, %v5235
        %v5241 = vsel %vm3331, %v5235, %v5237
        %v5249 = vsel %vm4736, %v5224, 0
        %v5252 = vsel %vm4736, %v5225, 0
        %5254 = vmatpush.bf16.msra.mxu0 0
        %5255 = vmatpush.bf16.msra.mxu0 0
        %5256 = vmatpush.bf16.msra.mxu0 0
        %5257 = vmatpush.bf16.msra.mxu0 0
        %5258 = vmatpush.bf16.msra.mxu0 0
        %5259 = vmatpush.bf16.msra.mxu0 0
        %5260 = vmatpush.bf16.msra.mxu0 %v5240
        %5261 = vmatpush.bf16.msra.mxu0 %v5238
        %5262 = vmatmul.bf16.gmra.mxu0 %v5249
        %v5263 = vpop.f32.mrf.mxu0
        %v5264 = vadd.f32 0.0, %v5263
        %v5265 = vpop.f32.mrf.mxu0
        %v5266 = vadd.f32 0.0, %v5265
        %5267 = vmatmul.bf16.gmra.mxu0 %v5252
        %v5268 = vpop.f32.mrf.mxu0
        %v5269 = vadd.f32 0.0, %v5268
        %v5270 = vpop.f32.mrf.mxu0
        %v5271 = vadd.f32 0.0, %v5270
        %5272 = vdwg.mxu0
        %5273 = vmatpush.bf16.msra.mxu0 0
        %5274 = vmatpush.bf16.msra.mxu0 0
        %5275 = vmatpush.bf16.msra.mxu0 0
        %5276 = vmatpush.bf16.msra.mxu0 0
        %5277 = vmatpush.bf16.msra.mxu0 0
        %5278 = vmatpush.bf16.msra.mxu0 0
        %5279 = vmatpush.bf16.msra.mxu0 %v5241
        %5280 = vmatpush.bf16.msra.mxu0 %v5239
        %5281 = vmatmul.bf16.gmra.mxu0 %v5249
        %v5282 = vpop.f32.mrf.mxu0
        %v5283 = vadd.f32 0.0, %v5282
        %v5284 = vpop.f32.mrf.mxu0
        %v5285 = vadd.f32 0.0, %v5284
        %5286 = vmatmul.bf16.gmra.mxu0 %v5252
        %v5287 = vpop.f32.mrf.mxu0
        %v5288 = vadd.f32 0.0, %v5287
        %v5289 = vpop.f32.mrf.mxu0
        %v5290 = vadd.f32 0.0, %v5289
        %5291 = vdwg.mxu0
        %5292 = vmatpush.bf16.msra.mxu0 0
        %5293 = vmatpush.bf16.msra.mxu0 0
        %5294 = vmatpush.bf16.msra.mxu0 0
        %5295 = vmatpush.bf16.msra.mxu0 0
        %5296 = vmatpush.bf16.msra.mxu0 0
        %5297 = vmatpush.bf16.msra.mxu0 0
        %5298 = vmatpush.bf16.msra.mxu0 %v5237
        %5299 = vmatpush.bf16.msra.mxu0 %v5231
        %5300 = vmatmul.bf16.gmra.mxu0 %v5249
        %v5301 = vpop.f32.mrf.mxu0
        %v5302 = vadd.f32 0.0, %v5301
        %v5303 = vpop.f32.mrf.mxu0
        %v5304 = vadd.f32 0.0, %v5303
        %5305 = vmatmul.bf16.gmra.mxu0 %v5252
        %v5306 = vpop.f32.mrf.mxu0
        %v5307 = vadd.f32 0.0, %v5306
        %v5308 = vpop.f32.mrf.mxu0
        %v5309 = vadd.f32 0.0, %v5308
        %5310 = vdwg.mxu0
        %v5311 = vadd.f32 %v5200, %v5264
        %v5312 = vadd.f32 %v5201, %v5283
        %v5313 = vadd.f32 %v5202, %v5302
        %v5314 = vadd.f32 %v5203, %v5266
        %v5315 = vadd.f32 %v5204, %v5285
        %v5316 = vadd.f32 %v5205, %v5304
        %v5317 = vadd.f32 %v5206, %v5269
        %v5318 = vadd.f32 %v5207, %v5288
        %v5319 = vadd.f32 %v5208, %v5307
        %v5320 = vadd.f32 %v5209, %v5271
        %v5321 = vadd.f32 %v5210, %v5290
        %v5322 = vadd.f32 %v5211, %v5309
        %v5323 = vld [vmem:[%s6 + $0x60] sm:$0xf]
        %v5324 = vld [vmem:[%s6 + $0x64] sm:$0xf]
        %v5325 = vld [vmem:[%s6 + $0x68] sm:$0xf]
        %v5326 = vld [vmem:[%s6 + $0x6c] sm:$0xf]
        %v5331 = vunpack.c.l.b16 %v5323
        %v5332 = vunpack.c.l.b16 %v5324
        %v5333 = vunpack.c.l.b16 %v5325
        %v5334 = vunpack.c.l.b16 %v5326
        %v5335 = vpack.c.b16 %v5332, %v5331
        %v5336 = vpack.c.b16 %v5334, %v5333
        %5337 = vrot.lane.b32.xlu0 %v4708, 92
        %v5338 = vpop.permute.xlu0 %5337
        %5339 = vrot.lane.b32.xlu0 %v4709, 92
        %v5340 = vpop.permute.xlu0 %5339
        %5341 = vrot.lane.b32.xlu0 %v4710, 92
        %v5342 = vpop.permute.xlu0 %5341
        %5343 = vrot.lane.b32.xlu0 %v4711, 92
        %v5344 = vpop.permute.xlu0 %5343
        %5345 = vrot.lane.b32.xlu0 %v4712, 92
        %v5346 = vpop.permute.xlu0 %5345
        %5347 = vrot.lane.b32.xlu0 %v4713, 92
        %v5348 = vpop.permute.xlu0 %5347
        %v5349 = vsel %vm3658, %v5338, %v5340
        %v5350 = vsel %vm3658, %v5340, %v5342
        %v5351 = vsel %vm3658, %v5344, %v5346
        %v5352 = vsel %vm3658, %v5346, %v5348
        %v5360 = vsel %vm4736, %v5335, 0
        %v5363 = vsel %vm4736, %v5336, 0
        %5365 = vmatpush.bf16.msra.mxu0 0
        %5366 = vmatpush.bf16.msra.mxu0 0
        %5367 = vmatpush.bf16.msra.mxu0 0
        %5368 = vmatpush.bf16.msra.mxu0 0
        %5369 = vmatpush.bf16.msra.mxu0 0
        %5370 = vmatpush.bf16.msra.mxu0 0
        %5371 = vmatpush.bf16.msra.mxu0 %v5351
        %5372 = vmatpush.bf16.msra.mxu0 %v5349
        %5373 = vmatmul.bf16.gmra.mxu0 %v5360
        %v5374 = vpop.f32.mrf.mxu0
        %v5375 = vadd.f32 0.0, %v5374
        %v5376 = vpop.f32.mrf.mxu0
        %v5377 = vadd.f32 0.0, %v5376
        %5378 = vmatmul.bf16.gmra.mxu0 %v5363
        %v5379 = vpop.f32.mrf.mxu0
        %v5380 = vadd.f32 0.0, %v5379
        %v5381 = vpop.f32.mrf.mxu0
        %v5382 = vadd.f32 0.0, %v5381
        %5383 = vdwg.mxu0
        %5384 = vmatpush.bf16.msra.mxu0 0
        %5385 = vmatpush.bf16.msra.mxu0 0
        %5386 = vmatpush.bf16.msra.mxu0 0
        %5387 = vmatpush.bf16.msra.mxu0 0
        %5388 = vmatpush.bf16.msra.mxu0 0
        %5389 = vmatpush.bf16.msra.mxu0 0
        %5390 = vmatpush.bf16.msra.mxu0 %v5352
        %5391 = vmatpush.bf16.msra.mxu0 %v5350
        %5392 = vmatmul.bf16.gmra.mxu0 %v5360
        %v5393 = vpop.f32.mrf.mxu0
        %v5394 = vadd.f32 0.0, %v5393
        %v5395 = vpop.f32.mrf.mxu0
        %v5396 = vadd.f32 0.0, %v5395
        %5397 = vmatmul.bf16.gmra.mxu0 %v5363
        %v5398 = vpop.f32.mrf.mxu0
        %v5399 = vadd.f32 0.0, %v5398
        %v5400 = vpop.f32.mrf.mxu0
        %v5401 = vadd.f32 0.0, %v5400
        %5402 = vdwg.mxu0
        %5403 = vmatpush.bf16.msra.mxu0 0
        %5404 = vmatpush.bf16.msra.mxu0 0
        %5405 = vmatpush.bf16.msra.mxu0 0
        %5406 = vmatpush.bf16.msra.mxu0 0
        %5407 = vmatpush.bf16.msra.mxu0 0
        %5408 = vmatpush.bf16.msra.mxu0 0
        %5409 = vmatpush.bf16.msra.mxu0 %v5348
        %5410 = vmatpush.bf16.msra.mxu0 %v5342
        %5411 = vmatmul.bf16.gmra.mxu0 %v5360
        %v5412 = vpop.f32.mrf.mxu0
        %v5413 = vadd.f32 0.0, %v5412
        %v5414 = vpop.f32.mrf.mxu0
        %v5415 = vadd.f32 0.0, %v5414
        %5416 = vmatmul.bf16.gmra.mxu0 %v5363
        %v5417 = vpop.f32.mrf.mxu0
        %v5418 = vadd.f32 0.0, %v5417
        %v5419 = vpop.f32.mrf.mxu0
        %v5420 = vadd.f32 0.0, %v5419
        %5421 = vdwg.mxu0
        %v5422 = vadd.f32 %v5311, %v5375
        %v5423 = vadd.f32 %v5312, %v5394
        %v5424 = vadd.f32 %v5313, %v5413
        %v5425 = vadd.f32 %v5314, %v5377
        %v5426 = vadd.f32 %v5315, %v5396
        %v5427 = vadd.f32 %v5316, %v5415
        %v5428 = vadd.f32 %v5317, %v5380
        %v5429 = vadd.f32 %v5318, %v5399
        %v5430 = vadd.f32 %v5319, %v5418
        %v5431 = vadd.f32 %v5320, %v5382
        %v5432 = vadd.f32 %v5321, %v5401
        %v5433 = vadd.f32 %v5322, %v5420
        %v5434 = vld [vmem:[%s6 + $0x70] sm:$0xf]
        %v5435 = vld [vmem:[%s6 + $0x74] sm:$0xf]
        %v5436 = vld [vmem:[%s6 + $0x78] sm:$0xf]
        %v5437 = vld [vmem:[%s6 + $0x7c] sm:$0xf]
        %v5442 = vunpack.c.l.b16 %v5434
        %v5443 = vunpack.c.l.b16 %v5435
        %v5444 = vunpack.c.l.b16 %v5436
        %v5445 = vunpack.c.l.b16 %v5437
        %v5446 = vpack.c.b16 %v5443, %v5442
        %v5447 = vpack.c.b16 %v5445, %v5444
        %5448 = vrot.lane.b32.xlu0 %v4708, 91
        %v5449 = vpop.permute.xlu0 %5448
        %5450 = vrot.lane.b32.xlu0 %v4709, 91
        %v5451 = vpop.permute.xlu0 %5450
        %5452 = vrot.lane.b32.xlu0 %v4710, 91
        %v5453 = vpop.permute.xlu0 %5452
        %5454 = vrot.lane.b32.xlu0 %v4711, 91
        %v5455 = vpop.permute.xlu0 %5454
        %5456 = vrot.lane.b32.xlu0 %v4712, 91
        %v5457 = vpop.permute.xlu0 %5456
        %5458 = vrot.lane.b32.xlu0 %v4713, 91
        %v5459 = vpop.permute.xlu0 %5458
        %v5460 = vsel %vm3985, %v5449, %v5451
        %v5461 = vsel %vm3985, %v5451, %v5453
        %v5462 = vsel %vm3985, %v5455, %v5457
        %v5463 = vsel %vm3985, %v5457, %v5459
        %v5471 = vsel %vm4736, %v5446, 0
        %v5474 = vsel %vm4736, %v5447, 0
        %5476 = vmatpush.bf16.msra.mxu0 0
        %5477 = vmatpush.bf16.msra.mxu0 0
        %5478 = vmatpush.bf16.msra.mxu0 0
        %5479 = vmatpush.bf16.msra.mxu0 0
        %5480 = vmatpush.bf16.msra.mxu0 0
        %5481 = vmatpush.bf16.msra.mxu0 0
        %5482 = vmatpush.bf16.msra.mxu0 %v5462
        %5483 = vmatpush.bf16.msra.mxu0 %v5460
        %5484 = vmatmul.bf16.gmra.mxu0 %v5471
        %v5485 = vpop.f32.mrf.mxu0
        %v5486 = vadd.f32 0.0, %v5485
        %v5487 = vpop.f32.mrf.mxu0
        %v5488 = vadd.f32 0.0, %v5487
        %5489 = vmatmul.bf16.gmra.mxu0 %v5474
        %v5490 = vpop.f32.mrf.mxu0
        %v5491 = vadd.f32 0.0, %v5490
        %v5492 = vpop.f32.mrf.mxu0
        %v5493 = vadd.f32 0.0, %v5492
        %5494 = vdwg.mxu0
        %5495 = vmatpush.bf16.msra.mxu0 0
        %5496 = vmatpush.bf16.msra.mxu0 0
        %5497 = vmatpush.bf16.msra.mxu0 0
        %5498 = vmatpush.bf16.msra.mxu0 0
        %5499 = vmatpush.bf16.msra.mxu0 0
        %5500 = vmatpush.bf16.msra.mxu0 0
        %5501 = vmatpush.bf16.msra.mxu0 %v5463
        %5502 = vmatpush.bf16.msra.mxu0 %v5461
        %5503 = vmatmul.bf16.gmra.mxu0 %v5471
        %v5504 = vpop.f32.mrf.mxu0
        %v5505 = vadd.f32 0.0, %v5504
        %v5506 = vpop.f32.mrf.mxu0
        %v5507 = vadd.f32 0.0, %v5506
        %5508 = vmatmul.bf16.gmra.mxu0 %v5474
        %v5509 = vpop.f32.mrf.mxu0
        %v5510 = vadd.f32 0.0, %v5509
        %v5511 = vpop.f32.mrf.mxu0
        %v5512 = vadd.f32 0.0, %v5511
        %5513 = vdwg.mxu0
        %5514 = vmatpush.bf16.msra.mxu0 0
        %5515 = vmatpush.bf16.msra.mxu0 0
        %5516 = vmatpush.bf16.msra.mxu0 0
        %5517 = vmatpush.bf16.msra.mxu0 0
        %5518 = vmatpush.bf16.msra.mxu0 0
        %5519 = vmatpush.bf16.msra.mxu0 0
        %5520 = vmatpush.bf16.msra.mxu0 %v5459
        %5521 = vmatpush.bf16.msra.mxu0 %v5453
        %5522 = vmatmul.bf16.gmra.mxu0 %v5471
        %v5523 = vpop.f32.mrf.mxu0
        %v5524 = vadd.f32 0.0, %v5523
        %v5525 = vpop.f32.mrf.mxu0
        %v5526 = vadd.f32 0.0, %v5525
        %5527 = vmatmul.bf16.gmra.mxu0 %v5474
        %v5528 = vpop.f32.mrf.mxu0
        %v5529 = vadd.f32 0.0, %v5528
        %v5530 = vpop.f32.mrf.mxu0
        %v5531 = vadd.f32 0.0, %v5530
        %5532 = vdwg.mxu0
        %v5533 = vadd.f32 %v5422, %v5486
        %v5534 = vadd.f32 %v5423, %v5505
        %v5535 = vadd.f32 %v5424, %v5524
        %v5536 = vadd.f32 %v5425, %v5488
        %v5537 = vadd.f32 %v5426, %v5507
        %v5538 = vadd.f32 %v5427, %v5526
        %v5539 = vadd.f32 %v5428, %v5491
        %v5540 = vadd.f32 %v5429, %v5510
        %v5541 = vadd.f32 %v5430, %v5529
        %v5542 = vadd.f32 %v5431, %v5493
        %v5543 = vadd.f32 %v5432, %v5512
        %v5544 = vadd.f32 %v5433, %v5531
        %v5545 = vld [vmem:[%s6 + $0x80] sm:$0xf]
        %v5546 = vld [vmem:[%s6 + $0x84] sm:$0xf]
        %v5547 = vld [vmem:[%s6 + $0x88] sm:$0xf]
        %v5548 = vld [vmem:[%s6 + $0x8c] sm:$0xf]
        %v5553 = vunpack.c.l.b16 %v5545
        %v5554 = vunpack.c.l.b16 %v5546
        %v5555 = vunpack.c.l.b16 %v5547
        %v5556 = vunpack.c.l.b16 %v5548
        %v5557 = vpack.c.b16 %v5554, %v5553
        %v5558 = vpack.c.b16 %v5556, %v5555
        %5559 = vrot.lane.b32.xlu0 %v4708, 90
        %v5560 = vpop.permute.xlu0 %5559
        %5561 = vrot.lane.b32.xlu0 %v4709, 90
        %v5562 = vpop.permute.xlu0 %5561
        %5563 = vrot.lane.b32.xlu0 %v4710, 90
        %v5564 = vpop.permute.xlu0 %5563
        %5565 = vrot.lane.b32.xlu0 %v4711, 90
        %v5566 = vpop.permute.xlu0 %5565
        %5567 = vrot.lane.b32.xlu0 %v4712, 90
        %v5568 = vpop.permute.xlu0 %5567
        %5569 = vrot.lane.b32.xlu0 %v4713, 90
        %v5570 = vpop.permute.xlu0 %5569
        %v5571 = vsel %vm4312, %v5560, %v5562
        %v5572 = vsel %vm4312, %v5562, %v5564
        %v5573 = vsel %vm4312, %v5566, %v5568
        %v5574 = vsel %vm4312, %v5568, %v5570
        %v5582 = vsel %vm4736, %v5557, 0
        %v5585 = vsel %vm4736, %v5558, 0
        %5587 = vmatpush.bf16.msra.mxu0 0
        %5588 = vmatpush.bf16.msra.mxu0 0
        %5589 = vmatpush.bf16.msra.mxu0 0
        %5590 = vmatpush.bf16.msra.mxu0 0
        %5591 = vmatpush.bf16.msra.mxu0 0
        %5592 = vmatpush.bf16.msra.mxu0 0
        %5593 = vmatpush.bf16.msra.mxu0 %v5573
        %5594 = vmatpush.bf16.msra.mxu0 %v5571
        %5595 = vmatmul.bf16.gmra.mxu0 %v5582
        %v5596 = vpop.f32.mrf.mxu0
        %v5597 = vadd.f32 0.0, %v5596
        %v5598 = vpop.f32.mrf.mxu0
        %v5599 = vadd.f32 0.0, %v5598
        %5600 = vmatmul.bf16.gmra.mxu0 %v5585
        %v5601 = vpop.f32.mrf.mxu0
        %v5602 = vadd.f32 0.0, %v5601
        %v5603 = vpop.f32.mrf.mxu0
        %v5604 = vadd.f32 0.0, %v5603
        %5605 = vdwg.mxu0
        %5606 = vmatpush.bf16.msra.mxu0 0
        %5607 = vmatpush.bf16.msra.mxu0 0
        %5608 = vmatpush.bf16.msra.mxu0 0
        %5609 = vmatpush.bf16.msra.mxu0 0
        %5610 = vmatpush.bf16.msra.mxu0 0
        %5611 = vmatpush.bf16.msra.mxu0 0
        %5612 = vmatpush.bf16.msra.mxu0 %v5574
        %5613 = vmatpush.bf16.msra.mxu0 %v5572
        %5614 = vmatmul.bf16.gmra.mxu0 %v5582
        %v5615 = vpop.f32.mrf.mxu0
        %v5616 = vadd.f32 0.0, %v5615
        %v5617 = vpop.f32.mrf.mxu0
        %v5618 = vadd.f32 0.0, %v5617
        %5619 = vmatmul.bf16.gmra.mxu0 %v5585
        %v5620 = vpop.f32.mrf.mxu0
        %v5621 = vadd.f32 0.0, %v5620
        %v5622 = vpop.f32.mrf.mxu0
        %v5623 = vadd.f32 0.0, %v5622
        %5624 = vdwg.mxu0
        %5625 = vmatpush.bf16.msra.mxu0 0
        %5626 = vmatpush.bf16.msra.mxu0 0
        %5627 = vmatpush.bf16.msra.mxu0 0
        %5628 = vmatpush.bf16.msra.mxu0 0
        %5629 = vmatpush.bf16.msra.mxu0 0
        %5630 = vmatpush.bf16.msra.mxu0 0
        %5631 = vmatpush.bf16.msra.mxu0 %v5570
        %5632 = vmatpush.bf16.msra.mxu0 %v5564
        %5633 = vmatmul.bf16.gmra.mxu0 %v5582
        %v5634 = vpop.f32.mrf.mxu0
        %v5635 = vadd.f32 0.0, %v5634
        %v5636 = vpop.f32.mrf.mxu0
        %v5637 = vadd.f32 0.0, %v5636
        %5638 = vmatmul.bf16.gmra.mxu0 %v5585
        %v5639 = vpop.f32.mrf.mxu0
        %v5640 = vadd.f32 0.0, %v5639
        %v5641 = vpop.f32.mrf.mxu0
        %v5642 = vadd.f32 0.0, %v5641
        %5643 = vdwg.mxu0
        %v5644 = vadd.f32 %v5533, %v5597
        %v5645 = vadd.f32 %v5534, %v5616
        %v5646 = vadd.f32 %v5535, %v5635
        %v5647 = vadd.f32 %v5536, %v5599
        %v5648 = vadd.f32 %v5537, %v5618
        %v5649 = vadd.f32 %v5538, %v5637
        %v5650 = vadd.f32 %v5539, %v5602
        %v5651 = vadd.f32 %v5540, %v5621
        %v5652 = vadd.f32 %v5541, %v5640
        %v5653 = vadd.f32 %v5542, %v5604
        %v5654 = vadd.f32 %v5543, %v5623
        %v5655 = vadd.f32 %v5544, %v5642
        %v5656 = vld [vmem:[%s7] sm:$0xff]
        %v5657 = vld [vmem:[%s7 + $0x8] sm:$0xff]
        %v5658 = vld [vmem:[%s7 + $0x10] sm:$0xff]
        %v5659 = vld [vmem:[%s7 + $0x18] sm:$0xff]
        %5661 = vset.pattern.permute.xlu0 0
        %5662 = vperm.xlu0 %5661, %v5656
        %v5663 = vpop.permute.xlu0 %5662
        %5666 = vset.pattern.permute.xlu0 0
        %5667 = vperm.xlu0 %5666, %v5657
        %v5668 = vpop.permute.xlu0 %5667
        %5671 = vset.pattern.permute.xlu0 0
        %5672 = vperm.xlu0 %5671, %v5658
        %v5673 = vpop.permute.xlu0 %5672
        %5676 = vset.pattern.permute.xlu0 0
        %5677 = vperm.xlu0 %5676, %v5659
        %v5678 = vpop.permute.xlu0 %5677
        %v5680 = vadd.f32 %v5644, %v5663
        %v5681 = vadd.f32 %v5645, %v5663
        %v5682 = vadd.f32 %v5646, %v5663
        %v5683 = vadd.f32 %v5647, %v5668
        %v5684 = vadd.f32 %v5648, %v5668
        %v5685 = vadd.f32 %v5649, %v5668
        %v5686 = vadd.f32 %v5650, %v5673
        %v5687 = vadd.f32 %v5651, %v5673
        %v5688 = vadd.f32 %v5652, %v5673
        %v5689 = vadd.f32 %v5653, %v5678
        %v5690 = vadd.f32 %v5654, %v5678
        %v5691 = vadd.f32 %v5655, %v5678
        %v5692 = vmax.f32 %v5680, 0.0
        %v5693 = vmax.f32 %v5681, 0.0
        %v5694 = vmax.f32 %v5682, 0.0
        %v5695 = vmax.f32 %v5683, 0.0
        %v5696 = vmax.f32 %v5684, 0.0
        %v5697 = vmax.f32 %v5685, 0.0
        %v5698 = vmax.f32 %v5686, 0.0
        %v5699 = vmax.f32 %v5687, 0.0
        %v5700 = vmax.f32 %v5688, 0.0
        %v5701 = vmax.f32 %v5689, 0.0
        %v5702 = vmax.f32 %v5690, 0.0
        %v5703 = vmax.f32 %v5691, 0.0
        %v5704 = vld [vmem:[#allocation9] sm:$0x7]
        %v5706 = vperm.slane %v5704, 0
        %v5707 = vperm.slane %v5704, 1
        %v5708 = vperm.slane %v5704, 2
        %v5712 = vmul.f32 %v5692, %v5706
        %v5713 = vmul.f32 %v5693, %v5707
        %v5714 = vmul.f32 %v5694, %v5708
        %v5715 = vmul.f32 %v5695, %v5706
        %v5716 = vmul.f32 %v5696, %v5707
        %v5717 = vmul.f32 %v5697, %v5708
        %v5718 = vmul.f32 %v5698, %v5706
        %v5719 = vmul.f32 %v5699, %v5707
        %v5720 = vmul.f32 %v5700, %v5708
        %v5721 = vmul.f32 %v5701, %v5706
        %v5722 = vmul.f32 %v5702, %v5707
        %v5723 = vmul.f32 %v5703, %v5708
        %5724 = vst.msk [vmem:[#allocation4] sm:$0xf] %vm4587, 0
        %5725 = vst.msk [vmem:[#allocation4 + $0xc] sm:$0xf] %vm4587, 0
        %5726 = vst.msk [vmem:[#allocation4 + $0x18] sm:$0xf] %vm4587, 0
        %5727 = vst.msk [vmem:[#allocation4 + $0x24] sm:$0xf] %vm4587, 0
        %5728 = vst.msk [vmem:[#allocation4 + $0x8] sm:$0xf] %vm4592, 0
        %5729 = vst.msk [vmem:[#allocation4 + $0x14] sm:$0xf] %vm4592, 0
        %5730 = vst.msk [vmem:[#allocation4 + $0x20] sm:$0xf] %vm4592, 0
        %5731 = vst.msk [vmem:[#allocation4 + $0x2c] sm:$0xf] %vm4592, 0
        %v5732 = vpack.c.bf16 %v5713, %v5712
        %v5733 = vpack.c.bf16 %v5714, %v5714
        %v5734 = vpack.c.bf16 %v5716, %v5715
        %v5735 = vpack.c.bf16 %v5717, %v5717
        %v5736 = vpack.c.bf16 %v5719, %v5718
        %v5737 = vpack.c.bf16 %v5720, %v5720
        %v5738 = vpack.c.bf16 %v5722, %v5721
        %v5739 = vpack.c.bf16 %v5723, %v5723
        %5748 = vrot.lane.b32.xlu0 %v5732, 19
        %v5749 = vpop.permute.xlu0 %5748
        %5750 = vrot.lane.b32.xlu0 %v5733, 19
        %v5751 = vpop.permute.xlu0 %5750
        %5752 = vrot.lane.b32.xlu0 %v5734, 19
        %v5753 = vpop.permute.xlu0 %5752
        %5754 = vrot.lane.b32.xlu0 %v5735, 19
        %v5755 = vpop.permute.xlu0 %5754
        %5756 = vrot.lane.b32.xlu0 %v5736, 19
        %v5757 = vpop.permute.xlu0 %5756
        %5758 = vrot.lane.b32.xlu0 %v5737, 19
        %v5759 = vpop.permute.xlu0 %5758
        %5760 = vrot.lane.b32.xlu0 %v5738, 19
        %v5761 = vpop.permute.xlu0 %5760
        %5762 = vrot.lane.b32.xlu0 %v5739, 19
        %v5763 = vpop.permute.xlu0 %5762
        %v5764 = vrot.slane %v5749, 4
        %v5765 = vrot.slane %v5753, 4
        %v5766 = vrot.slane %v5757, 4
        %v5767 = vrot.slane %v5761, 4
        %v5768 = vsel %vm4633, %v5764, %v5749
        %v5769 = vsel %vm4633, %v5764, %v5751
        %v5770 = vsel %vm4633, %v5765, %v5753
        %v5771 = vsel %vm4633, %v5765, %v5755
        %v5772 = vsel %vm4633, %v5766, %v5757
        %v5773 = vsel %vm4633, %v5766, %v5759
        %v5774 = vsel %vm4633, %v5767, %v5761
        %v5775 = vsel %vm4633, %v5767, %v5763
        %5784 = vst.msk [vmem:[#allocation4] sm:$0xff] %vm4652, %v5768
        %5785 = vst.msk [vmem:[#allocation4 + $0x8] sm:$0xf] %vm4654, %v5769
        %5786 = vst.msk [vmem:[#allocation4 + $0xc] sm:$0xff] %vm4652, %v5770
        %5787 = vst.msk [vmem:[#allocation4 + $0x14] sm:$0xf] %vm4654, %v5771
        %5788 = vst.msk [vmem:[#allocation4 + $0x18] sm:$0xff] %vm4652, %v5772
        %5789 = vst.msk [vmem:[#allocation4 + $0x20] sm:$0xf] %vm4654, %v5773
        %5790 = vst.msk [vmem:[#allocation4 + $0x24] sm:$0xff] %vm4652, %v5774
        %5791 = vst.msk [vmem:[#allocation4 + $0x2c] sm:$0xf] %vm4654, %v5775
        %v5792 = vld [vmem:[%s8] sm:$0xf]
        %v5793 = vld [vmem:[%s8 + $0x4] sm:$0xf]
        %v5794 = vld [vmem:[#allocation4] sm:$0xff]
        %v5795 = vld [vmem:[#allocation4 + $0x8] sm:$0xf]
        %v5796 = vld [vmem:[#allocation4 + $0xc] sm:$0xff]
        %v5797 = vld [vmem:[#allocation4 + $0x14] sm:$0xf]
        %v5798 = vld [vmem:[#allocation4 + $0x18] sm:$0xff]
        %v5799 = vld [vmem:[#allocation4 + $0x20] sm:$0xf]
        %v5800 = vld [vmem:[#allocation4 + $0x24] sm:$0xff]
        %v5801 = vld [vmem:[#allocation4 + $0x2c] sm:$0xf]
        %v5802 = vld [vmem:[%s8 + $0x8] sm:$0xf]
        %v5803 = vld [vmem:[%s8 + $0xc] sm:$0xf]
        %v5806 = vunpack.c.l.b16 %v5802
        %v5807 = vunpack.c.l.b16 %v5803
        %v5808 = vpack.c.b16 %v5807, %v5806
        %v5817 = vunpack.c.l.b16 %v5794
        %v5818 = vunpack.c.h.b16 %v5794
        %v5819 = vunpack.c.l.b16 %v5795
        %v5820 = vunpack.c.l.b16 %v5796
        %v5821 = vunpack.c.h.b16 %v5796
        %v5822 = vunpack.c.l.b16 %v5797
        %v5823 = vunpack.c.l.b16 %v5798
        %v5824 = vunpack.c.h.b16 %v5798
        %v5825 = vunpack.c.l.b16 %v5799
        %v5826 = vunpack.c.l.b16 %v5800
        %v5827 = vunpack.c.h.b16 %v5800
        %v5828 = vunpack.c.l.b16 %v5801
        %v5829 = vpack.c.b16 %v5820, %v5817
        %v5830 = vpack.c.b16 %v5821, %v5818
        %v5831 = vpack.c.b16 %v5822, %v5819
        %v5832 = vpack.c.b16 %v5826, %v5823
        %v5833 = vpack.c.b16 %v5827, %v5824
        %v5834 = vpack.c.b16 %v5828, %v5825
        %5835 = vrot.lane.b32.xlu0 %v5829, 127
        %v5836 = vpop.permute.xlu0 %5835
        %5837 = vrot.lane.b32.xlu0 %v5830, 127
        %v5838 = vpop.permute.xlu0 %5837
        %5839 = vrot.lane.b32.xlu0 %v5831, 127
        %v5840 = vpop.permute.xlu0 %5839
        %5841 = vrot.lane.b32.xlu0 %v5832, 127
        %v5842 = vpop.permute.xlu0 %5841
        %5843 = vrot.lane.b32.xlu0 %v5833, 127
        %v5844 = vpop.permute.xlu0 %5843
        %5845 = vrot.lane.b32.xlu0 %v5834, 127
        %v5846 = vpop.permute.xlu0 %5845
        %v5847 = vsel %vm1853, %v5836, %v5838
        %v5848 = vsel %vm1853, %v5838, %v5840
        %v5849 = vsel %vm1853, %v5842, %v5844
        %v5850 = vsel %vm1853, %v5844, %v5846
        %v5858 = vsel %vm4736, %v5808, 0
        %5860 = vmatpush.bf16.msra.mxu0 0
        %5861 = vmatpush.bf16.msra.mxu0 0
        %5862 = vmatpush.bf16.msra.mxu0 0
        %5863 = vmatpush.bf16.msra.mxu0 0
        %5864 = vmatpush.bf16.msra.mxu0 0
        %5865 = vmatpush.bf16.msra.mxu0 0
        %5866 = vmatpush.bf16.msra.mxu0 %v5849
        %5867 = vmatpush.bf16.msra.mxu0 %v5847
        %5868 = vmatmul.bf16.gmra.mxu0 %v5858
        %v5869 = vpop.f32.mrf.mxu0
        %v5870 = vadd.f32 0.0, %v5869
        %v5871 = vpop.f32.mrf.mxu0
        %v5872 = vadd.f32 0.0, %v5871
        %5873 = vdwg.mxu0
        %5874 = vmatpush.bf16.msra.mxu0 0
        %5875 = vmatpush.bf16.msra.mxu0 0
        %5876 = vmatpush.bf16.msra.mxu0 0
        %5877 = vmatpush.bf16.msra.mxu0 0
        %5878 = vmatpush.bf16.msra.mxu0 0
        %5879 = vmatpush.bf16.msra.mxu0 0
        %5880 = vmatpush.bf16.msra.mxu0 %v5850
        %5881 = vmatpush.bf16.msra.mxu0 %v5848
        %5882 = vmatmul.bf16.gmra.mxu0 %v5858
        %v5883 = vpop.f32.mrf.mxu0
        %v5884 = vadd.f32 0.0, %v5883
        %v5885 = vpop.f32.mrf.mxu0
        %v5886 = vadd.f32 0.0, %v5885
        %5887 = vdwg.mxu0
        %5888 = vmatpush.bf16.msra.mxu0 0
        %5889 = vmatpush.bf16.msra.mxu0 0
        %5890 = vmatpush.bf16.msra.mxu0 0
        %5891 = vmatpush.bf16.msra.mxu0 0
        %5892 = vmatpush.bf16.msra.mxu0 0
        %5893 = vmatpush.bf16.msra.mxu0 0
        %5894 = vmatpush.bf16.msra.mxu0 %v5846
        %5895 = vmatpush.bf16.msra.mxu0 %v5840
        %5896 = vmatmul.bf16.gmra.mxu0 %v5858
        %v5897 = vpop.f32.mrf.mxu0
        %v5898 = vadd.f32 0.0, %v5897
        %v5899 = vpop.f32.mrf.mxu0
        %v5900 = vadd.f32 0.0, %v5899
        %5901 = vdwg.mxu0
        %v5904 = vunpack.c.l.b16 %v5792
        %v5905 = vunpack.c.l.b16 %v5793
        %v5906 = vpack.c.b16 %v5905, %v5904
        %v5914 = vsel %vm4736, %v5906, 0
        %5916 = vmatpush.bf16.msra.mxu0 0
        %5917 = vmatpush.bf16.msra.mxu0 0
        %5918 = vmatpush.bf16.msra.mxu0 0
        %5919 = vmatpush.bf16.msra.mxu0 0
        %5920 = vmatpush.bf16.msra.mxu0 0
        %5921 = vmatpush.bf16.msra.mxu0 0
        %5922 = vmatpush.bf16.msra.mxu0 %v5832
        %5923 = vmatpush.bf16.msra.mxu0 %v5829
        %5924 = vmatmul.bf16.gmra.mxu0 %v5914
        %v5925 = vpop.f32.mrf.mxu0
        %v5926 = vadd.f32 %v5870, %v5925
        %v5927 = vpop.f32.mrf.mxu0
        %v5928 = vadd.f32 %v5872, %v5927
        %5929 = vdwg.mxu0
        %5930 = vmatpush.bf16.msra.mxu0 0
        %5931 = vmatpush.bf16.msra.mxu0 0
        %5932 = vmatpush.bf16.msra.mxu0 0
        %5933 = vmatpush.bf16.msra.mxu0 0
        %5934 = vmatpush.bf16.msra.mxu0 0
        %5935 = vmatpush.bf16.msra.mxu0 0
        %5936 = vmatpush.bf16.msra.mxu0 %v5833
        %5937 = vmatpush.bf16.msra.mxu0 %v5830
        %5938 = vmatmul.bf16.gmra.mxu0 %v5914
        %v5939 = vpop.f32.mrf.mxu0
        %v5940 = vadd.f32 %v5884, %v5939
        %v5941 = vpop.f32.mrf.mxu0
        %v5942 = vadd.f32 %v5886, %v5941
        %5943 = vdwg.mxu0
        %5944 = vmatpush.bf16.msra.mxu0 0
        %5945 = vmatpush.bf16.msra.mxu0 0
        %5946 = vmatpush.bf16.msra.mxu0 0
        %5947 = vmatpush.bf16.msra.mxu0 0
        %5948 = vmatpush.bf16.msra.mxu0 0
        %5949 = vmatpush.bf16.msra.mxu0 0
        %5950 = vmatpush.bf16.msra.mxu0 %v5834
        %5951 = vmatpush.bf16.msra.mxu0 %v5831
        %5952 = vmatmul.bf16.gmra.mxu0 %v5914
        %v5953 = vpop.f32.mrf.mxu0
        %v5954 = vadd.f32 %v5898, %v5953
        %v5955 = vpop.f32.mrf.mxu0
        %v5956 = vadd.f32 %v5900, %v5955
        %5957 = vdwg.mxu0
        %v5958 = vld [vmem:[%s8 + $0x10] sm:$0xf]
        %v5959 = vld [vmem:[%s8 + $0x14] sm:$0xf]
        %v5962 = vunpack.c.l.b16 %v5958
        %v5963 = vunpack.c.l.b16 %v5959
        %v5964 = vpack.c.b16 %v5963, %v5962
        %5965 = vrot.lane.b32.xlu0 %v5829, 126
        %v5966 = vpop.permute.xlu0 %5965
        %5967 = vrot.lane.b32.xlu0 %v5830, 126
        %v5968 = vpop.permute.xlu0 %5967
        %5969 = vrot.lane.b32.xlu0 %v5831, 126
        %v5970 = vpop.permute.xlu0 %5969
        %5971 = vrot.lane.b32.xlu0 %v5832, 126
        %v5972 = vpop.permute.xlu0 %5971
        %5973 = vrot.lane.b32.xlu0 %v5833, 126
        %v5974 = vpop.permute.xlu0 %5973
        %5975 = vrot.lane.b32.xlu0 %v5834, 126
        %v5976 = vpop.permute.xlu0 %5975
        %v5977 = vsel %vm2350, %v5966, %v5968
        %v5978 = vsel %vm2350, %v5968, %v5970
        %v5979 = vsel %vm2350, %v5972, %v5974
        %v5980 = vsel %vm2350, %v5974, %v5976
        %v5988 = vsel %vm4736, %v5964, 0
        %5990 = vmatpush.bf16.msra.mxu0 0
        %5991 = vmatpush.bf16.msra.mxu0 0
        %5992 = vmatpush.bf16.msra.mxu0 0
        %5993 = vmatpush.bf16.msra.mxu0 0
        %5994 = vmatpush.bf16.msra.mxu0 0
        %5995 = vmatpush.bf16.msra.mxu0 0
        %5996 = vmatpush.bf16.msra.mxu0 %v5979
        %5997 = vmatpush.bf16.msra.mxu0 %v5977
        %5998 = vmatmul.bf16.gmra.mxu0 %v5988
        %v5999 = vpop.f32.mrf.mxu0
        %v6000 = vadd.f32 0.0, %v5999
        %v6001 = vpop.f32.mrf.mxu0
        %v6002 = vadd.f32 0.0, %v6001
        %6003 = vdwg.mxu0
        %6004 = vmatpush.bf16.msra.mxu0 0
        %6005 = vmatpush.bf16.msra.mxu0 0
        %6006 = vmatpush.bf16.msra.mxu0 0
        %6007 = vmatpush.bf16.msra.mxu0 0
        %6008 = vmatpush.bf16.msra.mxu0 0
        %6009 = vmatpush.bf16.msra.mxu0 0
        %6010 = vmatpush.bf16.msra.mxu0 %v5980
        %6011 = vmatpush.bf16.msra.mxu0 %v5978
        %6012 = vmatmul.bf16.gmra.mxu0 %v5988
        %v6013 = vpop.f32.mrf.mxu0
        %v6014 = vadd.f32 0.0, %v6013
        %v6015 = vpop.f32.mrf.mxu0
        %v6016 = vadd.f32 0.0, %v6015
        %6017 = vdwg.mxu0
        %6018 = vmatpush.bf16.msra.mxu0 0
        %6019 = vmatpush.bf16.msra.mxu0 0
        %6020 = vmatpush.bf16.msra.mxu0 0
        %6021 = vmatpush.bf16.msra.mxu0 0
        %6022 = vmatpush.bf16.msra.mxu0 0
        %6023 = vmatpush.bf16.msra.mxu0 0
        %6024 = vmatpush.bf16.msra.mxu0 %v5976
        %6025 = vmatpush.bf16.msra.mxu0 %v5970
        %6026 = vmatmul.bf16.gmra.mxu0 %v5988
        %v6027 = vpop.f32.mrf.mxu0
        %v6028 = vadd.f32 0.0, %v6027
        %v6029 = vpop.f32.mrf.mxu0
        %v6030 = vadd.f32 0.0, %v6029
        %6031 = vdwg.mxu0
        %v6032 = vadd.f32 %v5926, %v6000
        %v6033 = vadd.f32 %v5940, %v6014
        %v6034 = vadd.f32 %v5954, %v6028
        %v6035 = vadd.f32 %v5928, %v6002
        %v6036 = vadd.f32 %v5942, %v6016
        %v6037 = vadd.f32 %v5956, %v6030
        %v6038 = vld [vmem:[%s8 + $0x18] sm:$0xf]
        %v6039 = vld [vmem:[%s8 + $0x1c] sm:$0xf]
        %v6042 = vunpack.c.l.b16 %v6038
        %v6043 = vunpack.c.l.b16 %v6039
        %v6044 = vpack.c.b16 %v6043, %v6042
        %6045 = vrot.lane.b32.xlu0 %v5829, 110
        %v6046 = vpop.permute.xlu0 %6045
        %6047 = vrot.lane.b32.xlu0 %v5830, 110
        %v6048 = vpop.permute.xlu0 %6047
        %6049 = vrot.lane.b32.xlu0 %v5831, 110
        %v6050 = vpop.permute.xlu0 %6049
        %6051 = vrot.lane.b32.xlu0 %v5832, 110
        %v6052 = vpop.permute.xlu0 %6051
        %6053 = vrot.lane.b32.xlu0 %v5833, 110
        %v6054 = vpop.permute.xlu0 %6053
        %6055 = vrot.lane.b32.xlu0 %v5834, 110
        %v6056 = vpop.permute.xlu0 %6055
        %v6057 = vsel %vm2677, %v6046, %v6048
        %v6058 = vsel %vm2677, %v6048, %v6050
        %v6059 = vsel %vm2677, %v6052, %v6054
        %v6060 = vsel %vm2677, %v6054, %v6056
        %v6068 = vsel %vm4736, %v6044, 0
        %6070 = vmatpush.bf16.msra.mxu0 0
        %6071 = vmatpush.bf16.msra.mxu0 0
        %6072 = vmatpush.bf16.msra.mxu0 0
        %6073 = vmatpush.bf16.msra.mxu0 0
        %6074 = vmatpush.bf16.msra.mxu0 0
        %6075 = vmatpush.bf16.msra.mxu0 0
        %6076 = vmatpush.bf16.msra.mxu0 %v6059
        %6077 = vmatpush.bf16.msra.mxu0 %v6057
        %6078 = vmatmul.bf16.gmra.mxu0 %v6068
        %v6079 = vpop.f32.mrf.mxu0
        %v6080 = vadd.f32 0.0, %v6079
        %v6081 = vpop.f32.mrf.mxu0
        %v6082 = vadd.f32 0.0, %v6081
        %6083 = vdwg.mxu0
        %6084 = vmatpush.bf16.msra.mxu0 0
        %6085 = vmatpush.bf16.msra.mxu0 0
        %6086 = vmatpush.bf16.msra.mxu0 0
        %6087 = vmatpush.bf16.msra.mxu0 0
        %6088 = vmatpush.bf16.msra.mxu0 0
        %6089 = vmatpush.bf16.msra.mxu0 0
        %6090 = vmatpush.bf16.msra.mxu0 %v6060
        %6091 = vmatpush.bf16.msra.mxu0 %v6058
        %6092 = vmatmul.bf16.gmra.mxu0 %v6068
        %v6093 = vpop.f32.mrf.mxu0
        %v6094 = vadd.f32 0.0, %v6093
        %v6095 = vpop.f32.mrf.mxu0
        %v6096 = vadd.f32 0.0, %v6095
        %6097 = vdwg.mxu0
        %6098 = vmatpush.bf16.msra.mxu0 0
        %6099 = vmatpush.bf16.msra.mxu0 0
        %6100 = vmatpush.bf16.msra.mxu0 0
        %6101 = vmatpush.bf16.msra.mxu0 0
        %6102 = vmatpush.bf16.msra.mxu0 0
        %6103 = vmatpush.bf16.msra.mxu0 0
        %6104 = vmatpush.bf16.msra.mxu0 %v6056
        %6105 = vmatpush.bf16.msra.mxu0 %v6050
        %6106 = vmatmul.bf16.gmra.mxu0 %v6068
        %v6107 = vpop.f32.mrf.mxu0
        %v6108 = vadd.f32 0.0, %v6107
        %v6109 = vpop.f32.mrf.mxu0
        %v6110 = vadd.f32 0.0, %v6109
        %6111 = vdwg.mxu0
        %v6112 = vadd.f32 %v6032, %v6080
        %v6113 = vadd.f32 %v6033, %v6094
        %v6114 = vadd.f32 %v6034, %v6108
        %v6115 = vadd.f32 %v6035, %v6082
        %v6116 = vadd.f32 %v6036, %v6096
        %v6117 = vadd.f32 %v6037, %v6110
        %v6118 = vld [vmem:[%s8 + $0x20] sm:$0xf]
        %v6119 = vld [vmem:[%s8 + $0x24] sm:$0xf]
        %v6122 = vunpack.c.l.b16 %v6118
        %v6123 = vunpack.c.l.b16 %v6119
        %v6124 = vpack.c.b16 %v6123, %v6122
        %6125 = vrot.lane.b32.xlu0 %v5829, 109
        %v6126 = vpop.permute.xlu0 %6125
        %6127 = vrot.lane.b32.xlu0 %v5830, 109
        %v6128 = vpop.permute.xlu0 %6127
        %6129 = vrot.lane.b32.xlu0 %v5831, 109
        %v6130 = vpop.permute.xlu0 %6129
        %6131 = vrot.lane.b32.xlu0 %v5832, 109
        %v6132 = vpop.permute.xlu0 %6131
        %6133 = vrot.lane.b32.xlu0 %v5833, 109
        %v6134 = vpop.permute.xlu0 %6133
        %6135 = vrot.lane.b32.xlu0 %v5834, 109
        %v6136 = vpop.permute.xlu0 %6135
        %v6137 = vsel %vm3004, %v6126, %v6128
        %v6138 = vsel %vm3004, %v6128, %v6130
        %v6139 = vsel %vm3004, %v6132, %v6134
        %v6140 = vsel %vm3004, %v6134, %v6136
        %v6148 = vsel %vm4736, %v6124, 0
        %6150 = vmatpush.bf16.msra.mxu0 0
        %6151 = vmatpush.bf16.msra.mxu0 0
        %6152 = vmatpush.bf16.msra.mxu0 0
        %6153 = vmatpush.bf16.msra.mxu0 0
        %6154 = vmatpush.bf16.msra.mxu0 0
        %6155 = vmatpush.bf16.msra.mxu0 0
        %6156 = vmatpush.bf16.msra.mxu0 %v6139
        %6157 = vmatpush.bf16.msra.mxu0 %v6137
        %6158 = vmatmul.bf16.gmra.mxu0 %v6148
        %v6159 = vpop.f32.mrf.mxu0
        %v6160 = vadd.f32 0.0, %v6159
        %v6161 = vpop.f32.mrf.mxu0
        %v6162 = vadd.f32 0.0, %v6161
        %6163 = vdwg.mxu0
        %6164 = vmatpush.bf16.msra.mxu0 0
        %6165 = vmatpush.bf16.msra.mxu0 0
        %6166 = vmatpush.bf16.msra.mxu0 0
        %6167 = vmatpush.bf16.msra.mxu0 0
        %6168 = vmatpush.bf16.msra.mxu0 0
        %6169 = vmatpush.bf16.msra.mxu0 0
        %6170 = vmatpush.bf16.msra.mxu0 %v6140
        %6171 = vmatpush.bf16.msra.mxu0 %v6138
        %6172 = vmatmul.bf16.gmra.mxu0 %v6148
        %v6173 = vpop.f32.mrf.mxu0
        %v6174 = vadd.f32 0.0, %v6173
        %v6175 = vpop.f32.mrf.mxu0
        %v6176 = vadd.f32 0.0, %v6175
        %6177 = vdwg.mxu0
        %6178 = vmatpush.bf16.msra.mxu0 0
        %6179 = vmatpush.bf16.msra.mxu0 0
        %6180 = vmatpush.bf16.msra.mxu0 0
        %6181 = vmatpush.bf16.msra.mxu0 0
        %6182 = vmatpush.bf16.msra.mxu0 0
        %6183 = vmatpush.bf16.msra.mxu0 0
        %6184 = vmatpush.bf16.msra.mxu0 %v6136
        %6185 = vmatpush.bf16.msra.mxu0 %v6130
        %6186 = vmatmul.bf16.gmra.mxu0 %v6148
        %v6187 = vpop.f32.mrf.mxu0
        %v6188 = vadd.f32 0.0, %v6187
        %v6189 = vpop.f32.mrf.mxu0
        %v6190 = vadd.f32 0.0, %v6189
        %6191 = vdwg.mxu0
        %v6192 = vadd.f32 %v6112, %v6160
        %v6193 = vadd.f32 %v6113, %v6174
        %v6194 = vadd.f32 %v6114, %v6188
        %v6195 = vadd.f32 %v6115, %v6162
        %v6196 = vadd.f32 %v6116, %v6176
        %v6197 = vadd.f32 %v6117, %v6190
        %v6198 = vld [vmem:[%s8 + $0x28] sm:$0xf]
        %v6199 = vld [vmem:[%s8 + $0x2c] sm:$0xf]
        %v6202 = vunpack.c.l.b16 %v6198
        %v6203 = vunpack.c.l.b16 %v6199
        %v6204 = vpack.c.b16 %v6203, %v6202
        %6205 = vrot.lane.b32.xlu0 %v5829, 108
        %v6206 = vpop.permute.xlu0 %6205
        %6207 = vrot.lane.b32.xlu0 %v5830, 108
        %v6208 = vpop.permute.xlu0 %6207
        %6209 = vrot.lane.b32.xlu0 %v5831, 108
        %v6210 = vpop.permute.xlu0 %6209
        %6211 = vrot.lane.b32.xlu0 %v5832, 108
        %v6212 = vpop.permute.xlu0 %6211
        %6213 = vrot.lane.b32.xlu0 %v5833, 108
        %v6214 = vpop.permute.xlu0 %6213
        %6215 = vrot.lane.b32.xlu0 %v5834, 108
        %v6216 = vpop.permute.xlu0 %6215
        %v6217 = vsel %vm3331, %v6206, %v6208
        %v6218 = vsel %vm3331, %v6208, %v6210
        %v6219 = vsel %vm3331, %v6212, %v6214
        %v6220 = vsel %vm3331, %v6214, %v6216
        %v6228 = vsel %vm4736, %v6204, 0
        %6230 = vmatpush.bf16.msra.mxu0 0
        %6231 = vmatpush.bf16.msra.mxu0 0
        %6232 = vmatpush.bf16.msra.mxu0 0
        %6233 = vmatpush.bf16.msra.mxu0 0
        %6234 = vmatpush.bf16.msra.mxu0 0
        %6235 = vmatpush.bf16.msra.mxu0 0
        %6236 = vmatpush.bf16.msra.mxu0 %v6219
        %6237 = vmatpush.bf16.msra.mxu0 %v6217
        %6238 = vmatmul.bf16.gmra.mxu0 %v6228
        %v6239 = vpop.f32.mrf.mxu0
        %v6240 = vadd.f32 0.0, %v6239
        %v6241 = vpop.f32.mrf.mxu0
        %v6242 = vadd.f32 0.0, %v6241
        %6243 = vdwg.mxu0
        %6244 = vmatpush.bf16.msra.mxu0 0
        %6245 = vmatpush.bf16.msra.mxu0 0
        %6246 = vmatpush.bf16.msra.mxu0 0
        %6247 = vmatpush.bf16.msra.mxu0 0
        %6248 = vmatpush.bf16.msra.mxu0 0
        %6249 = vmatpush.bf16.msra.mxu0 0
        %6250 = vmatpush.bf16.msra.mxu0 %v6220
        %6251 = vmatpush.bf16.msra.mxu0 %v6218
        %6252 = vmatmul.bf16.gmra.mxu0 %v6228
        %v6253 = vpop.f32.mrf.mxu0
        %v6254 = vadd.f32 0.0, %v6253
        %v6255 = vpop.f32.mrf.mxu0
        %v6256 = vadd.f32 0.0, %v6255
        %6257 = vdwg.mxu0
        %6258 = vmatpush.bf16.msra.mxu0 0
        %6259 = vmatpush.bf16.msra.mxu0 0
        %6260 = vmatpush.bf16.msra.mxu0 0
        %6261 = vmatpush.bf16.msra.mxu0 0
        %6262 = vmatpush.bf16.msra.mxu0 0
        %6263 = vmatpush.bf16.msra.mxu0 0
        %6264 = vmatpush.bf16.msra.mxu0 %v6216
        %6265 = vmatpush.bf16.msra.mxu0 %v6210
        %6266 = vmatmul.bf16.gmra.mxu0 %v6228
        %v6267 = vpop.f32.mrf.mxu0
        %v6268 = vadd.f32 0.0, %v6267
        %v6269 = vpop.f32.mrf.mxu0
        %v6270 = vadd.f32 0.0, %v6269
        %6271 = vdwg.mxu0
        %v6272 = vadd.f32 %v6192, %v6240
        %v6273 = vadd.f32 %v6193, %v6254
        %v6274 = vadd.f32 %v6194, %v6268
        %v6275 = vadd.f32 %v6195, %v6242
        %v6276 = vadd.f32 %v6196, %v6256
        %v6277 = vadd.f32 %v6197, %v6270
        %v6278 = vld [vmem:[%s8 + $0x30] sm:$0xf]
        %v6279 = vld [vmem:[%s8 + $0x34] sm:$0xf]
        %v6282 = vunpack.c.l.b16 %v6278
        %v6283 = vunpack.c.l.b16 %v6279
        %v6284 = vpack.c.b16 %v6283, %v6282
        %6285 = vrot.lane.b32.xlu0 %v5829, 92
        %v6286 = vpop.permute.xlu0 %6285
        %6287 = vrot.lane.b32.xlu0 %v5830, 92
        %v6288 = vpop.permute.xlu0 %6287
        %6289 = vrot.lane.b32.xlu0 %v5831, 92
        %v6290 = vpop.permute.xlu0 %6289
        %6291 = vrot.lane.b32.xlu0 %v5832, 92
        %v6292 = vpop.permute.xlu0 %6291
        %6293 = vrot.lane.b32.xlu0 %v5833, 92
        %v6294 = vpop.permute.xlu0 %6293
        %6295 = vrot.lane.b32.xlu0 %v5834, 92
        %v6296 = vpop.permute.xlu0 %6295
        %v6297 = vsel %vm3658, %v6286, %v6288
        %v6298 = vsel %vm3658, %v6288, %v6290
        %v6299 = vsel %vm3658, %v6292, %v6294
        %v6300 = vsel %vm3658, %v6294, %v6296
        %v6308 = vsel %vm4736, %v6284, 0
        %6310 = vmatpush.bf16.msra.mxu0 0
        %6311 = vmatpush.bf16.msra.mxu0 0
        %6312 = vmatpush.bf16.msra.mxu0 0
        %6313 = vmatpush.bf16.msra.mxu0 0
        %6314 = vmatpush.bf16.msra.mxu0 0
        %6315 = vmatpush.bf16.msra.mxu0 0
        %6316 = vmatpush.bf16.msra.mxu0 %v6299
        %6317 = vmatpush.bf16.msra.mxu0 %v6297
        %6318 = vmatmul.bf16.gmra.mxu0 %v6308
        %v6319 = vpop.f32.mrf.mxu0
        %v6320 = vadd.f32 0.0, %v6319
        %v6321 = vpop.f32.mrf.mxu0
        %v6322 = vadd.f32 0.0, %v6321
        %6323 = vdwg.mxu0
        %6324 = vmatpush.bf16.msra.mxu0 0
        %6325 = vmatpush.bf16.msra.mxu0 0
        %6326 = vmatpush.bf16.msra.mxu0 0
        %6327 = vmatpush.bf16.msra.mxu0 0
        %6328 = vmatpush.bf16.msra.mxu0 0
        %6329 = vmatpush.bf16.msra.mxu0 0
        %6330 = vmatpush.bf16.msra.mxu0 %v6300
        %6331 = vmatpush.bf16.msra.mxu0 %v6298
        %6332 = vmatmul.bf16.gmra.mxu0 %v6308
        %v6333 = vpop.f32.mrf.mxu0
        %v6334 = vadd.f32 0.0, %v6333
        %v6335 = vpop.f32.mrf.mxu0
        %v6336 = vadd.f32 0.0, %v6335
        %6337 = vdwg.mxu0
        %6338 = vmatpush.bf16.msra.mxu0 0
        %6339 = vmatpush.bf16.msra.mxu0 0
        %6340 = vmatpush.bf16.msra.mxu0 0
        %6341 = vmatpush.bf16.msra.mxu0 0
        %6342 = vmatpush.bf16.msra.mxu0 0
        %6343 = vmatpush.bf16.msra.mxu0 0
        %6344 = vmatpush.bf16.msra.mxu0 %v6296
        %6345 = vmatpush.bf16.msra.mxu0 %v6290
        %6346 = vmatmul.bf16.gmra.mxu0 %v6308
        %v6347 = vpop.f32.mrf.mxu0
        %v6348 = vadd.f32 0.0, %v6347
        %v6349 = vpop.f32.mrf.mxu0
        %v6350 = vadd.f32 0.0, %v6349
        %6351 = vdwg.mxu0
        %v6352 = vadd.f32 %v6272, %v6320
        %v6353 = vadd.f32 %v6273, %v6334
        %v6354 = vadd.f32 %v6274, %v6348
        %v6355 = vadd.f32 %v6275, %v6322
        %v6356 = vadd.f32 %v6276, %v6336
        %v6357 = vadd.f32 %v6277, %v6350
        %v6358 = vld [vmem:[%s8 + $0x38] sm:$0xf]
        %v6359 = vld [vmem:[%s8 + $0x3c] sm:$0xf]
        %v6362 = vunpack.c.l.b16 %v6358
        %v6363 = vunpack.c.l.b16 %v6359
        %v6364 = vpack.c.b16 %v6363, %v6362
        %6365 = vrot.lane.b32.xlu0 %v5829, 91
        %v6366 = vpop.permute.xlu0 %6365
        %6367 = vrot.lane.b32.xlu0 %v5830, 91
        %v6368 = vpop.permute.xlu0 %6367
        %6369 = vrot.lane.b32.xlu0 %v5831, 91
        %v6370 = vpop.permute.xlu0 %6369
        %6371 = vrot.lane.b32.xlu0 %v5832, 91
        %v6372 = vpop.permute.xlu0 %6371
        %6373 = vrot.lane.b32.xlu0 %v5833, 91
        %v6374 = vpop.permute.xlu0 %6373
        %6375 = vrot.lane.b32.xlu0 %v5834, 91
        %v6376 = vpop.permute.xlu0 %6375
        %v6377 = vsel %vm3985, %v6366, %v6368
        %v6378 = vsel %vm3985, %v6368, %v6370
        %v6379 = vsel %vm3985, %v6372, %v6374
        %v6380 = vsel %vm3985, %v6374, %v6376
        %v6388 = vsel %vm4736, %v6364, 0
        %6390 = vmatpush.bf16.msra.mxu0 0
        %6391 = vmatpush.bf16.msra.mxu0 0
        %6392 = vmatpush.bf16.msra.mxu0 0
        %6393 = vmatpush.bf16.msra.mxu0 0
        %6394 = vmatpush.bf16.msra.mxu0 0
        %6395 = vmatpush.bf16.msra.mxu0 0
        %6396 = vmatpush.bf16.msra.mxu0 %v6379
        %6397 = vmatpush.bf16.msra.mxu0 %v6377
        %6398 = vmatmul.bf16.gmra.mxu0 %v6388
        %v6399 = vpop.f32.mrf.mxu0
        %v6400 = vadd.f32 0.0, %v6399
        %v6401 = vpop.f32.mrf.mxu0
        %v6402 = vadd.f32 0.0, %v6401
        %6403 = vdwg.mxu0
        %6404 = vmatpush.bf16.msra.mxu0 0
        %6405 = vmatpush.bf16.msra.mxu0 0
        %6406 = vmatpush.bf16.msra.mxu0 0
        %6407 = vmatpush.bf16.msra.mxu0 0
        %6408 = vmatpush.bf16.msra.mxu0 0
        %6409 = vmatpush.bf16.msra.mxu0 0
        %6410 = vmatpush.bf16.msra.mxu0 %v6380
        %6411 = vmatpush.bf16.msra.mxu0 %v6378
        %6412 = vmatmul.bf16.gmra.mxu0 %v6388
        %v6413 = vpop.f32.mrf.mxu0
        %v6414 = vadd.f32 0.0, %v6413
        %v6415 = vpop.f32.mrf.mxu0
        %v6416 = vadd.f32 0.0, %v6415
        %6417 = vdwg.mxu0
        %6418 = vmatpush.bf16.msra.mxu0 0
        %6419 = vmatpush.bf16.msra.mxu0 0
        %6420 = vmatpush.bf16.msra.mxu0 0
        %6421 = vmatpush.bf16.msra.mxu0 0
        %6422 = vmatpush.bf16.msra.mxu0 0
        %6423 = vmatpush.bf16.msra.mxu0 0
        %6424 = vmatpush.bf16.msra.mxu0 %v6376
        %6425 = vmatpush.bf16.msra.mxu0 %v6370
        %6426 = vmatmul.bf16.gmra.mxu0 %v6388
        %v6427 = vpop.f32.mrf.mxu0
        %v6428 = vadd.f32 0.0, %v6427
        %v6429 = vpop.f32.mrf.mxu0
        %v6430 = vadd.f32 0.0, %v6429
        %6431 = vdwg.mxu0
        %v6432 = vadd.f32 %v6352, %v6400
        %v6433 = vadd.f32 %v6353, %v6414
        %v6434 = vadd.f32 %v6354, %v6428
        %v6435 = vadd.f32 %v6355, %v6402
        %v6436 = vadd.f32 %v6356, %v6416
        %v6437 = vadd.f32 %v6357, %v6430
        %v6438 = vld [vmem:[%s8 + $0x40] sm:$0xf]
        %v6439 = vld [vmem:[%s8 + $0x44] sm:$0xf]
        %v6442 = vunpack.c.l.b16 %v6438
        %v6443 = vunpack.c.l.b16 %v6439
        %v6444 = vpack.c.b16 %v6443, %v6442
        %6445 = vrot.lane.b32.xlu0 %v5829, 90
        %v6446 = vpop.permute.xlu0 %6445
        %6447 = vrot.lane.b32.xlu0 %v5830, 90
        %v6448 = vpop.permute.xlu0 %6447
        %6449 = vrot.lane.b32.xlu0 %v5831, 90
        %v6450 = vpop.permute.xlu0 %6449
        %6451 = vrot.lane.b32.xlu0 %v5832, 90
        %v6452 = vpop.permute.xlu0 %6451
        %6453 = vrot.lane.b32.xlu0 %v5833, 90
        %v6454 = vpop.permute.xlu0 %6453
        %6455 = vrot.lane.b32.xlu0 %v5834, 90
        %v6456 = vpop.permute.xlu0 %6455
        %v6457 = vsel %vm4312, %v6446, %v6448
        %v6458 = vsel %vm4312, %v6448, %v6450
        %v6459 = vsel %vm4312, %v6452, %v6454
        %v6460 = vsel %vm4312, %v6454, %v6456
        %v6468 = vsel %vm4736, %v6444, 0
        %6470 = vmatpush.bf16.msra.mxu0 0
        %6471 = vmatpush.bf16.msra.mxu0 0
        %6472 = vmatpush.bf16.msra.mxu0 0
        %6473 = vmatpush.bf16.msra.mxu0 0
        %6474 = vmatpush.bf16.msra.mxu0 0
        %6475 = vmatpush.bf16.msra.mxu0 0
        %6476 = vmatpush.bf16.msra.mxu0 %v6459
        %6477 = vmatpush.bf16.msra.mxu0 %v6457
        %6478 = vmatmul.bf16.gmra.mxu0 %v6468
        %v6479 = vpop.f32.mrf.mxu0
        %v6480 = vadd.f32 0.0, %v6479
        %v6481 = vpop.f32.mrf.mxu0
        %v6482 = vadd.f32 0.0, %v6481
        %6483 = vdwg.mxu0
        %6484 = vmatpush.bf16.msra.mxu0 0
        %6485 = vmatpush.bf16.msra.mxu0 0
        %6486 = vmatpush.bf16.msra.mxu0 0
        %6487 = vmatpush.bf16.msra.mxu0 0
        %6488 = vmatpush.bf16.msra.mxu0 0
        %6489 = vmatpush.bf16.msra.mxu0 0
        %6490 = vmatpush.bf16.msra.mxu0 %v6460
        %6491 = vmatpush.bf16.msra.mxu0 %v6458
        %6492 = vmatmul.bf16.gmra.mxu0 %v6468
        %v6493 = vpop.f32.mrf.mxu0
        %v6494 = vadd.f32 0.0, %v6493
        %v6495 = vpop.f32.mrf.mxu0
        %v6496 = vadd.f32 0.0, %v6495
        %6497 = vdwg.mxu0
        %6498 = vmatpush.bf16.msra.mxu0 0
        %6499 = vmatpush.bf16.msra.mxu0 0
        %6500 = vmatpush.bf16.msra.mxu0 0
        %6501 = vmatpush.bf16.msra.mxu0 0
        %6502 = vmatpush.bf16.msra.mxu0 0
        %6503 = vmatpush.bf16.msra.mxu0 0
        %6504 = vmatpush.bf16.msra.mxu0 %v6456
        %6505 = vmatpush.bf16.msra.mxu0 %v6450
        %6506 = vmatmul.bf16.gmra.mxu0 %v6468
        %v6507 = vpop.f32.mrf.mxu0
        %v6508 = vadd.f32 0.0, %v6507
        %v6509 = vpop.f32.mrf.mxu0
        %v6510 = vadd.f32 0.0, %v6509
        %6511 = vdwg.mxu0
        %v6512 = vadd.f32 %v6432, %v6480
        %v6513 = vadd.f32 %v6433, %v6494
        %v6514 = vadd.f32 %v6434, %v6508
        %v6515 = vadd.f32 %v6435, %v6482
        %v6516 = vadd.f32 %v6436, %v6496
        %v6517 = vadd.f32 %v6437, %v6510
        %v6518 = vld [vmem:[%s9] sm:$0xff]
        %v6519 = vld [vmem:[%s9 + $0x8] sm:$0xff]
        %6521 = vset.pattern.permute.xlu0 0
        %6522 = vperm.xlu0 %6521, %v6518
        %v6523 = vpop.permute.xlu0 %6522
        %6526 = vset.pattern.permute.xlu0 0
        %6527 = vperm.xlu0 %6526, %v6519
        %v6528 = vpop.permute.xlu0 %6527
        %v6530 = vadd.f32 %v6512, %v6523
        %v6531 = vadd.f32 %v6513, %v6523
        %v6532 = vadd.f32 %v6514, %v6523
        %v6533 = vadd.f32 %v6515, %v6528
        %v6534 = vadd.f32 %v6516, %v6528
        %v6535 = vadd.f32 %v6517, %v6528
        %v6536 = vtanh.pop %v6530
        %v6537 = vtanh.pop %v6531
        %v6538 = vtanh.pop %v6532
        %v6539 = vtanh.pop %v6533
        %v6540 = vtanh.pop %v6534
        %v6541 = vtanh.pop %v6535
        %6542 = vst [vmem:[%s434] sm:$0xff] %v6536
        %6543 = vst [vmem:[%s434 + $0x8] sm:$0xff] %v6537
        %6544 = vst.msk [vmem:[%s434 + $0x10] sm:$0xff] %vm4736, %v6538
        %6545 = vst [vmem:[%s434 + $0x18] sm:$0xff] %v6539
        %6546 = vst [vmem:[%s434 + $0x20] sm:$0xff] %v6540
        %6547 = vst.msk [vmem:[%s434 + $0x28] sm:$0xff] %vm4736, %v6541
        %p6548 = scmp.lt.s32.totalorder %s24, 1
        %s6549 = scalar_select %p6548, %s24, 1
        %s6550 = smul.addr %s6549, 6
        %s6551 = smul.addr %s6550, 8
        %s6552 = scalar_lea.vmem %s11, %s6551
        // Predicated region
        $region77: #{vgg_forward.1} parent=63 // pred_check
          %p6553 = pneg %p278
        $region78: #{vgg_forward.1} parent=63 // pred_check_branch
          %6555 = sbr.rel (%p6553) target = $region80
        $region79: #{vgg_forward.1} parent=63 // pred_region
          _
        $region80: #{vgg_forward.1} parent=63 // pred_fallthru
          _
      $region64: #{vgg_forward.1} parent=5 // pred_fallthru
        _
      %p6556 = scmp.le.s32.totalorder 2, %s19
      // Predicated region
      $region81: #{vgg_forward.1} parent=5 // pred_check
        %p6557 = pneg %p6556
      $region82: #{vgg_forward.1} parent=5 // pred_check_branch
        %6559 = sbr.rel (%p6557) target = $region84
      $region83: #{vgg_forward.1} parent=5 // pred_region
        %s6560 = ssub.s32 %s19, 2
        // Predicated region
        $region85: #{vgg_forward.1} parent=83 // pred_check
          %p6561 = pneg %p284
        $region86: #{vgg_forward.1} parent=83 // pred_check_branch
          %6563 = sbr.rel (%p6561) target = $region88
        $region87: #{vgg_forward.1} parent=83 // pred_region
          %p6564 = scmp.lt.s32.totalorder %s25, 1
          %s6565 = scalar_select %p6564, %s25, 1
          %s6566 = smul.addr %s6565, 6
          %s6567 = smul.addr %s6566, 8
          %s6568 = scalar_lea.vmem %s11, %s6567
        $region88: #{vgg_forward.1} parent=83 // pred_fallthru
          _
      $region84: #{vgg_forward.1} parent=5 // pred_fallthru
        _
    $region6: #{vgg_forward.1} parent=1 // loop_footer
      %s23 = sadd.s32 1, %s19
    $region7: #{vgg_forward.1} parent=1 // loop_footer_branch
      %18 = sbr.rel target = $region3
    $region8: #{vgg_forward.1} parent=1 // loop_exit
      _
    %6569 = vsyncpa [#allocation6], 1
    %s6570 = scalar_lea.sflag [#allocation6], 1
    %6571 = vsyncpa %s6570, 1
    %6572 = vsyncpa [#allocation8], 1

</llo_original>
